<compile_context>
chip_gen: v7x
topology: tpu7x:2x2x1
jax: 0.10.0
libtpu: 0.0.40
codegen_flags: <defaults>
</compile_context>

<pallas_src>
import functools

import jax
import jax.numpy as jnp
from jax.experimental import pallas as pl
from jax.experimental.pallas import tpu as pltpu

LANE = 128


def _round_up(v, m):
    return (v + m - 1) // m * m


def _vmem_budget_bytes():
    """~75% of physical VMEM (headroom for compiler scratch / semaphores)."""
    try:
        cap = getattr(pltpu.get_tpu_info(), "vmem_capacity_bytes", 64 << 20)
    except Exception:
        cap = 64 << 20          # conservative (v7x physical) if query unavailable
    return int(cap) * 3 // 4


# ---------------------------------------------------------------------------
# Kernel 1: one GIN layer for one row block of destination nodes.
#   h_blk = ReLU(ReLU(((1+eps)*x_blk + A_blk @ x) @ W1 + b1) @ W2 + b2)
# ---------------------------------------------------------------------------
def gin_layer_kernel(scale_ref, a_ref, x_all_ref, x_blk_ref,
                     w1_ref, b1_ref, w2_ref, b2_ref, h_out_ref):
    # A row block is streamed as int8 (halves HBM bytes); cast to bf16 for MXU.
    a = a_ref[...].astype(jnp.bfloat16)
    agg = jnp.dot(a, x_all_ref[...], preferred_element_type=jnp.float32)
    h = x_blk_ref[...].astype(jnp.float32) * scale_ref[0, 0] + agg
    h = jnp.maximum(
        jnp.dot(h.astype(jnp.bfloat16), w1_ref[...],
                preferred_element_type=jnp.float32) + b1_ref[...], 0.0)
    h = jnp.maximum(
        jnp.dot(h.astype(jnp.bfloat16), w2_ref[...],
                preferred_element_type=jnp.float32) + b2_ref[...], 0.0)
    # Outer F.relu is idempotent (MLP already ends in ReLU); dropout = identity
    # at inference.
    h_out_ref[...] = h.astype(h_out_ref.dtype)


# ---------------------------------------------------------------------------
# Kernel 2: GIN layer 1 for one row block + per-block partial global_add_pool.
# No shared accumulator across the grid -> row-block axis is fully parallel.
# ---------------------------------------------------------------------------
def gin_pool_kernel(scale_ref, a_ref, h_all_ref, h_blk_ref, p_ref,
                    w1_ref, b1_ref, w2_ref, b2_ref, part_ref):
    a = a_ref[...].astype(jnp.bfloat16)
    agg = jnp.dot(a, h_all_ref[...], preferred_element_type=jnp.float32)
    z = h_blk_ref[...].astype(jnp.float32) * scale_ref[0, 0] + agg
    z = jnp.maximum(
        jnp.dot(z.astype(jnp.bfloat16), w1_ref[...],
                preferred_element_type=jnp.float32) + b1_ref[...], 0.0)
    z = jnp.maximum(
        jnp.dot(z.astype(jnp.bfloat16), w2_ref[...],
                preferred_element_type=jnp.float32) + b2_ref[...], 0.0)
    # Partial of global_add_pool for this block: part[g] = P_blk @ z_blk.
    part_ref[...] = jnp.dot(p_ref[...], z.astype(jnp.bfloat16),
                            preferred_element_type=jnp.float32)


# ---------------------------------------------------------------------------
# Kernel 3 (micro): reduce pooled partials + fc + log_softmax.
# ---------------------------------------------------------------------------
def head_kernel(part_ref, wfc_ref, bfc_ref, out_ref, *, num_classes):
    pooled = jnp.sum(part_ref[...], axis=0)                       # (g_p, h_p) f32
    logits = jnp.dot(pooled.astype(jnp.bfloat16), wfc_ref[...],
                     preferred_element_type=jnp.float32) + bfc_ref[...]
    # Mask lane padding beyond the real class count before log_softmax.
    col = jax.lax.broadcasted_iota(jnp.int32, logits.shape, 1)
    logits = jnp.where(col < num_classes, logits, jnp.float32(-1e30))
    m = jnp.max(logits, axis=1, keepdims=True)
    zc = logits - m
    lse = jnp.log(jnp.sum(jnp.exp(zc), axis=1, keepdims=True))
    out_ref[...] = zc - lse


# ---------------------------------------------------------------------------
# Wrapper: pad to lane-dense shapes, densify graph structure, launch kernels.
# ---------------------------------------------------------------------------
def gin_graph_classifier(x, edge_index, batch, params, num_graphs):
    N, f_in = x.shape
    hidden = params["w12"].shape[1]
    n_cls = params["wfc"].shape[1]

    # Keep feature dims at 128 (don't over-pad): the kernels are HBM-bound on A,
    # so half-used MXU columns on v6e/v7x are free.
    f_p = _round_up(f_in, LANE)
    h_p = _round_up(hidden, LANE)
    c_p = _round_up(n_cls, LANE)
    g_p = _round_up(num_graphs, 8)

    budget = _vmem_budget_bytes()

    def vmem_need(tn, n_pad, d_in):
        # streamed blocks x2 (double buffer) + resident x1 + compute temps + slack
        streamed = tn * n_pad * 1 + tn * d_in * 2 + tn * h_p * 2 + g_p * tn * 2
        resident = n_pad * d_in * 2 + (d_in + h_p) * h_p * 2 + 4 * h_p * 4
        temps = tn * n_pad * 2 + tn * (d_in + 2 * h_p) * 4 + g_p * h_p * 4
        return 2 * streamed + resident + temps + (4 << 20)

    d_max = max(f_p, h_p)
    if N <= 1024:
        # Tiny graph: one row block, grid=(1,); avoids per-step fixed overhead.
        n_pad = _round_up(N, 256)
        tn = n_pad
    else:
        tn = 512                       # mem-bound regime: ~85% of HBM roofline
        while tn > 128 and vmem_need(tn, _round_up(N, tn), d_max) > budget:
            tn //= 2
        n_pad = _round_up(N, tn)

    grid = (n_pad // tn,)
    nb = grid[0]
    bf = jnp.bfloat16

    src, dst = edge_index[0], edge_index[1]
    # Dense A[dst, src] built directly in int8 (no f32 O(N^2) temp). Duplicate
    # edges count multiplicity, matching GIN sum aggregation (int8 is fine for
    # multiplicities < 128).
    adj = (jnp.zeros((n_pad, n_pad), jnp.int8)
           .at[dst, src].add(jnp.ones(src.shape, jnp.int8)))
    # Pooling one-hot is O(G*N): bf16 traffic is already negligible.
    pool = (jnp.zeros((g_p, n_pad), bf)
            .at[batch, jnp.arange(N)].set(jnp.ones((N,), bf)))
    # NOTE: padded node rows (N..n_pad-1) carry nonzero ReLU(bias) activations;
    # they stay harmless only because the padded *columns* of A and P are zero.

    def pad_mat(w, rows, cols, dtype):
        return (jnp.zeros((rows, cols), dtype)
                .at[:w.shape[0], :w.shape[1]].set(w.astype(dtype)))

    x_p = pad_mat(x, n_pad, f_p, bf)
    w11 = pad_mat(params["w11"], f_p, h_p, bf)
    w12 = pad_mat(params["w12"], h_p, h_p, bf)
    w21 = pad_mat(params["w21"], h_p, h_p, bf)
    w22 = pad_mat(params["w22"], h_p, h_p, bf)
    wfc = pad_mat(params["wfc"], h_p, c_p, bf)
    b11 = pad_mat(params["b11"], 1, h_p, jnp.float32)
    b12 = pad_mat(params["b12"], 1, h_p, jnp.float32)
    b21 = pad_mat(params["b21"], 1, h_p, jnp.float32)
    b22 = pad_mat(params["b22"], 1, h_p, jnp.float32)
    bfc = pad_mat(params["bfc"], 1, c_p, jnp.float32)

    # (1+eps) as SMEM scalars (no VMEM row broadcast).
    scale0 = jnp.reshape(1.0 + params["eps0"], (1, 1)).astype(jnp.float32)
    scale1 = jnp.reshape(1.0 + params["eps1"], (1, 1)).astype(jnp.float32)

    smem_spec = pl.BlockSpec(memory_space=pltpu.MemorySpace.SMEM)

    def clamp_limit(need):
        return int(min(max(need, 32 << 20), budget))

    # ------------------------------ GIN layer 0 ------------------------------
    h0 = pl.pallas_call(
        gin_layer_kernel,
        out_shape=jax.ShapeDtypeStruct((n_pad, h_p), bf),
        grid_spec=pltpu.PrefetchScalarGridSpec(
            num_scalar_prefetch=0,
            grid=grid,
            in_specs=[
                smem_spec,                                       # (1+eps0) scalar
                pl.BlockSpec((tn, n_pad), lambda i: (i, 0)),     # A row block (i8)
                pl.BlockSpec((n_pad, f_p), lambda i: (0, 0)),    # x (resident)
                pl.BlockSpec((tn, f_p), lambda i: (i, 0)),       # x row block
                pl.BlockSpec((f_p, h_p), lambda i: (0, 0)),      # w11
                pl.BlockSpec((1, h_p), lambda i: (0, 0)),        # b11
                pl.BlockSpec((h_p, h_p), lambda i: (0, 0)),      # w12
                pl.BlockSpec((1, h_p), lambda i: (0, 0)),        # b12
            ],
            out_specs=pl.BlockSpec((tn, h_p), lambda i: (i, 0)),
        ),
        compiler_params=pltpu.CompilerParams(
            dimension_semantics=("parallel",),
            vmem_limit_bytes=clamp_limit(vmem_need(tn, n_pad, f_p)),
        ),
    )(scale0, adj, x_p, x_p, w11, b11, w12, b12)

    # ---------------- GIN layer 1 + partial global_add_pool -----------------
    partials = pl.pallas_call(
        gin_pool_kernel,
        out_shape=jax.ShapeDtypeStruct((nb, g_p, h_p), jnp.float32),
        grid_spec=pltpu.PrefetchScalarGridSpec(
            num_scalar_prefetch=0,
            grid=grid,
            in_specs=[
                smem_spec,                                       # (1+eps1) scalar
                pl.BlockSpec((tn, n_pad), lambda i: (i, 0)),     # A row block (i8)
                pl.BlockSpec((n_pad, h_p), lambda i: (0, 0)),    # h0 (resident)
                pl.BlockSpec((tn, h_p), lambda i: (i, 0)),       # h0 row block
                pl.BlockSpec((g_p, tn), lambda i: (0, i)),       # P column block
                pl.BlockSpec((h_p, h_p), lambda i: (0, 0)),      # w21
                pl.BlockSpec((1, h_p), lambda i: (0, 0)),        # b21
                pl.BlockSpec((h_p, h_p), lambda i: (0, 0)),      # w22
                pl.BlockSpec((1, h_p), lambda i: (0, 0)),        # b22
            ],
            out_specs=pl.BlockSpec((None, g_p, h_p), lambda i: (i, 0, 0)),
        ),
        compiler_params=pltpu.CompilerParams(
            dimension_semantics=("parallel",),
            vmem_limit_bytes=clamp_limit(vmem_need(tn, n_pad, h_p)),
        ),
    )(scale1, adj, h0, h0, pool, w21, b21, w22, b22)

    # --------------------- pooled-sum + fc + log_softmax --------------------
    out_p = pl.pallas_call(
        functools.partial(head_kernel, num_classes=n_cls),
        out_shape=jax.ShapeDtypeStruct((g_p, c_p), jnp.float32),
        grid_spec=pltpu.PrefetchScalarGridSpec(
            num_scalar_prefetch=0,
            grid=(1,),
            in_specs=[
                pl.BlockSpec((nb, g_p, h_p), lambda i: (0, 0, 0)),
                pl.BlockSpec((h_p, c_p), lambda i: (0, 0)),
                pl.BlockSpec((1, c_p), lambda i: (0, 0)),
            ],
            out_specs=pl.BlockSpec((g_p, c_p), lambda i: (0, 0)),
        ),
    )(partials, wfc, bfc)

    return out_p[:num_graphs, :n_cls]


# ---------------------------------------------------------------------------
# Pure-JAX reference mirroring the kernel's bf16-operand / f32-accumulate math.
# ---------------------------------------------------------------------------
def reference_forward(x, edge_index, batch, params, num_graphs):
    bf = jnp.bfloat16
    N = x.shape[0]
    src, dst = edge_index[0], edge_index[1]
    A = jnp.zeros((N, N), jnp.float32).at[dst, src].add(1.0)
    P = jnp.zeros((num_graphs, N), jnp.float32).at[batch, jnp.arange(N)].set(1.0)

    def mm(a, b):
        return jnp.dot(a.astype(bf), b.astype(bf), preferred_element_type=jnp.float32)

    xb = x.astype(bf).astype(jnp.float32)
    h = (1.0 + params["eps0"]) * xb + mm(A, xb)
    h = jnp.maximum(mm(h, params["w11"]) + params["b11"], 0.0)
    h = jnp.maximum(mm(h, params["w12"]) + params["b12"], 0.0)
    h = h.astype(bf).astype(jnp.float32)          # layer-0 output stored as bf16
    h2 = (1.0 + params["eps1"]) * h + mm(A, h)
    h2 = jnp.maximum(mm(h2, params["w21"]) + params["b21"], 0.0)
    h2 = jnp.maximum(mm(h2, params["w22"]) + params["b22"], 0.0)
    pooled = mm(P, h2)
    logits = mm(pooled, params["wfc"]) + params["bfc"]
    return jax.nn.log_softmax(logits, axis=1)


def init_params(key, in_channels, hidden, out_channels):
    """Deterministic synthetic parameters; Linear weights stored (in, out)."""
    ks = jax.random.split(key, 5)

    def lin(k, fan_in, fan_out):
        kw, kb = jax.random.split(k)
        bound = 1.0 / jnp.sqrt(fan_in)
        w = jax.random.uniform(kw, (fan_in, fan_out), jnp.float32, -bound, bound)
        b = jax.random.uniform(kb, (1, fan_out), jnp.float32, -bound, bound)
        return w, b

    w11, b11 = lin(ks[0], in_channels, hidden)
    w12, b12 = lin(ks[1], hidden, hidden)
    w21, b21 = lin(ks[2], hidden, hidden)
    w22, b22 = lin(ks[3], hidden, hidden)
    wfc, bfc = lin(ks[4], hidden, out_channels)
    return dict(
        w11=w11, b11=b11, w12=w12, b12=b12,
        w21=w21, b21=b21, w22=w22, b22=b22,
        wfc=wfc, bfc=bfc,
        eps0=jnp.float32(0.0),   # train_eps=True, initialized to 0.0
        eps1=jnp.float32(0.0),
    )


if __name__ == "__main__":
    key = jax.random.PRNGKey(0)
    k_feat, k_param = jax.random.split(key)

    # 4 ring graphs of 72 nodes each -> N = 288 nodes, padded to 512, grid=(1,).
    nodes_per_graph, num_graphs = 72, 4
    in_channels, hidden, out_channels = 8, 64, 4
    N = nodes_per_graph * num_graphs

    x = jax.random.normal(k_feat, (N, in_channels), jnp.float32)

    def ring_edges(offset, n):
        s = jnp.arange(n) + offset
        d = (jnp.arange(n) + 1) % n + offset
        return jnp.concatenate([s, d]), jnp.concatenate([d, s])   # undirected

    srcs, dsts = [], []
    for g in range(num_graphs):
        s, d = ring_edges(g * nodes_per_graph, nodes_per_graph)
        srcs.append(s)
        dsts.append(d)
    edge_index = jnp.stack(
        [jnp.concatenate(srcs), jnp.concatenate(dsts)]).astype(jnp.int32)
    batch = jnp.repeat(jnp.arange(num_graphs, dtype=jnp.int32), nodes_per_graph)

    params = init_params(k_param, in_channels, hidden, out_channels)

    fwd = jax.jit(gin_graph_classifier, static_argnames=("num_graphs",))
    out = fwd(x, edge_index, batch, params, num_graphs=num_graphs)
    jax.block_until_ready(out)

    assert out.shape == (num_graphs, out_channels)
    # log_softmax rows sum (in prob space) to ~1
    assert jnp.allclose(jnp.sum(jnp.exp(out), axis=1), 1.0, atol=1e-4)
    # matches the pure-JAX reference with identical bf16/f32 numerics
    ref = reference_forward(x, edge_index, batch, params, num_graphs)
    assert jnp.allclose(out, ref, atol=1e-2, rtol=1e-2)

    print("KERNEL_OK")
</pallas_src>

<mosaic_0001>
module attributes {stable_mosaic.version = 11 : i64} {
  func.func @gin_layer_kernel(%arg0: i32, %arg1: memref<1x1xf32, #tpu.memory_space<smem>>, %arg2: memref<512x512xi8, #tpu.memory_space<vmem>>, %arg3: memref<512x128xbf16, #tpu.memory_space<vmem>>, %arg4: memref<512x128xbf16, #tpu.memory_space<vmem>>, %arg5: memref<128x128xbf16, #tpu.memory_space<vmem>>, %arg6: memref<1x128xf32, #tpu.memory_space<vmem>>, %arg7: memref<128x128xbf16, #tpu.memory_space<vmem>>, %arg8: memref<1x128xf32, #tpu.memory_space<vmem>>, %arg9: memref<512x128xbf16, #tpu.memory_space<vmem>>) attributes {dimension_semantics = [#tpu.dimension_semantics<parallel>], iteration_bounds = array<i64: 1>, scalar_prefetch = 0 : i64, scratch_operands = 0 : i64, tpu.core_type = #tpu.core_type<tc>, window_params = [{transform_indices = @transform_0, window_bounds = array<i64: 1, 1>}, {transform_indices = @transform_1, window_bounds = array<i64: 512, 512>}, {pipeline_mode = #tpu.pipeline_mode<synchronous>, transform_indices = @transform_2, window_bounds = array<i64: 512, 128>}, {transform_indices = @transform_3, window_bounds = array<i64: 512, 128>}, {pipeline_mode = #tpu.pipeline_mode<synchronous>, transform_indices = @transform_4, window_bounds = array<i64: 128, 128>}, {pipeline_mode = #tpu.pipeline_mode<synchronous>, transform_indices = @transform_5, window_bounds = array<i64: 1, 128>}, {pipeline_mode = #tpu.pipeline_mode<synchronous>, transform_indices = @transform_6, window_bounds = array<i64: 128, 128>}, {pipeline_mode = #tpu.pipeline_mode<synchronous>, transform_indices = @transform_7, window_bounds = array<i64: 1, 128>}, {transform_indices = @transform_8, window_bounds = array<i64: 512, 128>}]} {
    %c0 = arith.constant 0 : index
    %c0_0 = arith.constant 0 : index
    %0 = vector.load %arg2[%c0, %c0_0] : memref<512x512xi8, #tpu.memory_space<vmem>>, vector<512x512xi8>
    %1 = arith.sitofp %0 : vector<512x512xi8> to vector<512x512xbf16>
    %c0_1 = arith.constant 0 : index
    %c0_2 = arith.constant 0 : index
    %2 = vector.load %arg3[%c0_1, %c0_2] : memref<512x128xbf16, #tpu.memory_space<vmem>>, vector<512x128xbf16>
    %cst = arith.constant dense<0.000000e+00> : vector<512x128xf32>
    %3 = tpu.matmul %1, %2, %cst {dimension_numbers = #tpu.dot_dimension_numbers<[1], [0], [0], [1], [0, 0, 1, 1], [], []>} : vector<512x512xbf16>, vector<512x128xbf16>, vector<512x128xf32> -> vector<512x128xf32>
    %c0_3 = arith.constant 0 : index
    %c0_4 = arith.constant 0 : index
    %4 = vector.load %arg4[%c0_3, %c0_4] : memref<512x128xbf16, #tpu.memory_space<vmem>>, vector<512x128xbf16>
    %5 = arith.extf %4 : vector<512x128xbf16> to vector<512x128xf32>
    %c0_5 = arith.constant 0 : index
    %c0_6 = arith.constant 0 : index
    %6 = memref.load %arg1[%c0_5, %c0_6] : memref<1x1xf32, #tpu.memory_space<smem>>
    %7 = vector.broadcast %6 : f32 to vector<512x128xf32>
    %8 = arith.mulf %5, %7 : vector<512x128xf32>
    %9 = arith.addf %8, %3 : vector<512x128xf32>
    %10 = arith.truncf %9 : vector<512x128xf32> to vector<512x128xbf16>
    %c0_7 = arith.constant 0 : index
    %c0_8 = arith.constant 0 : index
    %11 = vector.load %arg5[%c0_7, %c0_8] : memref<128x128xbf16, #tpu.memory_space<vmem>>, vector<128x128xbf16>
    %cst_9 = arith.constant dense<0.000000e+00> : vector<512x128xf32>
    %12 = tpu.matmul %10, %11, %cst_9 {dimension_numbers = #tpu.dot_dimension_numbers<[1], [0], [0], [1], [0, 0, 1, 1], [], []>} : vector<512x128xbf16>, vector<128x128xbf16>, vector<512x128xf32> -> vector<512x128xf32>
    %c0_10 = arith.constant 0 : index
    %c0_11 = arith.constant 0 : index
    %13 = vector.load %arg6[%c0_10, %c0_11] : memref<1x128xf32, #tpu.memory_space<vmem>>, vector<1x128xf32>
    %14 = vector.broadcast %13 : vector<1x128xf32> to vector<512x128xf32>
    %15 = arith.addf %12, %14 : vector<512x128xf32>
    %cst_12 = arith.constant 0.000000e+00 : f32
    %16 = vector.broadcast %cst_12 : f32 to vector<512x128xf32>
    %17 = arith.maximumf %15, %16 : vector<512x128xf32>
    %18 = arith.truncf %17 : vector<512x128xf32> to vector<512x128xbf16>
    %c0_13 = arith.constant 0 : index
    %c0_14 = arith.constant 0 : index
    %19 = vector.load %arg7[%c0_13, %c0_14] : memref<128x128xbf16, #tpu.memory_space<vmem>>, vector<128x128xbf16>
    %cst_15 = arith.constant dense<0.000000e+00> : vector<512x128xf32>
    %20 = tpu.matmul %18, %19, %cst_15 {dimension_numbers = #tpu.dot_dimension_numbers<[1], [0], [0], [1], [0, 0, 1, 1], [], []>} : vector<512x128xbf16>, vector<128x128xbf16>, vector<512x128xf32> -> vector<512x128xf32>
    %c0_16 = arith.constant 0 : index
    %c0_17 = arith.constant 0 : index
    %21 = vector.load %arg8[%c0_16, %c0_17] : memref<1x128xf32, #tpu.memory_space<vmem>>, vector<1x128xf32>
    %22 = vector.broadcast %21 : vector<1x128xf32> to vector<512x128xf32>
    %23 = arith.addf %20, %22 : vector<512x128xf32>
    %cst_18 = arith.constant 0.000000e+00 : f32
    %24 = vector.broadcast %cst_18 : f32 to vector<512x128xf32>
    %25 = arith.maximumf %23, %24 : vector<512x128xf32>
    %26 = arith.truncf %25 : vector<512x128xf32> to vector<512x128xbf16>
    %c0_19 = arith.constant 0 : index
    %c0_20 = arith.constant 0 : index
    %27 = vector.load %arg9[%c0_19, %c0_20] : memref<512x128xbf16, #tpu.memory_space<vmem>>, vector<512x128xbf16>
    tpu.vector_store %arg9[%c0_19, %c0_20], %26 {strides = array<i32>} : memref<512x128xbf16, #tpu.memory_space<vmem>>, vector<512x128xbf16>,
    return
  }
  func.func @transform_0(%arg0: i32) -> (i32, i32) {
    %c0_i32 = arith.constant 0 : i32
    %c0_i32_0 = arith.constant 0 : i32
    %c0_i32_1 = arith.constant 0 : i32
    return %c0_i32, %c0_i32_0 : i32, i32
  }
  func.func @transform_1(%arg0: i32) -> (i32, i32) {
    %c0_i32 = arith.constant 0 : i32
    %c0_i32_0 = arith.constant 0 : i32
    return %arg0, %c0_i32 : i32, i32
  }
  func.func @transform_2(%arg0: i32) -> (i32, i32) {
    %c0_i32 = arith.constant 0 : i32
    %c0_i32_0 = arith.constant 0 : i32
    %c0_i32_1 = arith.constant 0 : i32
    return %c0_i32, %c0_i32_0 : i32, i32
  }
  func.func @transform_3(%arg0: i32) -> (i32, i32) {
    %c0_i32 = arith.constant 0 : i32
    %c0_i32_0 = arith.constant 0 : i32
    return %arg0, %c0_i32 : i32, i32
  }
  func.func @transform_4(%arg0: i32) -> (i32, i32) {
    %c0_i32 = arith.constant 0 : i32
    %c0_i32_0 = arith.constant 0 : i32
    %c0_i32_1 = arith.constant 0 : i32
    return %c0_i32, %c0_i32_0 : i32, i32
  }
  func.func @transform_5(%arg0: i32) -> (i32, i32) {
    %c0_i32 = arith.constant 0 : i32
    %c0_i32_0 = arith.constant 0 : i32
    %c0_i32_1 = arith.constant 0 : i32
    return %c0_i32, %c0_i32_0 : i32, i32
  }
  func.func @transform_6(%arg0: i32) -> (i32, i32) {
    %c0_i32 = arith.constant 0 : i32
    %c0_i32_0 = arith.constant 0 : i32
    %c0_i32_1 = arith.constant 0 : i32
    return %c0_i32, %c0_i32_0 : i32, i32
  }
  func.func @transform_7(%arg0: i32) -> (i32, i32) {
    %c0_i32 = arith.constant 0 : i32
    %c0_i32_0 = arith.constant 0 : i32
    %c0_i32_1 = arith.constant 0 : i32
    return %c0_i32, %c0_i32_0 : i32, i32
  }
  func.func @transform_8(%arg0: i32) -> (i32, i32) {
    %c0_i32 = arith.constant 0 : i32
    %c0_i32_0 = arith.constant 0 : i32
    return %arg0, %c0_i32 : i32, i32
  }
}

module attributes {stable_mosaic.version = 11 : i64} {
  func.func @gin_pool_kernel(%arg0: i32, %arg1: memref<1x1xf32, #tpu.memory_space<smem>>, %arg2: memref<512x512xi8, #tpu.memory_space<vmem>>, %arg3: memref<512x128xbf16, #tpu.memory_space<vmem>>, %arg4: memref<512x128xbf16, #tpu.memory_space<vmem>>, %arg5: memref<8x512xbf16, #tpu.memory_space<vmem>>, %arg6: memref<128x128xbf16, #tpu.memory_space<vmem>>, %arg7: memref<1x128xf32, #tpu.memory_space<vmem>>, %arg8: memref<128x128xbf16, #tpu.memory_space<vmem>>, %arg9: memref<1x128xf32, #tpu.memory_space<vmem>>, %arg10: memref<1x8x128xf32, #tpu.memory_space<vmem>>) attributes {dimension_semantics = [#tpu.dimension_semantics<parallel>], iteration_bounds = array<i64: 1>, scalar_prefetch = 0 : i64, scratch_operands = 0 : i64, tpu.core_type = #tpu.core_type<tc>, window_params = [{transform_indices = @transform_0, window_bounds = array<i64: 1, 1>}, {transform_indices = @transform_1, window_bounds = array<i64: 512, 512>}, {pipeline_mode = #tpu.pipeline_mode<synchronous>, transform_indices = @transform_2, window_bounds = array<i64: 512, 128>}, {transform_indices = @transform_3, window_bounds = array<i64: 512, 128>}, {transform_indices = @transform_4, window_bounds = array<i64: 8, 512>}, {pipeline_mode = #tpu.pipeline_mode<synchronous>, transform_indices = @transform_5, window_bounds = array<i64: 128, 128>}, {pipeline_mode = #tpu.pipeline_mode<synchronous>, transform_indices = @transform_6, window_bounds = array<i64: 1, 128>}, {pipeline_mode = #tpu.pipeline_mode<synchronous>, transform_indices = @transform_7, window_bounds = array<i64: 128, 128>}, {pipeline_mode = #tpu.pipeline_mode<synchronous>, transform_indices = @transform_8, window_bounds = array<i64: 1, 128>}, {transform_indices = @transform_9, window_bounds = array<i64: 1, 8, 128>}]} {
    %c0 = arith.constant 0 : index
    %c0_0 = arith.constant 0 : index
    %0 = vector.load %arg2[%c0, %c0_0] : memref<512x512xi8, #tpu.memory_space<vmem>>, vector<512x512xi8>
    %1 = arith.sitofp %0 : vector<512x512xi8> to vector<512x512xbf16>
    %c0_1 = arith.constant 0 : index
    %c0_2 = arith.constant 0 : index
    %2 = vector.load %arg3[%c0_1, %c0_2] : memref<512x128xbf16, #tpu.memory_space<vmem>>, vector<512x128xbf16>
    %cst = arith.constant dense<0.000000e+00> : vector<512x128xf32>
    %3 = tpu.matmul %1, %2, %cst {dimension_numbers = #tpu.dot_dimension_numbers<[1], [0], [0], [1], [0, 0, 1, 1], [], []>} : vector<512x512xbf16>, vector<512x128xbf16>, vector<512x128xf32> -> vector<512x128xf32>
    %c0_3 = arith.constant 0 : index
    %c0_4 = arith.constant 0 : index
    %4 = vector.load %arg4[%c0_3, %c0_4] : memref<512x128xbf16, #tpu.memory_space<vmem>>, vector<512x128xbf16>
    %5 = arith.extf %4 : vector<512x128xbf16> to vector<512x128xf32>
    %c0_5 = arith.constant 0 : index
    %c0_6 = arith.constant 0 : index
    %6 = memref.load %arg1[%c0_5, %c0_6] : memref<1x1xf32, #tpu.memory_space<smem>>
    %7 = vector.broadcast %6 : f32 to vector<512x128xf32>
    %8 = arith.mulf %5, %7 : vector<512x128xf32>
    %9 = arith.addf %8, %3 : vector<512x128xf32>
    %10 = arith.truncf %9 : vector<512x128xf32> to vector<512x128xbf16>
    %c0_7 = arith.constant 0 : index
    %c0_8 = arith.constant 0 : index
    %11 = vector.load %arg6[%c0_7, %c0_8] : memref<128x128xbf16, #tpu.memory_space<vmem>>, vector<128x128xbf16>
    %cst_9 = arith.constant dense<0.000000e+00> : vector<512x128xf32>
    %12 = tpu.matmul %10, %11, %cst_9 {dimension_numbers = #tpu.dot_dimension_numbers<[1], [0], [0], [1], [0, 0, 1, 1], [], []>} : vector<512x128xbf16>, vector<128x128xbf16>, vector<512x128xf32> -> vector<512x128xf32>
    %c0_10 = arith.constant 0 : index
    %c0_11 = arith.constant 0 : index
    %13 = vector.load %arg7[%c0_10, %c0_11] : memref<1x128xf32, #tpu.memory_space<vmem>>, vector<1x128xf32>
    %14 = vector.broadcast %13 : vector<1x128xf32> to vector<512x128xf32>
    %15 = arith.addf %12, %14 : vector<512x128xf32>
    %cst_12 = arith.constant 0.000000e+00 : f32
    %16 = vector.broadcast %cst_12 : f32 to vector<512x128xf32>
    %17 = arith.maximumf %15, %16 : vector<512x128xf32>
    %18 = arith.truncf %17 : vector<512x128xf32> to vector<512x128xbf16>
    %c0_13 = arith.constant 0 : index
    %c0_14 = arith.constant 0 : index
    %19 = vector.load %arg8[%c0_13, %c0_14] : memref<128x128xbf16, #tpu.memory_space<vmem>>, vector<128x128xbf16>
    %cst_15 = arith.constant dense<0.000000e+00> : vector<512x128xf32>
    %20 = tpu.matmul %18, %19, %cst_15 {dimension_numbers = #tpu.dot_dimension_numbers<[1], [0], [0], [1], [0, 0, 1, 1], [], []>} : vector<512x128xbf16>, vector<128x128xbf16>, vector<512x128xf32> -> vector<512x128xf32>
    %c0_16 = arith.constant 0 : index
    %c0_17 = arith.constant 0 : index
    %21 = vector.load %arg9[%c0_16, %c0_17] : memref<1x128xf32, #tpu.memory_space<vmem>>, vector<1x128xf32>
    %22 = vector.broadcast %21 : vector<1x128xf32> to vector<512x128xf32>
    %23 = arith.addf %20, %22 : vector<512x128xf32>
    %cst_18 = arith.constant 0.000000e+00 : f32
    %24 = vector.broadcast %cst_18 : f32 to vector<512x128xf32>
    %25 = arith.maximumf %23, %24 : vector<512x128xf32>
    %c0_19 = arith.constant 0 : index
    %c0_20 = arith.constant 0 : index
    %26 = vector.load %arg5[%c0_19, %c0_20] : memref<8x512xbf16, #tpu.memory_space<vmem>>, vector<8x512xbf16>
    %27 = arith.truncf %25 : vector<512x128xf32> to vector<512x128xbf16>
    %cst_21 = arith.constant dense<0.000000e+00> : vector<8x128xf32>
    %28 = tpu.matmul %26, %27, %cst_21 {dimension_numbers = #tpu.dot_dimension_numbers<[1], [0], [0], [1], [0, 0, 1, 1], [], []>} : vector<8x512xbf16>, vector<512x128xbf16>, vector<8x128xf32> -> vector<8x128xf32>
    %c0_22 = arith.constant 0 : index
    %c0_23 = arith.constant 0 : index
    %c0_24 = arith.constant 0 : index
    %29 = vector.load %arg10[%c0_22, %c0_23, %c0_24] : memref<1x8x128xf32, #tpu.memory_space<vmem>>, vector<1x8x128xf32>
    %30 = vector.shape_cast %29 : vector<1x8x128xf32> to vector<8x128xf32>
    %31 = vector.shape_cast %28 : vector<8x128xf32> to vector<1x8x128xf32>
    tpu.vector_store %arg10[%c0_22, %c0_23, %c0_24], %31 {strides = array<i32>} : memref<1x8x128xf32, #tpu.memory_space<vmem>>, vector<1x8x128xf32>,
    return
  }
  func.func @transform_0(%arg0: i32) -> (i32, i32) {
    %c0_i32 = arith.constant 0 : i32
    %c0_i32_0 = arith.constant 0 : i32
    %c0_i32_1 = arith.constant 0 : i32
    return %c0_i32, %c0_i32_0 : i32, i32
  }
  func.func @transform_1(%arg0: i32) -> (i32, i32) {
    %c0_i32 = arith.constant 0 : i32
    %c0_i32_0 = arith.constant 0 : i32
    return %arg0, %c0_i32 : i32, i32
  }
  func.func @transform_2(%arg0: i32) -> (i32, i32) {
    %c0_i32 = arith.constant 0 : i32
    %c0_i32_0 = arith.constant 0 : i32
    %c0_i32_1 = arith.constant 0 : i32
    return %c0_i32, %c0_i32_0 : i32, i32
  }
  func.func @transform_3(%arg0: i32) -> (i32, i32) {
    %c0_i32 = arith.constant 0 : i32
    %c0_i32_0 = arith.constant 0 : i32
    return %arg0, %c0_i32 : i32, i32
  }
  func.func @transform_4(%arg0: i32) -> (i32, i32) {
    %c0_i32 = arith.constant 0 : i32
    %c0_i32_0 = arith.constant 0 : i32
    return %c0_i32, %arg0 : i32, i32
  }
  func.func @transform_5(%arg0: i32) -> (i32, i32) {
    %c0_i32 = arith.constant 0 : i32
    %c0_i32_0 = arith.constant 0 : i32
    %c0_i32_1 = arith.constant 0 : i32
    return %c0_i32, %c0_i32_0 : i32, i32
  }
  func.func @transform_6(%arg0: i32) -> (i32, i32) {
    %c0_i32 = arith.constant 0 : i32
    %c0_i32_0 = arith.constant 0 : i32
    %c0_i32_1 = arith.constant 0 : i32
    return %c0_i32, %c0_i32_0 : i32, i32
  }
  func.func @transform_7(%arg0: i32) -> (i32, i32) {
    %c0_i32 = arith.constant 0 : i32
    %c0_i32_0 = arith.constant 0 : i32
    %c0_i32_1 = arith.constant 0 : i32
    return %c0_i32, %c0_i32_0 : i32, i32
  }
  func.func @transform_8(%arg0: i32) -> (i32, i32) {
    %c0_i32 = arith.constant 0 : i32
    %c0_i32_0 = arith.constant 0 : i32
    %c0_i32_1 = arith.constant 0 : i32
    return %c0_i32, %c0_i32_0 : i32, i32
  }
  func.func @transform_9(%arg0: i32) -> (i32, i32, i32) {
    %c0_i32 = arith.constant 0 : i32
    %c0_i32_0 = arith.constant 0 : i32
    %c0_i32_1 = arith.constant 0 : i32
    return %arg0, %c0_i32, %c0_i32_0 : i32, i32, i32
  }
}

module attributes {stable_mosaic.version = 11 : i64} {
  func.func @head_kernel(%arg0: i32, %arg1: memref<1x8x128xf32, #tpu.memory_space<vmem>>, %arg2: memref<128x128xbf16, #tpu.memory_space<vmem>>, %arg3: memref<1x128xf32, #tpu.memory_space<vmem>>, %arg4: memref<8x128xf32, #tpu.memory_space<vmem>>) attributes {dimension_semantics = [#tpu.dimension_semantics<arbitrary>], iteration_bounds = array<i64: 1>, scalar_prefetch = 0 : i64, scratch_operands = 0 : i64, tpu.core_type = #tpu.core_type<tc>, window_params = [{pipeline_mode = #tpu.pipeline_mode<synchronous>, transform_indices = @transform_0, window_bounds = array<i64: 1, 8, 128>}, {pipeline_mode = #tpu.pipeline_mode<synchronous>, transform_indices = @transform_1, window_bounds = array<i64: 128, 128>}, {pipeline_mode = #tpu.pipeline_mode<synchronous>, transform_indices = @transform_2, window_bounds = array<i64: 1, 128>}, {pipeline_mode = #tpu.pipeline_mode<synchronous>, transform_indices = @transform_3, window_bounds = array<i64: 8, 128>}]} {
    %c0 = arith.constant 0 : index
    %c0_0 = arith.constant 0 : index
    %c0_1 = arith.constant 0 : index
    %0 = vector.load %arg1[%c0, %c0_0, %c0_1] : memref<1x8x128xf32, #tpu.memory_space<vmem>>, vector<1x8x128xf32>
    %cst = arith.constant dense<0.000000e+00> : vector<8x128xf32>
    %1 = vector.multi_reduction <add>, %0, %cst [0] : vector<1x8x128xf32> to vector<8x128xf32>
    %2 = arith.truncf %1 : vector<8x128xf32> to vector<8x128xbf16>
    %c0_2 = arith.constant 0 : index
    %c0_3 = arith.constant 0 : index
    %3 = vector.load %arg2[%c0_2, %c0_3] : memref<128x128xbf16, #tpu.memory_space<vmem>>, vector<128x128xbf16>
    %cst_4 = arith.constant dense<0.000000e+00> : vector<8x128xf32>
    %4 = tpu.matmul %2, %3, %cst_4 {dimension_numbers = #tpu.dot_dimension_numbers<[1], [0], [0], [1], [0, 0, 1, 1], [], []>} : vector<8x128xbf16>, vector<128x128xbf16>, vector<8x128xf32> -> vector<8x128xf32>
    %c0_5 = arith.constant 0 : index
    %c0_6 = arith.constant 0 : index
    %5 = vector.load %arg3[%c0_5, %c0_6] : memref<1x128xf32, #tpu.memory_space<vmem>>, vector<1x128xf32>
    %6 = vector.broadcast %5 : vector<1x128xf32> to vector<8x128xf32>
    %7 = arith.addf %4, %6 : vector<8x128xf32>
    %8 = tpu.iota {dimensions = array<i32: 1>} : vector<8x128xi32>
    %c4_i32 = arith.constant 4 : i32
    %9 = vector.broadcast %c4_i32 : i32 to vector<8x128xi32>
    %10 = arith.cmpi slt, %8, %9 : vector<8x128xi32>
    %cst_7 = arith.constant -1.000000e+30 : f32
    %11 = vector.broadcast %cst_7 : f32 to vector<8x128xf32>
    %12 = arith.select %10, %7, %11 : vector<8x128xi1>, vector<8x128xf32>
    %cst_8 = arith.constant dense<0xFF800000> : vector<8xf32>
    %13 = vector.multi_reduction <maximumf>, %12, %cst_8 [1] : vector<8x128xf32> to vector<8xf32>
    %14 = vector.shape_cast %13 : vector<8xf32> to vector<8x1xf32>
    %15 = vector.broadcast %14 : vector<8x1xf32> to vector<8x128xf32>
    %16 = arith.subf %12, %15 : vector<8x128xf32>
    %17 = math.exp %16 : vector<8x128xf32>
    %cst_9 = arith.constant dense<0.000000e+00> : vector<8xf32>
    %18 = vector.multi_reduction <add>, %17, %cst_9 [1] : vector<8x128xf32> to vector<8xf32>
    %19 = vector.shape_cast %18 : vector<8xf32> to vector<8x1xf32>
    %20 = math.log %19 : vector<8x1xf32>
    %21 = vector.broadcast %20 : vector<8x1xf32> to vector<8x128xf32>
    %22 = arith.subf %16, %21 : vector<8x128xf32>
    %c0_10 = arith.constant 0 : index
    %c0_11 = arith.constant 0 : index
    %23 = vector.load %arg4[%c0_10, %c0_11] : memref<8x128xf32, #tpu.memory_space<vmem>>, vector<8x128xf32>
    tpu.vector_store %arg4[%c0_10, %c0_11], %22 {strides = array<i32>} : memref<8x128xf32, #tpu.memory_space<vmem>>, vector<8x128xf32>,
    return
  }
  func.func @transform_0(%arg0: i32) -> (i32, i32, i32) {
    %c0_i32 = arith.constant 0 : i32
    %c0_i32_0 = arith.constant 0 : i32
    %c0_i32_1 = arith.constant 0 : i32
    %c0_i32_2 = arith.constant 0 : i32
    return %c0_i32, %c0_i32_0, %c0_i32_1 : i32, i32, i32
  }
  func.func @transform_1(%arg0: i32) -> (i32, i32) {
    %c0_i32 = arith.constant 0 : i32
    %c0_i32_0 = arith.constant 0 : i32
    %c0_i32_1 = arith.constant 0 : i32
    return %c0_i32, %c0_i32_0 : i32, i32
  }
  func.func @transform_2(%arg0: i32) -> (i32, i32) {
    %c0_i32 = arith.constant 0 : i32
    %c0_i32_0 = arith.constant 0 : i32
    %c0_i32_1 = arith.constant 0 : i32
    return %c0_i32, %c0_i32_0 : i32, i32
  }
  func.func @transform_3(%arg0: i32) -> (i32, i32) {
    %c0_i32 = arith.constant 0 : i32
    %c0_i32_0 = arith.constant 0 : i32
    %c0_i32_1 = arith.constant 0 : i32
    return %c0_i32, %c0_i32_0 : i32, i32
  }
}

</mosaic_0001>

<llo_original>
// kernel: gin_graph_classifier.5
$region0: #{gin_graph_classifier.5}
  #allocation0 [shape = 'u32[]', space=smem, size = 0x4, offset = 0x4, fixed_abs, tag = 'smem constant byte address 0x4 - core index']
  #allocation1 [shape = 'u32[144,128]{1,0:T(1,128)}', space=vmem, size = 0x12000, scoped, tag = 'internal scratch']
  %s0 = inlined_call_operand.vmem [shape: f32[1,8,128], index: 0, kind: input, shape index: {}]
  %s1 = inlined_call_operand.vmem [shape: bf16[128,128], index: 1, kind: input, shape index: {}]
  %s2 = inlined_call_operand.vmem [shape: f32[1,128], index: 2, kind: input, shape index: {}]
  %s3 = inlined_call_operand.vmem [shape: f32[8,128], index: 3, kind: output, shape index: {}]
  %s4 = sld [smem:[#allocation0]]
  $region22: #{gin_graph_classifier.5} parent=0
    _
  %s6 = ssub.s32 1, %s4
  %s7 = scalar_select 0, %s6, %s4
  // Predicated region
  $region2: #{gin_graph_classifier.5} parent=0 // pred_check
    _
  $region3: #{gin_graph_classifier.5} parent=0 // pred_check_branch
    %9 = sbr.rel (0) target = $region5
  $region4: #{gin_graph_classifier.5} parent=0 // pred_region
    _
  $region5: #{gin_graph_classifier.5} parent=0 // pred_fallthru
    _
  // Predicated region
  $region6: #{gin_graph_classifier.5} parent=0 // pred_check
    _
  $region7: #{gin_graph_classifier.5} parent=0 // pred_check_branch
    %11 = sbr.rel (0) target = $region9
  $region8: #{gin_graph_classifier.5} parent=0 // pred_region
    _
  $region9: #{gin_graph_classifier.5} parent=0 // pred_fallthru
    _
  // Predicated region
  $region10: #{gin_graph_classifier.5} parent=0 // pred_check
    _
  $region11: #{gin_graph_classifier.5} parent=0 // pred_check_branch
    %13 = sbr.rel (0) target = $region13
  $region12: #{gin_graph_classifier.5} parent=0 // pred_region
    _
  $region13: #{gin_graph_classifier.5} parent=0 // pred_fallthru
    _
  %v15 = vld [vmem:[%s0] sm:$0xff]
  %v16 = vadd.f32 %v15, 0.0
  %v17 = vpack.c.bf16 %v16, %v16
  %v18 = vld [vmem:[%s1] sm:$0xf]
  %v19 = vld [vmem:[%s1 + $0x4] sm:$0xf]
  %v20 = vld [vmem:[%s1 + $0x8] sm:$0xf]
  %v21 = vld [vmem:[%s1 + $0xc] sm:$0xf]
  %v22 = vld [vmem:[%s1 + $0x10] sm:$0xf]
  %v23 = vld [vmem:[%s1 + $0x14] sm:$0xf]
  %v24 = vld [vmem:[%s1 + $0x18] sm:$0xf]
  %v25 = vld [vmem:[%s1 + $0x1c] sm:$0xf]
  %v26 = vld [vmem:[%s1 + $0x20] sm:$0xf]
  %v27 = vld [vmem:[%s1 + $0x24] sm:$0xf]
  %v28 = vld [vmem:[%s1 + $0x28] sm:$0xf]
  %v29 = vld [vmem:[%s1 + $0x2c] sm:$0xf]
  %v30 = vld [vmem:[%s1 + $0x30] sm:$0xf]
  %v31 = vld [vmem:[%s1 + $0x34] sm:$0xf]
  %v32 = vld [vmem:[%s1 + $0x38] sm:$0xf]
  %v33 = vld [vmem:[%s1 + $0x3c] sm:$0xf]
  %v34 = vld [vmem:[%s2] sm:$0x1]
  %v36 = vlaneseq
  %v37 = vshrl.u32 %v36, 7
  %v38 = vsub.s32 0, %v37
  %v39 = vrot.slane %v34, %v38
  %v57 = vunpack.c.l.b16 %v18
  %v58 = vunpack.c.l.b16 %v19
  %v59 = vunpack.c.l.b16 %v20
  %v60 = vunpack.c.l.b16 %v21
  %v61 = vunpack.c.l.b16 %v22
  %v62 = vunpack.c.l.b16 %v23
  %v63 = vunpack.c.l.b16 %v24
  %v64 = vunpack.c.l.b16 %v25
  %v65 = vunpack.c.l.b16 %v26
  %v66 = vunpack.c.l.b16 %v27
  %v67 = vunpack.c.l.b16 %v28
  %v68 = vunpack.c.l.b16 %v29
  %v69 = vunpack.c.l.b16 %v30
  %v70 = vunpack.c.l.b16 %v31
  %v71 = vunpack.c.l.b16 %v32
  %v72 = vunpack.c.l.b16 %v33
  %v73 = vpack.c.b16 %v58, %v57
  %v74 = vpack.c.b16 %v60, %v59
  %v75 = vpack.c.b16 %v62, %v61
  %v76 = vpack.c.b16 %v64, %v63
  %v77 = vpack.c.b16 %v66, %v65
  %v78 = vpack.c.b16 %v68, %v67
  %v79 = vpack.c.b16 %v70, %v69
  %v80 = vpack.c.b16 %v72, %v71
  %89 = vmatprep.subr.bf16.mxu0 0
  %90 = vmatpush1.bf16.msra.mxu0 %v73
  %91 = vmatprep.subr.bf16.mxu0 0
  %92 = vmatpush1.bf16.msra.mxu0 %v74
  %93 = vmatprep.subr.bf16.mxu0 0
  %94 = vmatpush1.bf16.msra.mxu0 %v75
  %95 = vmatprep.subr.bf16.mxu0 0
  %96 = vmatpush1.bf16.msra.mxu0 %v76
  %97 = vmatprep.subr.bf16.mxu0 0
  %98 = vmatpush1.bf16.msra.mxu0 %v77
  %99 = vmatprep.subr.bf16.mxu0 0
  %100 = vmatpush1.bf16.msra.mxu0 %v78
  %101 = vmatprep.subr.bf16.mxu0 0
  %102 = vmatpush1.bf16.msra.mxu0 %v79
  %103 = vmatprep.subr.bf16.mxu0 0
  %104 = vmatpush1.bf16.msra.mxu0 %v80
  %105 = vmatprep.subr.bf16.mxu0 0
  %106 = vmatpush1.bf16.msra.mxu0 0
  %107 = vmatprep.subr.bf16.mxu0 0
  %108 = vmatpush1.bf16.msra.mxu0 0
  %109 = vmatprep.subr.bf16.mxu0 0
  %110 = vmatpush1.bf16.msra.mxu0 0
  %111 = vmatprep.subr.bf16.mxu0 0
  %112 = vmatpush1.bf16.msra.mxu0 0
  %113 = vmatprep.subr.bf16.mxu0 0
  %114 = vmatpush1.bf16.msra.mxu0 0
  %115 = vmatprep.subr.bf16.mxu0 0
  %116 = vmatpush1.bf16.msra.mxu0 0
  %117 = vmatprep.subr.bf16.mxu0 0
  %118 = vmatpush1.bf16.msra.mxu0 0
  %119 = vmatprep.subr.bf16.mxu0 0
  %120 = vmatpush1.bf16.msra.mxu0 0
  %121 = vmatprep.mubr.bf16.mxu0 0
  %122 = vmatmul.mubr.bf16.gmra.mrb[0].mxu0 %v17
  %v123 = vpop.f32.mrb[0].mxu0
  %v124 = vadd.f32 %v39, %v123
  %v125 = vpop.f32.mrb[0].mxu0
  %v126 = vpop.f32.mrb[0].mxu0
  %v127 = vpop.f32.mrb[0].mxu0
  %128 = vdwg.mxu0
  %v129 = vlaneseq
  %v130 = vand.u32 %v129, 127
  %vm131 = vcmp.lt.s32.totalorder %v130, 4
  %v132 = vsel %vm131, %v124, -1e+30
  %133 = vmax.xlane.f32.xlu0 %v132
  %v134 = vpop.xlane.xlu0 %133
  %v135 = vsub.f32 %v132, %v134
  %v136 = vmul.f32 %v135, 1.442695
  %v137 = vpow.pop %v136
  %138 = vadd.xlane.f32.xlu0 %v137
  %v139 = vpop.xlane.xlu0 %138
  %v140 = vlog2.pop %v139
  %v141 = vmul.f32 %v140, 0.6931472
  %v142 = vsub.f32 %v135, %v141
  %143 = vst [vmem:[%s3] sm:$0xff] %v142
  // Predicated region
  $region14: #{gin_graph_classifier.5} parent=0 // pred_check
    _
  $region15: #{gin_graph_classifier.5} parent=0 // pred_check_branch
    %145 = sbr.rel (0) target = $region17
  $region16: #{gin_graph_classifier.5} parent=0 // pred_region
    _
  $region17: #{gin_graph_classifier.5} parent=0 // pred_fallthru
    _
  // Predicated region
  $region18: #{gin_graph_classifier.5} parent=0 // pred_check
    _
  $region19: #{gin_graph_classifier.5} parent=0 // pred_check_branch
    %147 = sbr.rel (0) target = $region21
  $region20: #{gin_graph_classifier.5} parent=0 // pred_region
    _
  $region21: #{gin_graph_classifier.5} parent=0 // pred_fallthru
    _

// kernel: gin_graph_classifier.4
$region0: #{gin_graph_classifier.4}
  #allocation0 [shape = 'u32[]', space=smem, size = 0x4, offset = 0x4, fixed_abs, tag = 'smem constant byte address 0x4 - core index']
  #allocation1 [shape = 'u32[144,128]{1,0:T(1,128)}', space=vmem, size = 0x12000, scoped, tag = 'internal scratch']
  #allocation2 [shape = 'f32[1,1]{1,0:T(1,128)S(6)}', space=smem, size = 0x200, scoped, tag = 'scoped memory for gin_graph_classifier.4']
  %s0 = inlined_call_operand.<no memory space> [shape: f32[1,1], index: 0, kind: input, shape index: {}]
  %s1 = inlined_call_operand.vmem [shape: s8[512,512], index: 1, kind: input, shape index: {}]
  %s2 = inlined_call_operand.vmem [shape: bf16[512,128], index: 2, kind: input, shape index: {}, may-alias: {2,3}]
  %s3 = inlined_call_operand.vmem [shape: bf16[512,128], index: 3, kind: input, shape index: {}, may-alias: {2,3}]
  %s4 = inlined_call_operand.vmem [shape: bf16[8,512], index: 4, kind: input, shape index: {}]
  %s5 = inlined_call_operand.vmem [shape: bf16[128,128], index: 5, kind: input, shape index: {}]
  %s6 = inlined_call_operand.vmem [shape: f32[1,128], index: 6, kind: input, shape index: {}]
  %s7 = inlined_call_operand.vmem [shape: bf16[128,128], index: 7, kind: input, shape index: {}]
  %s8 = inlined_call_operand.vmem [shape: f32[1,128], index: 8, kind: input, shape index: {}]
  %s9 = inlined_call_operand.vmem [shape: f32[1,8,128], index: 9, kind: output, shape index: {}]
  %s10 = sld [smem:[#allocation0]]
  $region46: #{gin_graph_classifier.4} parent=0
    _
  %s12 = ssub.s32 1, %s10
  %s13 = scalar_select 0, %s12, %s10
  %14 = sst [smem:[#allocation2]] %s0
  // Predicated region
  $region2: #{gin_graph_classifier.4} parent=0 // pred_check
    _
  $region3: #{gin_graph_classifier.4} parent=0 // pred_check_branch
    %16 = sbr.rel (0) target = $region5
  $region4: #{gin_graph_classifier.4} parent=0 // pred_region
    _
  $region5: #{gin_graph_classifier.4} parent=0 // pred_fallthru
    _
  // Predicated region
  $region6: #{gin_graph_classifier.4} parent=0 // pred_check
    _
  $region7: #{gin_graph_classifier.4} parent=0 // pred_check_branch
    %18 = sbr.rel (0) target = $region9
  $region8: #{gin_graph_classifier.4} parent=0 // pred_region
    _
  $region9: #{gin_graph_classifier.4} parent=0 // pred_fallthru
    _
  // Predicated region
  $region10: #{gin_graph_classifier.4} parent=0 // pred_check
    _
  $region11: #{gin_graph_classifier.4} parent=0 // pred_check_branch
    %20 = sbr.rel (0) target = $region13
  $region12: #{gin_graph_classifier.4} parent=0 // pred_region
    _
  $region13: #{gin_graph_classifier.4} parent=0 // pred_fallthru
    _
  // Predicated region
  $region14: #{gin_graph_classifier.4} parent=0 // pred_check
    _
  $region15: #{gin_graph_classifier.4} parent=0 // pred_check_branch
    %22 = sbr.rel (0) target = $region17
  $region16: #{gin_graph_classifier.4} parent=0 // pred_region
    _
  $region17: #{gin_graph_classifier.4} parent=0 // pred_fallthru
    _
  // Predicated region
  $region18: #{gin_graph_classifier.4} parent=0 // pred_check
    _
  $region19: #{gin_graph_classifier.4} parent=0 // pred_check_branch
    %24 = sbr.rel (0) target = $region21
  $region20: #{gin_graph_classifier.4} parent=0 // pred_region
    _
  $region21: #{gin_graph_classifier.4} parent=0 // pred_fallthru
    _
  // Predicated region
  $region22: #{gin_graph_classifier.4} parent=0 // pred_check
    _
  $region23: #{gin_graph_classifier.4} parent=0 // pred_check_branch
    %26 = sbr.rel (0) target = $region25
  $region24: #{gin_graph_classifier.4} parent=0 // pred_region
    _
  $region25: #{gin_graph_classifier.4} parent=0 // pred_fallthru
    _
  // Predicated region
  $region26: #{gin_graph_classifier.4} parent=0 // pred_check
    _
  $region27: #{gin_graph_classifier.4} parent=0 // pred_check_branch
    %28 = sbr.rel (0) target = $region29
  $region28: #{gin_graph_classifier.4} parent=0 // pred_region
    _
  $region29: #{gin_graph_classifier.4} parent=0 // pred_fallthru
    _
  // Predicated region
  $region30: #{gin_graph_classifier.4} parent=0 // pred_check
    _
  $region31: #{gin_graph_classifier.4} parent=0 // pred_check_branch
    %30 = sbr.rel (0) target = $region33
  $region32: #{gin_graph_classifier.4} parent=0 // pred_region
    _
  $region33: #{gin_graph_classifier.4} parent=0 // pred_fallthru
    _
  // Predicated region
  $region34: #{gin_graph_classifier.4} parent=0 // pred_check
    _
  $region35: #{gin_graph_classifier.4} parent=0 // pred_check_branch
    %32 = sbr.rel (0) target = $region37
  $region36: #{gin_graph_classifier.4} parent=0 // pred_region
    _
  $region37: #{gin_graph_classifier.4} parent=0 // pred_fallthru
    _
  %v34 = vld [vmem:[%s1] sm:$0xff]
  %v35 = vld [vmem:[%s1 + $0x8] sm:$0xff]
  %v36 = vld [vmem:[%s1 + $0x10] sm:$0xff]
  %v37 = vld [vmem:[%s1 + $0x18] sm:$0xff]
  %v38 = vld [vmem:[%s1 + $0x20] sm:$0xff]
  %v39 = vld [vmem:[%s1 + $0x28] sm:$0xff]
  %v40 = vld [vmem:[%s1 + $0x30] sm:$0xff]
  %v41 = vld [vmem:[%s1 + $0x38] sm:$0xff]
  %v42 = vld [vmem:[%s1 + $0x40] sm:$0xff]
  %v43 = vld [vmem:[%s1 + $0x48] sm:$0xff]
  %v44 = vld [vmem:[%s1 + $0x50] sm:$0xff]
  %v45 = vld [vmem:[%s1 + $0x58] sm:$0xff]
  %v46 = vld [vmem:[%s1 + $0x60] sm:$0xff]
  %v47 = vld [vmem:[%s1 + $0x68] sm:$0xff]
  %v48 = vld [vmem:[%s1 + $0x70] sm:$0xff]
  %v49 = vld [vmem:[%s1 + $0x78] sm:$0xff]
  %v50 = vld [vmem:[%s1 + $0x80] sm:$0xff]
  %v51 = vld [vmem:[%s1 + $0x88] sm:$0xff]
  %v52 = vld [vmem:[%s1 + $0x90] sm:$0xff]
  %v53 = vld [vmem:[%s1 + $0x98] sm:$0xff]
  %v54 = vld [vmem:[%s1 + $0xa0] sm:$0xff]
  %v55 = vld [vmem:[%s1 + $0xa8] sm:$0xff]
  %v56 = vld [vmem:[%s1 + $0xb0] sm:$0xff]
  %v57 = vld [vmem:[%s1 + $0xb8] sm:$0xff]
  %v58 = vld [vmem:[%s1 + $0xc0] sm:$0xff]
  %v59 = vld [vmem:[%s1 + $0xc8] sm:$0xff]
  %v60 = vld [vmem:[%s1 + $0xd0] sm:$0xff]
  %v61 = vld [vmem:[%s1 + $0xd8] sm:$0xff]
  %v62 = vld [vmem:[%s1 + $0xe0] sm:$0xff]
  %v63 = vld [vmem:[%s1 + $0xe8] sm:$0xff]
  %v64 = vld [vmem:[%s1 + $0xf0] sm:$0xff]
  %v65 = vld [vmem:[%s1 + $0xf8] sm:$0xff]
  %v66 = vld [vmem:[%s1 + $0x100] sm:$0xff]
  %v67 = vld [vmem:[%s1 + $0x108] sm:$0xff]
  %v68 = vld [vmem:[%s1 + $0x110] sm:$0xff]
  %v69 = vld [vmem:[%s1 + $0x118] sm:$0xff]
  %v70 = vld [vmem:[%s1 + $0x120] sm:$0xff]
  %v71 = vld [vmem:[%s1 + $0x128] sm:$0xff]
  %v72 = vld [vmem:[%s1 + $0x130] sm:$0xff]
  %v73 = vld [vmem:[%s1 + $0x138] sm:$0xff]
  %v74 = vld [vmem:[%s1 + $0x140] sm:$0xff]
  %v75 = vld [vmem:[%s1 + $0x148] sm:$0xff]
  %v76 = vld [vmem:[%s1 + $0x150] sm:$0xff]
  %v77 = vld [vmem:[%s1 + $0x158] sm:$0xff]
  %v78 = vld [vmem:[%s1 + $0x160] sm:$0xff]
  %v79 = vld [vmem:[%s1 + $0x168] sm:$0xff]
  %v80 = vld [vmem:[%s1 + $0x170] sm:$0xff]
  %v81 = vld [vmem:[%s1 + $0x178] sm:$0xff]
  %v82 = vld [vmem:[%s1 + $0x180] sm:$0xff]
  %v83 = vld [vmem:[%s1 + $0x188] sm:$0xff]
  %v84 = vld [vmem:[%s1 + $0x190] sm:$0xff]
  %v85 = vld [vmem:[%s1 + $0x198] sm:$0xff]
  %v86 = vld [vmem:[%s1 + $0x1a0] sm:$0xff]
  %v87 = vld [vmem:[%s1 + $0x1a8] sm:$0xff]
  %v88 = vld [vmem:[%s1 + $0x1b0] sm:$0xff]
  %v89 = vld [vmem:[%s1 + $0x1b8] sm:$0xff]
  %v90 = vld [vmem:[%s1 + $0x1c0] sm:$0xff]
  %v91 = vld [vmem:[%s1 + $0x1c8] sm:$0xff]
  %v92 = vld [vmem:[%s1 + $0x1d0] sm:$0xff]
  %v93 = vld [vmem:[%s1 + $0x1d8] sm:$0xff]
  %v94 = vld [vmem:[%s1 + $0x1e0] sm:$0xff]
  %v95 = vld [vmem:[%s1 + $0x1e8] sm:$0xff]
  %v96 = vld [vmem:[%s1 + $0x1f0] sm:$0xff]
  %v97 = vld [vmem:[%s1 + $0x1f8] sm:$0xff]
  %v98 = vunpack.c.l.s8.bf16 %v34
  %v99 = vunpack.c.h.s8.bf16 %v34
  %v100 = vunpack.c.l.s8.bf16 %v35
  %v101 = vunpack.c.h.s8.bf16 %v35
  %v102 = vunpack.c.l.s8.bf16 %v36
  %v103 = vunpack.c.h.s8.bf16 %v36
  %v104 = vunpack.c.l.s8.bf16 %v37
  %v105 = vunpack.c.h.s8.bf16 %v37
  %v106 = vunpack.c.l.s8.bf16 %v38
  %v107 = vunpack.c.h.s8.bf16 %v38
  %v108 = vunpack.c.l.s8.bf16 %v39
  %v109 = vunpack.c.h.s8.bf16 %v39
  %v110 = vunpack.c.l.s8.bf16 %v40
  %v111 = vunpack.c.h.s8.bf16 %v40
  %v112 = vunpack.c.l.s8.bf16 %v41
  %v113 = vunpack.c.h.s8.bf16 %v41
  %v114 = vunpack.c.l.s8.bf16 %v42
  %v115 = vunpack.c.h.s8.bf16 %v42
  %v116 = vunpack.c.l.s8.bf16 %v43
  %v117 = vunpack.c.h.s8.bf16 %v43
  %v118 = vunpack.c.l.s8.bf16 %v44
  %v119 = vunpack.c.h.s8.bf16 %v44
  %v120 = vunpack.c.l.s8.bf16 %v45
  %v121 = vunpack.c.h.s8.bf16 %v45
  %v122 = vunpack.c.l.s8.bf16 %v46
  %v123 = vunpack.c.h.s8.bf16 %v46
  %v124 = vunpack.c.l.s8.bf16 %v47
  %v125 = vunpack.c.h.s8.bf16 %v47
  %v126 = vunpack.c.l.s8.bf16 %v48
  %v127 = vunpack.c.h.s8.bf16 %v48
  %v128 = vunpack.c.l.s8.bf16 %v49
  %v129 = vunpack.c.h.s8.bf16 %v49
  %v130 = vunpack.c.l.s8.bf16 %v50
  %v131 = vunpack.c.h.s8.bf16 %v50
  %v132 = vunpack.c.l.s8.bf16 %v51
  %v133 = vunpack.c.h.s8.bf16 %v51
  %v134 = vunpack.c.l.s8.bf16 %v52
  %v135 = vunpack.c.h.s8.bf16 %v52
  %v136 = vunpack.c.l.s8.bf16 %v53
  %v137 = vunpack.c.h.s8.bf16 %v53
  %v138 = vunpack.c.l.s8.bf16 %v54
  %v139 = vunpack.c.h.s8.bf16 %v54
  %v140 = vunpack.c.l.s8.bf16 %v55
  %v141 = vunpack.c.h.s8.bf16 %v55
  %v142 = vunpack.c.l.s8.bf16 %v56
  %v143 = vunpack.c.h.s8.bf16 %v56
  %v144 = vunpack.c.l.s8.bf16 %v57
  %v145 = vunpack.c.h.s8.bf16 %v57
  %v146 = vunpack.c.l.s8.bf16 %v58
  %v147 = vunpack.c.h.s8.bf16 %v58
  %v148 = vunpack.c.l.s8.bf16 %v59
  %v149 = vunpack.c.h.s8.bf16 %v59
  %v150 = vunpack.c.l.s8.bf16 %v60
  %v151 = vunpack.c.h.s8.bf16 %v60
  %v152 = vunpack.c.l.s8.bf16 %v61
  %v153 = vunpack.c.h.s8.bf16 %v61
  %v154 = vunpack.c.l.s8.bf16 %v62
  %v155 = vunpack.c.h.s8.bf16 %v62
  %v156 = vunpack.c.l.s8.bf16 %v63
  %v157 = vunpack.c.h.s8.bf16 %v63
  %v158 = vunpack.c.l.s8.bf16 %v64
  %v159 = vunpack.c.h.s8.bf16 %v64
  %v160 = vunpack.c.l.s8.bf16 %v65
  %v161 = vunpack.c.h.s8.bf16 %v65
  %v162 = vunpack.c.l.s8.bf16 %v66
  %v163 = vunpack.c.h.s8.bf16 %v66
  %v164 = vunpack.c.l.s8.bf16 %v67
  %v165 = vunpack.c.h.s8.bf16 %v67
  %v166 = vunpack.c.l.s8.bf16 %v68
  %v167 = vunpack.c.h.s8.bf16 %v68
  %v168 = vunpack.c.l.s8.bf16 %v69
  %v169 = vunpack.c.h.s8.bf16 %v69
  %v170 = vunpack.c.l.s8.bf16 %v70
  %v171 = vunpack.c.h.s8.bf16 %v70
  %v172 = vunpack.c.l.s8.bf16 %v71
  %v173 = vunpack.c.h.s8.bf16 %v71
  %v174 = vunpack.c.l.s8.bf16 %v72
  %v175 = vunpack.c.h.s8.bf16 %v72
  %v176 = vunpack.c.l.s8.bf16 %v73
  %v177 = vunpack.c.h.s8.bf16 %v73
  %v178 = vunpack.c.l.s8.bf16 %v74
  %v179 = vunpack.c.h.s8.bf16 %v74
  %v180 = vunpack.c.l.s8.bf16 %v75
  %v181 = vunpack.c.h.s8.bf16 %v75
  %v182 = vunpack.c.l.s8.bf16 %v76
  %v183 = vunpack.c.h.s8.bf16 %v76
  %v184 = vunpack.c.l.s8.bf16 %v77
  %v185 = vunpack.c.h.s8.bf16 %v77
  %v186 = vunpack.c.l.s8.bf16 %v78
  %v187 = vunpack.c.h.s8.bf16 %v78
  %v188 = vunpack.c.l.s8.bf16 %v79
  %v189 = vunpack.c.h.s8.bf16 %v79
  %v190 = vunpack.c.l.s8.bf16 %v80
  %v191 = vunpack.c.h.s8.bf16 %v80
  %v192 = vunpack.c.l.s8.bf16 %v81
  %v193 = vunpack.c.h.s8.bf16 %v81
  %v194 = vunpack.c.l.s8.bf16 %v82
  %v195 = vunpack.c.h.s8.bf16 %v82
  %v196 = vunpack.c.l.s8.bf16 %v83
  %v197 = vunpack.c.h.s8.bf16 %v83
  %v198 = vunpack.c.l.s8.bf16 %v84
  %v199 = vunpack.c.h.s8.bf16 %v84
  %v200 = vunpack.c.l.s8.bf16 %v85
  %v201 = vunpack.c.h.s8.bf16 %v85
  %v202 = vunpack.c.l.s8.bf16 %v86
  %v203 = vunpack.c.h.s8.bf16 %v86
  %v204 = vunpack.c.l.s8.bf16 %v87
  %v205 = vunpack.c.h.s8.bf16 %v87
  %v206 = vunpack.c.l.s8.bf16 %v88
  %v207 = vunpack.c.h.s8.bf16 %v88
  %v208 = vunpack.c.l.s8.bf16 %v89
  %v209 = vunpack.c.h.s8.bf16 %v89
  %v210 = vunpack.c.l.s8.bf16 %v90
  %v211 = vunpack.c.h.s8.bf16 %v90
  %v212 = vunpack.c.l.s8.bf16 %v91
  %v213 = vunpack.c.h.s8.bf16 %v91
  %v214 = vunpack.c.l.s8.bf16 %v92
  %v215 = vunpack.c.h.s8.bf16 %v92
  %v216 = vunpack.c.l.s8.bf16 %v93
  %v217 = vunpack.c.h.s8.bf16 %v93
  %v218 = vunpack.c.l.s8.bf16 %v94
  %v219 = vunpack.c.h.s8.bf16 %v94
  %v220 = vunpack.c.l.s8.bf16 %v95
  %v221 = vunpack.c.h.s8.bf16 %v95
  %v222 = vunpack.c.l.s8.bf16 %v96
  %v223 = vunpack.c.h.s8.bf16 %v96
  %v224 = vunpack.c.l.s8.bf16 %v97
  %v225 = vunpack.c.h.s8.bf16 %v97
  %v226 = vld [vmem:[%s2] sm:$0xf]
  %v227 = vld [vmem:[%s2 + $0x4] sm:$0xf]
  %v228 = vld [vmem:[%s2 + $0x8] sm:$0xf]
  %v229 = vld [vmem:[%s2 + $0xc] sm:$0xf]
  %v230 = vld [vmem:[%s2 + $0x10] sm:$0xf]
  %v231 = vld [vmem:[%s2 + $0x14] sm:$0xf]
  %v232 = vld [vmem:[%s2 + $0x18] sm:$0xf]
  %v233 = vld [vmem:[%s2 + $0x1c] sm:$0xf]
  %v234 = vld [vmem:[%s2 + $0x20] sm:$0xf]
  %v235 = vld [vmem:[%s2 + $0x24] sm:$0xf]
  %v236 = vld [vmem:[%s2 + $0x28] sm:$0xf]
  %v237 = vld [vmem:[%s2 + $0x2c] sm:$0xf]
  %v238 = vld [vmem:[%s2 + $0x30] sm:$0xf]
  %v239 = vld [vmem:[%s2 + $0x34] sm:$0xf]
  %v240 = vld [vmem:[%s2 + $0x38] sm:$0xf]
  %v241 = vld [vmem:[%s2 + $0x3c] sm:$0xf]
  %v242 = vld [vmem:[%s2 + $0x40] sm:$0xf]
  %v243 = vld [vmem:[%s2 + $0x44] sm:$0xf]
  %v244 = vld [vmem:[%s2 + $0x48] sm:$0xf]
  %v245 = vld [vmem:[%s2 + $0x4c] sm:$0xf]
  %v246 = vld [vmem:[%s2 + $0x50] sm:$0xf]
  %v247 = vld [vmem:[%s2 + $0x54] sm:$0xf]
  %v248 = vld [vmem:[%s2 + $0x58] sm:$0xf]
  %v249 = vld [vmem:[%s2 + $0x5c] sm:$0xf]
  %v250 = vld [vmem:[%s2 + $0x60] sm:$0xf]
  %v251 = vld [vmem:[%s2 + $0x64] sm:$0xf]
  %v252 = vld [vmem:[%s2 + $0x68] sm:$0xf]
  %v253 = vld [vmem:[%s2 + $0x6c] sm:$0xf]
  %v254 = vld [vmem:[%s2 + $0x70] sm:$0xf]
  %v255 = vld [vmem:[%s2 + $0x74] sm:$0xf]
  %v256 = vld [vmem:[%s2 + $0x78] sm:$0xf]
  %v257 = vld [vmem:[%s2 + $0x7c] sm:$0xf]
  %v258 = vld [vmem:[%s2 + $0x80] sm:$0xf]
  %v259 = vld [vmem:[%s2 + $0x84] sm:$0xf]
  %v260 = vld [vmem:[%s2 + $0x88] sm:$0xf]
  %v261 = vld [vmem:[%s2 + $0x8c] sm:$0xf]
  %v262 = vld [vmem:[%s2 + $0x90] sm:$0xf]
  %v263 = vld [vmem:[%s2 + $0x94] sm:$0xf]
  %v264 = vld [vmem:[%s2 + $0x98] sm:$0xf]
  %v265 = vld [vmem:[%s2 + $0x9c] sm:$0xf]
  %v266 = vld [vmem:[%s2 + $0xa0] sm:$0xf]
  %v267 = vld [vmem:[%s2 + $0xa4] sm:$0xf]
  %v268 = vld [vmem:[%s2 + $0xa8] sm:$0xf]
  %v269 = vld [vmem:[%s2 + $0xac] sm:$0xf]
  %v270 = vld [vmem:[%s2 + $0xb0] sm:$0xf]
  %v271 = vld [vmem:[%s2 + $0xb4] sm:$0xf]
  %v272 = vld [vmem:[%s2 + $0xb8] sm:$0xf]
  %v273 = vld [vmem:[%s2 + $0xbc] sm:$0xf]
  %v274 = vld [vmem:[%s2 + $0xc0] sm:$0xf]
  %v275 = vld [vmem:[%s2 + $0xc4] sm:$0xf]
  %v276 = vld [vmem:[%s2 + $0xc8] sm:$0xf]
  %v277 = vld [vmem:[%s2 + $0xcc] sm:$0xf]
  %v278 = vld [vmem:[%s2 + $0xd0] sm:$0xf]
  %v279 = vld [vmem:[%s2 + $0xd4] sm:$0xf]
  %v280 = vld [vmem:[%s2 + $0xd8] sm:$0xf]
  %v281 = vld [vmem:[%s2 + $0xdc] sm:$0xf]
  %v282 = vld [vmem:[%s2 + $0xe0] sm:$0xf]
  %v283 = vld [vmem:[%s2 + $0xe4] sm:$0xf]
  %v284 = vld [vmem:[%s2 + $0xe8] sm:$0xf]
  %v285 = vld [vmem:[%s2 + $0xec] sm:$0xf]
  %v286 = vld [vmem:[%s2 + $0xf0] sm:$0xf]
  %v287 = vld [vmem:[%s2 + $0xf4] sm:$0xf]
  %v288 = vld [vmem:[%s2 + $0xf8] sm:$0xf]
  %v289 = vld [vmem:[%s2 + $0xfc] sm:$0xf]
  %v418 = vunpack.c.l.b16 %v98
  %v419 = vunpack.c.h.b16 %v98
  %v420 = vunpack.c.l.b16 %v99
  %v421 = vunpack.c.h.b16 %v99
  %v422 = vunpack.c.l.b16 %v100
  %v423 = vunpack.c.h.b16 %v100
  %v424 = vunpack.c.l.b16 %v101
  %v425 = vunpack.c.h.b16 %v101
  %v426 = vunpack.c.l.b16 %v102
  %v427 = vunpack.c.h.b16 %v102
  %v428 = vunpack.c.l.b16 %v103
  %v429 = vunpack.c.h.b16 %v103
  %v430 = vunpack.c.l.b16 %v104
  %v431 = vunpack.c.h.b16 %v104
  %v432 = vunpack.c.l.b16 %v105
  %v433 = vunpack.c.h.b16 %v105
  %v434 = vunpack.c.l.b16 %v106
  %v435 = vunpack.c.h.b16 %v106
  %v436 = vunpack.c.l.b16 %v107
  %v437 = vunpack.c.h.b16 %v107
  %v438 = vunpack.c.l.b16 %v108
  %v439 = vunpack.c.h.b16 %v108
  %v440 = vunpack.c.l.b16 %v109
  %v441 = vunpack.c.h.b16 %v109
  %v442 = vunpack.c.l.b16 %v110
  %v443 = vunpack.c.h.b16 %v110
  %v444 = vunpack.c.l.b16 %v111
  %v445 = vunpack.c.h.b16 %v111
  %v446 = vunpack.c.l.b16 %v112
  %v447 = vunpack.c.h.b16 %v112
  %v448 = vunpack.c.l.b16 %v113
  %v449 = vunpack.c.h.b16 %v113
  %v450 = vunpack.c.l.b16 %v114
  %v451 = vunpack.c.h.b16 %v114
  %v452 = vunpack.c.l.b16 %v115
  %v453 = vunpack.c.h.b16 %v115
  %v454 = vunpack.c.l.b16 %v116
  %v455 = vunpack.c.h.b16 %v116
  %v456 = vunpack.c.l.b16 %v117
  %v457 = vunpack.c.h.b16 %v117
  %v458 = vunpack.c.l.b16 %v118
  %v459 = vunpack.c.h.b16 %v118
  %v460 = vunpack.c.l.b16 %v119
  %v461 = vunpack.c.h.b16 %v119
  %v462 = vunpack.c.l.b16 %v120
  %v463 = vunpack.c.h.b16 %v120
  %v464 = vunpack.c.l.b16 %v121
  %v465 = vunpack.c.h.b16 %v121
  %v466 = vunpack.c.l.b16 %v122
  %v467 = vunpack.c.h.b16 %v122
  %v468 = vunpack.c.l.b16 %v123
  %v469 = vunpack.c.h.b16 %v123
  %v470 = vunpack.c.l.b16 %v124
  %v471 = vunpack.c.h.b16 %v124
  %v472 = vunpack.c.l.b16 %v125
  %v473 = vunpack.c.h.b16 %v125
  %v474 = vunpack.c.l.b16 %v126
  %v475 = vunpack.c.h.b16 %v126
  %v476 = vunpack.c.l.b16 %v127
  %v477 = vunpack.c.h.b16 %v127
  %v478 = vunpack.c.l.b16 %v128
  %v479 = vunpack.c.h.b16 %v128
  %v480 = vunpack.c.l.b16 %v129
  %v481 = vunpack.c.h.b16 %v129
  %v482 = vunpack.c.l.b16 %v130
  %v483 = vunpack.c.h.b16 %v130
  %v484 = vunpack.c.l.b16 %v131
  %v485 = vunpack.c.h.b16 %v131
  %v486 = vunpack.c.l.b16 %v132
  %v487 = vunpack.c.h.b16 %v132
  %v488 = vunpack.c.l.b16 %v133
  %v489 = vunpack.c.h.b16 %v133
  %v490 = vunpack.c.l.b16 %v134
  %v491 = vunpack.c.h.b16 %v134
  %v492 = vunpack.c.l.b16 %v135
  %v493 = vunpack.c.h.b16 %v135
  %v494 = vunpack.c.l.b16 %v136
  %v495 = vunpack.c.h.b16 %v136
  %v496 = vunpack.c.l.b16 %v137
  %v497 = vunpack.c.h.b16 %v137
  %v498 = vunpack.c.l.b16 %v138
  %v499 = vunpack.c.h.b16 %v138
  %v500 = vunpack.c.l.b16 %v139
  %v501 = vunpack.c.h.b16 %v139
  %v502 = vunpack.c.l.b16 %v140
  %v503 = vunpack.c.h.b16 %v140
  %v504 = vunpack.c.l.b16 %v141
  %v505 = vunpack.c.h.b16 %v141
  %v506 = vunpack.c.l.b16 %v142
  %v507 = vunpack.c.h.b16 %v142
  %v508 = vunpack.c.l.b16 %v143
  %v509 = vunpack.c.h.b16 %v143
  %v510 = vunpack.c.l.b16 %v144
  %v511 = vunpack.c.h.b16 %v144
  %v512 = vunpack.c.l.b16 %v145
  %v513 = vunpack.c.h.b16 %v145
  %v514 = vunpack.c.l.b16 %v146
  %v515 = vunpack.c.h.b16 %v146
  %v516 = vunpack.c.l.b16 %v147
  %v517 = vunpack.c.h.b16 %v147
  %v518 = vunpack.c.l.b16 %v148
  %v519 = vunpack.c.h.b16 %v148
  %v520 = vunpack.c.l.b16 %v149
  %v521 = vunpack.c.h.b16 %v149
  %v522 = vunpack.c.l.b16 %v150
  %v523 = vunpack.c.h.b16 %v150
  %v524 = vunpack.c.l.b16 %v151
  %v525 = vunpack.c.h.b16 %v151
  %v526 = vunpack.c.l.b16 %v152
  %v527 = vunpack.c.h.b16 %v152
  %v528 = vunpack.c.l.b16 %v153
  %v529 = vunpack.c.h.b16 %v153
  %v530 = vunpack.c.l.b16 %v154
  %v531 = vunpack.c.h.b16 %v154
  %v532 = vunpack.c.l.b16 %v155
  %v533 = vunpack.c.h.b16 %v155
  %v534 = vunpack.c.l.b16 %v156
  %v535 = vunpack.c.h.b16 %v156
  %v536 = vunpack.c.l.b16 %v157
  %v537 = vunpack.c.h.b16 %v157
  %v538 = vunpack.c.l.b16 %v158
  %v539 = vunpack.c.h.b16 %v158
  %v540 = vunpack.c.l.b16 %v159
  %v541 = vunpack.c.h.b16 %v159
  %v542 = vunpack.c.l.b16 %v160
  %v543 = vunpack.c.h.b16 %v160
  %v544 = vunpack.c.l.b16 %v161
  %v545 = vunpack.c.h.b16 %v161
  %v546 = vunpack.c.l.b16 %v162
  %v547 = vunpack.c.h.b16 %v162
  %v548 = vunpack.c.l.b16 %v163
  %v549 = vunpack.c.h.b16 %v163
  %v550 = vunpack.c.l.b16 %v164
  %v551 = vunpack.c.h.b16 %v164
  %v552 = vunpack.c.l.b16 %v165
  %v553 = vunpack.c.h.b16 %v165
  %v554 = vunpack.c.l.b16 %v166
  %v555 = vunpack.c.h.b16 %v166
  %v556 = vunpack.c.l.b16 %v167
  %v557 = vunpack.c.h.b16 %v167
  %v558 = vunpack.c.l.b16 %v168
  %v559 = vunpack.c.h.b16 %v168
  %v560 = vunpack.c.l.b16 %v169
  %v561 = vunpack.c.h.b16 %v169
  %v562 = vunpack.c.l.b16 %v170
  %v563 = vunpack.c.h.b16 %v170
  %v564 = vunpack.c.l.b16 %v171
  %v565 = vunpack.c.h.b16 %v171
  %v566 = vunpack.c.l.b16 %v172
  %v567 = vunpack.c.h.b16 %v172
  %v568 = vunpack.c.l.b16 %v173
  %v569 = vunpack.c.h.b16 %v173
  %v570 = vunpack.c.l.b16 %v174
  %v571 = vunpack.c.h.b16 %v174
  %v572 = vunpack.c.l.b16 %v175
  %v573 = vunpack.c.h.b16 %v175
  %v574 = vunpack.c.l.b16 %v176
  %v575 = vunpack.c.h.b16 %v176
  %v576 = vunpack.c.l.b16 %v177
  %v577 = vunpack.c.h.b16 %v177
  %v578 = vunpack.c.l.b16 %v178
  %v579 = vunpack.c.h.b16 %v178
  %v580 = vunpack.c.l.b16 %v179
  %v581 = vunpack.c.h.b16 %v179
  %v582 = vunpack.c.l.b16 %v180
  %v583 = vunpack.c.h.b16 %v180
  %v584 = vunpack.c.l.b16 %v181
  %v585 = vunpack.c.h.b16 %v181
  %v586 = vunpack.c.l.b16 %v182
  %v587 = vunpack.c.h.b16 %v182
  %v588 = vunpack.c.l.b16 %v183
  %v589 = vunpack.c.h.b16 %v183
  %v590 = vunpack.c.l.b16 %v184
  %v591 = vunpack.c.h.b16 %v184
  %v592 = vunpack.c.l.b16 %v185
  %v593 = vunpack.c.h.b16 %v185
  %v594 = vunpack.c.l.b16 %v186
  %v595 = vunpack.c.h.b16 %v186
  %v596 = vunpack.c.l.b16 %v187
  %v597 = vunpack.c.h.b16 %v187
  %v598 = vunpack.c.l.b16 %v188
  %v599 = vunpack.c.h.b16 %v188
  %v600 = vunpack.c.l.b16 %v189
  %v601 = vunpack.c.h.b16 %v189
  %v602 = vunpack.c.l.b16 %v190
  %v603 = vunpack.c.h.b16 %v190
  %v604 = vunpack.c.l.b16 %v191
  %v605 = vunpack.c.h.b16 %v191
  %v606 = vunpack.c.l.b16 %v192
  %v607 = vunpack.c.h.b16 %v192
  %v608 = vunpack.c.l.b16 %v193
  %v609 = vunpack.c.h.b16 %v193
  %v610 = vunpack.c.l.b16 %v194
  %v611 = vunpack.c.h.b16 %v194
  %v612 = vunpack.c.l.b16 %v195
  %v613 = vunpack.c.h.b16 %v195
  %v614 = vunpack.c.l.b16 %v196
  %v615 = vunpack.c.h.b16 %v196
  %v616 = vunpack.c.l.b16 %v197
  %v617 = vunpack.c.h.b16 %v197
  %v618 = vunpack.c.l.b16 %v198
  %v619 = vunpack.c.h.b16 %v198
  %v620 = vunpack.c.l.b16 %v199
  %v621 = vunpack.c.h.b16 %v199
  %v622 = vunpack.c.l.b16 %v200
  %v623 = vunpack.c.h.b16 %v200
  %v624 = vunpack.c.l.b16 %v201
  %v625 = vunpack.c.h.b16 %v201
  %v626 = vunpack.c.l.b16 %v202
  %v627 = vunpack.c.h.b16 %v202
  %v628 = vunpack.c.l.b16 %v203
  %v629 = vunpack.c.h.b16 %v203
  %v630 = vunpack.c.l.b16 %v204
  %v631 = vunpack.c.h.b16 %v204
  %v632 = vunpack.c.l.b16 %v205
  %v633 = vunpack.c.h.b16 %v205
  %v634 = vunpack.c.l.b16 %v206
  %v635 = vunpack.c.h.b16 %v206
  %v636 = vunpack.c.l.b16 %v207
  %v637 = vunpack.c.h.b16 %v207
  %v638 = vunpack.c.l.b16 %v208
  %v639 = vunpack.c.h.b16 %v208
  %v640 = vunpack.c.l.b16 %v209
  %v641 = vunpack.c.h.b16 %v209
  %v642 = vunpack.c.l.b16 %v210
  %v643 = vunpack.c.h.b16 %v210
  %v644 = vunpack.c.l.b16 %v211
  %v645 = vunpack.c.h.b16 %v211
  %v646 = vunpack.c.l.b16 %v212
  %v647 = vunpack.c.h.b16 %v212
  %v648 = vunpack.c.l.b16 %v213
  %v649 = vunpack.c.h.b16 %v213
  %v650 = vunpack.c.l.b16 %v214
  %v651 = vunpack.c.h.b16 %v214
  %v652 = vunpack.c.l.b16 %v215
  %v653 = vunpack.c.h.b16 %v215
  %v654 = vunpack.c.l.b16 %v216
  %v655 = vunpack.c.h.b16 %v216
  %v656 = vunpack.c.l.b16 %v217
  %v657 = vunpack.c.h.b16 %v217
  %v658 = vunpack.c.l.b16 %v218
  %v659 = vunpack.c.h.b16 %v218
  %v660 = vunpack.c.l.b16 %v219
  %v661 = vunpack.c.h.b16 %v219
  %v662 = vunpack.c.l.b16 %v220
  %v663 = vunpack.c.h.b16 %v220
  %v664 = vunpack.c.l.b16 %v221
  %v665 = vunpack.c.h.b16 %v221
  %v666 = vunpack.c.l.b16 %v222
  %v667 = vunpack.c.h.b16 %v222
  %v668 = vunpack.c.l.b16 %v223
  %v669 = vunpack.c.h.b16 %v223
  %v670 = vunpack.c.l.b16 %v224
  %v671 = vunpack.c.h.b16 %v224
  %v672 = vunpack.c.l.b16 %v225
  %v673 = vunpack.c.h.b16 %v225
  %v674 = vpack.c.b16 %v422, %v418
  %v675 = vpack.c.b16 %v423, %v419
  %v676 = vpack.c.b16 %v424, %v420
  %v677 = vpack.c.b16 %v425, %v421
  %v678 = vpack.c.b16 %v430, %v426
  %v679 = vpack.c.b16 %v431, %v427
  %v680 = vpack.c.b16 %v432, %v428
  %v681 = vpack.c.b16 %v433, %v429
  %v682 = vpack.c.b16 %v438, %v434
  %v683 = vpack.c.b16 %v439, %v435
  %v684 = vpack.c.b16 %v440, %v436
  %v685 = vpack.c.b16 %v441, %v437
  %v686 = vpack.c.b16 %v446, %v442
  %v687 = vpack.c.b16 %v447, %v443
  %v688 = vpack.c.b16 %v448, %v444
  %v689 = vpack.c.b16 %v449, %v445
  %v690 = vpack.c.b16 %v454, %v450
  %v691 = vpack.c.b16 %v455, %v451
  %v692 = vpack.c.b16 %v456, %v452
  %v693 = vpack.c.b16 %v457, %v453
  %v694 = vpack.c.b16 %v462, %v458
  %v695 = vpack.c.b16 %v463, %v459
  %v696 = vpack.c.b16 %v464, %v460
  %v697 = vpack.c.b16 %v465, %v461
  %v698 = vpack.c.b16 %v470, %v466
  %v699 = vpack.c.b16 %v471, %v467
  %v700 = vpack.c.b16 %v472, %v468
  %v701 = vpack.c.b16 %v473, %v469
  %v702 = vpack.c.b16 %v478, %v474
  %v703 = vpack.c.b16 %v479, %v475
  %v704 = vpack.c.b16 %v480, %v476
  %v705 = vpack.c.b16 %v481, %v477
  %v706 = vpack.c.b16 %v486, %v482
  %v707 = vpack.c.b16 %v487, %v483
  %v708 = vpack.c.b16 %v488, %v484
  %v709 = vpack.c.b16 %v489, %v485
  %v710 = vpack.c.b16 %v494, %v490
  %v711 = vpack.c.b16 %v495, %v491
  %v712 = vpack.c.b16 %v496, %v492
  %v713 = vpack.c.b16 %v497, %v493
  %v714 = vpack.c.b16 %v502, %v498
  %v715 = vpack.c.b16 %v503, %v499
  %v716 = vpack.c.b16 %v504, %v500
  %v717 = vpack.c.b16 %v505, %v501
  %v718 = vpack.c.b16 %v510, %v506
  %v719 = vpack.c.b16 %v511, %v507
  %v720 = vpack.c.b16 %v512, %v508
  %v721 = vpack.c.b16 %v513, %v509
  %v722 = vpack.c.b16 %v518, %v514
  %v723 = vpack.c.b16 %v519, %v515
  %v724 = vpack.c.b16 %v520, %v516
  %v725 = vpack.c.b16 %v521, %v517
  %v726 = vpack.c.b16 %v526, %v522
  %v727 = vpack.c.b16 %v527, %v523
  %v728 = vpack.c.b16 %v528, %v524
  %v729 = vpack.c.b16 %v529, %v525
  %v730 = vpack.c.b16 %v534, %v530
  %v731 = vpack.c.b16 %v535, %v531
  %v732 = vpack.c.b16 %v536, %v532
  %v733 = vpack.c.b16 %v537, %v533
  %v734 = vpack.c.b16 %v542, %v538
  %v735 = vpack.c.b16 %v543, %v539
  %v736 = vpack.c.b16 %v544, %v540
  %v737 = vpack.c.b16 %v545, %v541
  %v738 = vpack.c.b16 %v550, %v546
  %v739 = vpack.c.b16 %v551, %v547
  %v740 = vpack.c.b16 %v552, %v548
  %v741 = vpack.c.b16 %v553, %v549
  %v742 = vpack.c.b16 %v558, %v554
  %v743 = vpack.c.b16 %v559, %v555
  %v744 = vpack.c.b16 %v560, %v556
  %v745 = vpack.c.b16 %v561, %v557
  %v746 = vpack.c.b16 %v566, %v562
  %v747 = vpack.c.b16 %v567, %v563
  %v748 = vpack.c.b16 %v568, %v564
  %v749 = vpack.c.b16 %v569, %v565
  %v750 = vpack.c.b16 %v574, %v570
  %v751 = vpack.c.b16 %v575, %v571
  %v752 = vpack.c.b16 %v576, %v572
  %v753 = vpack.c.b16 %v577, %v573
  %v754 = vpack.c.b16 %v582, %v578
  %v755 = vpack.c.b16 %v583, %v579
  %v756 = vpack.c.b16 %v584, %v580
  %v757 = vpack.c.b16 %v585, %v581
  %v758 = vpack.c.b16 %v590, %v586
  %v759 = vpack.c.b16 %v591, %v587
  %v760 = vpack.c.b16 %v592, %v588
  %v761 = vpack.c.b16 %v593, %v589
  %v762 = vpack.c.b16 %v598, %v594
  %v763 = vpack.c.b16 %v599, %v595
  %v764 = vpack.c.b16 %v600, %v596
  %v765 = vpack.c.b16 %v601, %v597
  %v766 = vpack.c.b16 %v606, %v602
  %v767 = vpack.c.b16 %v607, %v603
  %v768 = vpack.c.b16 %v608, %v604
  %v769 = vpack.c.b16 %v609, %v605
  %v770 = vpack.c.b16 %v614, %v610
  %v771 = vpack.c.b16 %v615, %v611
  %v772 = vpack.c.b16 %v616, %v612
  %v773 = vpack.c.b16 %v617, %v613
  %v774 = vpack.c.b16 %v622, %v618
  %v775 = vpack.c.b16 %v623, %v619
  %v776 = vpack.c.b16 %v624, %v620
  %v777 = vpack.c.b16 %v625, %v621
  %v778 = vpack.c.b16 %v630, %v626
  %v779 = vpack.c.b16 %v631, %v627
  %v780 = vpack.c.b16 %v632, %v628
  %v781 = vpack.c.b16 %v633, %v629
  %v782 = vpack.c.b16 %v638, %v634
  %v783 = vpack.c.b16 %v639, %v635
  %v784 = vpack.c.b16 %v640, %v636
  %v785 = vpack.c.b16 %v641, %v637
  %v786 = vpack.c.b16 %v646, %v642
  %v787 = vpack.c.b16 %v647, %v643
  %v788 = vpack.c.b16 %v648, %v644
  %v789 = vpack.c.b16 %v649, %v645
  %v790 = vpack.c.b16 %v654, %v650
  %v791 = vpack.c.b16 %v655, %v651
  %v792 = vpack.c.b16 %v656, %v652
  %v793 = vpack.c.b16 %v657, %v653
  %v794 = vpack.c.b16 %v662, %v658
  %v795 = vpack.c.b16 %v663, %v659
  %v796 = vpack.c.b16 %v664, %v660
  %v797 = vpack.c.b16 %v665, %v661
  %v798 = vpack.c.b16 %v670, %v666
  %v799 = vpack.c.b16 %v671, %v667
  %v800 = vpack.c.b16 %v672, %v668
  %v801 = vpack.c.b16 %v673, %v669
  %v994 = vunpack.c.l.b16 %v226
  %v995 = vunpack.c.l.b16 %v227
  %v996 = vunpack.c.l.b16 %v228
  %v997 = vunpack.c.l.b16 %v229
  %v998 = vunpack.c.l.b16 %v230
  %v999 = vunpack.c.l.b16 %v231
  %v1000 = vunpack.c.l.b16 %v232
  %v1001 = vunpack.c.l.b16 %v233
  %v1002 = vunpack.c.l.b16 %v234
  %v1003 = vunpack.c.l.b16 %v235
  %v1004 = vunpack.c.l.b16 %v236
  %v1005 = vunpack.c.l.b16 %v237
  %v1006 = vunpack.c.l.b16 %v238
  %v1007 = vunpack.c.l.b16 %v239
  %v1008 = vunpack.c.l.b16 %v240
  %v1009 = vunpack.c.l.b16 %v241
  %v1010 = vunpack.c.l.b16 %v242
  %v1011 = vunpack.c.l.b16 %v243
  %v1012 = vunpack.c.l.b16 %v244
  %v1013 = vunpack.c.l.b16 %v245
  %v1014 = vunpack.c.l.b16 %v246
  %v1015 = vunpack.c.l.b16 %v247
  %v1016 = vunpack.c.l.b16 %v248
  %v1017 = vunpack.c.l.b16 %v249
  %v1018 = vunpack.c.l.b16 %v250
  %v1019 = vunpack.c.l.b16 %v251
  %v1020 = vunpack.c.l.b16 %v252
  %v1021 = vunpack.c.l.b16 %v253
  %v1022 = vunpack.c.l.b16 %v254
  %v1023 = vunpack.c.l.b16 %v255
  %v1024 = vunpack.c.l.b16 %v256
  %v1025 = vunpack.c.l.b16 %v257
  %v1026 = vunpack.c.l.b16 %v258
  %v1027 = vunpack.c.l.b16 %v259
  %v1028 = vunpack.c.l.b16 %v260
  %v1029 = vunpack.c.l.b16 %v261
  %v1030 = vunpack.c.l.b16 %v262
  %v1031 = vunpack.c.l.b16 %v263
  %v1032 = vunpack.c.l.b16 %v264
  %v1033 = vunpack.c.l.b16 %v265
  %v1034 = vunpack.c.l.b16 %v266
  %v1035 = vunpack.c.l.b16 %v267
  %v1036 = vunpack.c.l.b16 %v268
  %v1037 = vunpack.c.l.b16 %v269
  %v1038 = vunpack.c.l.b16 %v270
  %v1039 = vunpack.c.l.b16 %v271
  %v1040 = vunpack.c.l.b16 %v272
  %v1041 = vunpack.c.l.b16 %v273
  %v1042 = vunpack.c.l.b16 %v274
  %v1043 = vunpack.c.l.b16 %v275
  %v1044 = vunpack.c.l.b16 %v276
  %v1045 = vunpack.c.l.b16 %v277
  %v1046 = vunpack.c.l.b16 %v278
  %v1047 = vunpack.c.l.b16 %v279
  %v1048 = vunpack.c.l.b16 %v280
  %v1049 = vunpack.c.l.b16 %v281
  %v1050 = vunpack.c.l.b16 %v282
  %v1051 = vunpack.c.l.b16 %v283
  %v1052 = vunpack.c.l.b16 %v284
  %v1053 = vunpack.c.l.b16 %v285
  %v1054 = vunpack.c.l.b16 %v286
  %v1055 = vunpack.c.l.b16 %v287
  %v1056 = vunpack.c.l.b16 %v288
  %v1057 = vunpack.c.l.b16 %v289
  %v1058 = vpack.c.b16 %v995, %v994
  %v1059 = vpack.c.b16 %v997, %v996
  %v1060 = vpack.c.b16 %v999, %v998
  %v1061 = vpack.c.b16 %v1001, %v1000
  %v1062 = vpack.c.b16 %v1003, %v1002
  %v1063 = vpack.c.b16 %v1005, %v1004
  %v1064 = vpack.c.b16 %v1007, %v1006
  %v1065 = vpack.c.b16 %v1009, %v1008
  %v1066 = vpack.c.b16 %v1011, %v1010
  %v1067 = vpack.c.b16 %v1013, %v1012
  %v1068 = vpack.c.b16 %v1015, %v1014
  %v1069 = vpack.c.b16 %v1017, %v1016
  %v1070 = vpack.c.b16 %v1019, %v1018
  %v1071 = vpack.c.b16 %v1021, %v1020
  %v1072 = vpack.c.b16 %v1023, %v1022
  %v1073 = vpack.c.b16 %v1025, %v1024
  %v1074 = vpack.c.b16 %v1027, %v1026
  %v1075 = vpack.c.b16 %v1029, %v1028
  %v1076 = vpack.c.b16 %v1031, %v1030
  %v1077 = vpack.c.b16 %v1033, %v1032
  %v1078 = vpack.c.b16 %v1035, %v1034
  %v1079 = vpack.c.b16 %v1037, %v1036
  %v1080 = vpack.c.b16 %v1039, %v1038
  %v1081 = vpack.c.b16 %v1041, %v1040
  %v1082 = vpack.c.b16 %v1043, %v1042
  %v1083 = vpack.c.b16 %v1045, %v1044
  %v1084 = vpack.c.b16 %v1047, %v1046
  %v1085 = vpack.c.b16 %v1049, %v1048
  %v1086 = vpack.c.b16 %v1051, %v1050
  %v1087 = vpack.c.b16 %v1053, %v1052
  %v1088 = vpack.c.b16 %v1055, %v1054
  %v1089 = vpack.c.b16 %v1057, %v1056
  %1122 = vmatprep.subr.bf16.mxu0 0
  %1123 = vmatpush1.bf16.msra.mxu0 %v1058
  %1124 = vmatprep.subr.bf16.mxu0 0
  %1125 = vmatpush1.bf16.msra.mxu0 %v1059
  %1126 = vmatprep.subr.bf16.mxu0 0
  %1127 = vmatpush1.bf16.msra.mxu0 %v1060
  %1128 = vmatprep.subr.bf16.mxu0 0
  %1129 = vmatpush1.bf16.msra.mxu0 %v1061
  %1130 = vmatprep.subr.bf16.mxu0 0
  %1131 = vmatpush1.bf16.msra.mxu0 %v1062
  %1132 = vmatprep.subr.bf16.mxu0 0
  %1133 = vmatpush1.bf16.msra.mxu0 %v1063
  %1134 = vmatprep.subr.bf16.mxu0 0
  %1135 = vmatpush1.bf16.msra.mxu0 %v1064
  %1136 = vmatprep.subr.bf16.mxu0 0
  %1137 = vmatpush1.bf16.msra.mxu0 %v1065
  %1138 = vmatprep.subr.bf16.mxu0 0
  %1139 = vmatpush1.bf16.msra.mxu0 %v1066
  %1140 = vmatprep.subr.bf16.mxu0 0
  %1141 = vmatpush1.bf16.msra.mxu0 %v1067
  %1142 = vmatprep.subr.bf16.mxu0 0
  %1143 = vmatpush1.bf16.msra.mxu0 %v1068
  %1144 = vmatprep.subr.bf16.mxu0 0
  %1145 = vmatpush1.bf16.msra.mxu0 %v1069
  %1146 = vmatprep.subr.bf16.mxu0 0
  %1147 = vmatpush1.bf16.msra.mxu0 %v1070
  %1148 = vmatprep.subr.bf16.mxu0 0
  %1149 = vmatpush1.bf16.msra.mxu0 %v1071
  %1150 = vmatprep.subr.bf16.mxu0 0
  %1151 = vmatpush1.bf16.msra.mxu0 %v1072
  %1152 = vmatprep.subr.bf16.mxu0 0
  %1153 = vmatpush1.bf16.msra.mxu0 %v1073
  %1154 = vmatprep.mubr.bf16.mxu0 %v675
  %1155 = vmatmul.mubr.bf16.gmra.mrb[0].mxu0 %v674
  %v1156 = vpop.f32.mrb[0].mxu0
  %v1157 = vadd.f32 0.0, %v1156
  %v1158 = vpop.f32.mrb[0].mxu0
  %v1159 = vpop.f32.mrb[0].mxu0
  %v1160 = vadd.f32 0.0, %v1159
  %v1161 = vpop.f32.mrb[0].mxu0
  %1162 = vmatprep.mubr.bf16.mxu0 %v679
  %1163 = vmatmul.mubr.bf16.gmra.mrb[0].mxu0 %v678
  %v1164 = vpop.f32.mrb[0].mxu0
  %v1165 = vadd.f32 0.0, %v1164
  %v1166 = vpop.f32.mrb[0].mxu0
  %v1167 = vpop.f32.mrb[0].mxu0
  %v1168 = vadd.f32 0.0, %v1167
  %v1169 = vpop.f32.mrb[0].mxu0
  %1170 = vmatprep.mubr.bf16.mxu0 %v683
  %1171 = vmatmul.mubr.bf16.gmra.mrb[0].mxu0 %v682
  %v1172 = vpop.f32.mrb[0].mxu0
  %v1173 = vadd.f32 0.0, %v1172
  %v1174 = vpop.f32.mrb[0].mxu0
  %v1175 = vpop.f32.mrb[0].mxu0
  %v1176 = vadd.f32 0.0, %v1175
  %v1177 = vpop.f32.mrb[0].mxu0
  %1178 = vmatprep.mubr.bf16.mxu0 %v687
  %1179 = vmatmul.mubr.bf16.gmra.mrb[0].mxu0 %v686
  %v1180 = vpop.f32.mrb[0].mxu0
  %v1181 = vadd.f32 0.0, %v1180
  %v1182 = vpop.f32.mrb[0].mxu0
  %v1183 = vpop.f32.mrb[0].mxu0
  %v1184 = vadd.f32 0.0, %v1183
  %v1185 = vpop.f32.mrb[0].mxu0
  %1186 = vmatprep.mubr.bf16.mxu0 %v691
  %1187 = vmatmul.mubr.bf16.gmra.mrb[0].mxu0 %v690
  %v1188 = vpop.f32.mrb[0].mxu0
  %v1189 = vadd.f32 0.0, %v1188
  %v1190 = vpop.f32.mrb[0].mxu0
  %v1191 = vpop.f32.mrb[0].mxu0
  %v1192 = vadd.f32 0.0, %v1191
  %v1193 = vpop.f32.mrb[0].mxu0
  %1194 = vmatprep.mubr.bf16.mxu0 %v695
  %1195 = vmatmul.mubr.bf16.gmra.mrb[0].mxu0 %v694
  %v1196 = vpop.f32.mrb[0].mxu0
  %v1197 = vadd.f32 0.0, %v1196
  %v1198 = vpop.f32.mrb[0].mxu0
  %v1199 = vpop.f32.mrb[0].mxu0
  %v1200 = vadd.f32 0.0, %v1199
  %v1201 = vpop.f32.mrb[0].mxu0
  %1202 = vmatprep.mubr.bf16.mxu0 %v699
  %1203 = vmatmul.mubr.bf16.gmra.mrb[0].mxu0 %v698
  %v1204 = vpop.f32.mrb[0].mxu0
  %v1205 = vadd.f32 0.0, %v1204
  %v1206 = vpop.f32.mrb[0].mxu0
  %v1207 = vpop.f32.mrb[0].mxu0
  %v1208 = vadd.f32 0.0, %v1207
  %v1209 = vpop.f32.mrb[0].mxu0
  %1210 = vmatprep.mubr.bf16.mxu0 %v703
  %1211 = vmatmul.mubr.bf16.gmra.mrb[0].mxu0 %v702
  %v1212 = vpop.f32.mrb[0].mxu0
  %v1213 = vadd.f32 0.0, %v1212
  %v1214 = vpop.f32.mrb[0].mxu0
  %v1215 = vpop.f32.mrb[0].mxu0
  %v1216 = vadd.f32 0.0, %v1215
  %v1217 = vpop.f32.mrb[0].mxu0
  %1218 = vmatprep.mubr.bf16.mxu0 %v707
  %1219 = vmatmul.mubr.bf16.gmra.mrb[0].mxu0 %v706
  %v1220 = vpop.f32.mrb[0].mxu0
  %v1221 = vadd.f32 0.0, %v1220
  %v1222 = vpop.f32.mrb[0].mxu0
  %v1223 = vpop.f32.mrb[0].mxu0
  %v1224 = vadd.f32 0.0, %v1223
  %v1225 = vpop.f32.mrb[0].mxu0
  %1226 = vmatprep.mubr.bf16.mxu0 %v711
  %1227 = vmatmul.mubr.bf16.gmra.mrb[0].mxu0 %v710
  %v1228 = vpop.f32.mrb[0].mxu0
  %v1229 = vadd.f32 0.0, %v1228
  %v1230 = vpop.f32.mrb[0].mxu0
  %v1231 = vpop.f32.mrb[0].mxu0
  %v1232 = vadd.f32 0.0, %v1231
  %v1233 = vpop.f32.mrb[0].mxu0
  %1234 = vmatprep.mubr.bf16.mxu0 %v715
  %1235 = vmatmul.mubr.bf16.gmra.mrb[0].mxu0 %v714
  %v1236 = vpop.f32.mrb[0].mxu0
  %v1237 = vadd.f32 0.0, %v1236
  %v1238 = vpop.f32.mrb[0].mxu0
  %v1239 = vpop.f32.mrb[0].mxu0
  %v1240 = vadd.f32 0.0, %v1239
  %v1241 = vpop.f32.mrb[0].mxu0
  %1242 = vmatprep.mubr.bf16.mxu0 %v719
  %1243 = vmatmul.mubr.bf16.gmra.mrb[0].mxu0 %v718
  %v1244 = vpop.f32.mrb[0].mxu0
  %v1245 = vadd.f32 0.0, %v1244
  %v1246 = vpop.f32.mrb[0].mxu0
  %v1247 = vpop.f32.mrb[0].mxu0
  %v1248 = vadd.f32 0.0, %v1247
  %v1249 = vpop.f32.mrb[0].mxu0
  %1250 = vmatprep.mubr.bf16.mxu0 %v723
  %1251 = vmatmul.mubr.bf16.gmra.mrb[0].mxu0 %v722
  %v1252 = vpop.f32.mrb[0].mxu0
  %v1253 = vadd.f32 0.0, %v1252
  %v1254 = vpop.f32.mrb[0].mxu0
  %v1255 = vpop.f32.mrb[0].mxu0
  %v1256 = vadd.f32 0.0, %v1255
  %v1257 = vpop.f32.mrb[0].mxu0
  %1258 = vmatprep.mubr.bf16.mxu0 %v727
  %1259 = vmatmul.mubr.bf16.gmra.mrb[0].mxu0 %v726
  %v1260 = vpop.f32.mrb[0].mxu0
  %v1261 = vadd.f32 0.0, %v1260
  %v1262 = vpop.f32.mrb[0].mxu0
  %v1263 = vpop.f32.mrb[0].mxu0
  %v1264 = vadd.f32 0.0, %v1263
  %v1265 = vpop.f32.mrb[0].mxu0
  %1266 = vmatprep.mubr.bf16.mxu0 %v731
  %1267 = vmatmul.mubr.bf16.gmra.mrb[0].mxu0 %v730
  %v1268 = vpop.f32.mrb[0].mxu0
  %v1269 = vadd.f32 0.0, %v1268
  %v1270 = vpop.f32.mrb[0].mxu0
  %v1271 = vpop.f32.mrb[0].mxu0
  %v1272 = vadd.f32 0.0, %v1271
  %v1273 = vpop.f32.mrb[0].mxu0
  %1274 = vmatprep.mubr.bf16.mxu0 %v735
  %1275 = vmatmul.mubr.bf16.gmra.mrb[0].mxu0 %v734
  %v1276 = vpop.f32.mrb[0].mxu0
  %v1277 = vadd.f32 0.0, %v1276
  %v1278 = vpop.f32.mrb[0].mxu0
  %v1279 = vpop.f32.mrb[0].mxu0
  %v1280 = vadd.f32 0.0, %v1279
  %v1281 = vpop.f32.mrb[0].mxu0
  %1282 = vmatprep.mubr.bf16.mxu0 %v739
  %1283 = vmatmul.mubr.bf16.gmra.mrb[0].mxu0 %v738
  %v1284 = vpop.f32.mrb[0].mxu0
  %v1285 = vadd.f32 0.0, %v1284
  %v1286 = vpop.f32.mrb[0].mxu0
  %v1287 = vpop.f32.mrb[0].mxu0
  %v1288 = vadd.f32 0.0, %v1287
  %v1289 = vpop.f32.mrb[0].mxu0
  %1290 = vmatprep.mubr.bf16.mxu0 %v743
  %1291 = vmatmul.mubr.bf16.gmra.mrb[0].mxu0 %v742
  %v1292 = vpop.f32.mrb[0].mxu0
  %v1293 = vadd.f32 0.0, %v1292
  %v1294 = vpop.f32.mrb[0].mxu0
  %v1295 = vpop.f32.mrb[0].mxu0
  %v1296 = vadd.f32 0.0, %v1295
  %v1297 = vpop.f32.mrb[0].mxu0
  %1298 = vmatprep.mubr.bf16.mxu0 %v747
  %1299 = vmatmul.mubr.bf16.gmra.mrb[0].mxu0 %v746
  %v1300 = vpop.f32.mrb[0].mxu0
  %v1301 = vadd.f32 0.0, %v1300
  %v1302 = vpop.f32.mrb[0].mxu0
  %v1303 = vpop.f32.mrb[0].mxu0
  %v1304 = vadd.f32 0.0, %v1303
  %v1305 = vpop.f32.mrb[0].mxu0
  %1306 = vmatprep.mubr.bf16.mxu0 %v751
  %1307 = vmatmul.mubr.bf16.gmra.mrb[0].mxu0 %v750
  %v1308 = vpop.f32.mrb[0].mxu0
  %v1309 = vadd.f32 0.0, %v1308
  %v1310 = vpop.f32.mrb[0].mxu0
  %v1311 = vpop.f32.mrb[0].mxu0
  %v1312 = vadd.f32 0.0, %v1311
  %v1313 = vpop.f32.mrb[0].mxu0
  %1314 = vmatprep.mubr.bf16.mxu0 %v755
  %1315 = vmatmul.mubr.bf16.gmra.mrb[0].mxu0 %v754
  %v1316 = vpop.f32.mrb[0].mxu0
  %v1317 = vadd.f32 0.0, %v1316
  %v1318 = vpop.f32.mrb[0].mxu0
  %v1319 = vpop.f32.mrb[0].mxu0
  %v1320 = vadd.f32 0.0, %v1319
  %v1321 = vpop.f32.mrb[0].mxu0
  %1322 = vmatprep.mubr.bf16.mxu0 %v759
  %1323 = vmatmul.mubr.bf16.gmra.mrb[0].mxu0 %v758
  %v1324 = vpop.f32.mrb[0].mxu0
  %v1325 = vadd.f32 0.0, %v1324
  %v1326 = vpop.f32.mrb[0].mxu0
  %v1327 = vpop.f32.mrb[0].mxu0
  %v1328 = vadd.f32 0.0, %v1327
  %v1329 = vpop.f32.mrb[0].mxu0
  %1330 = vmatprep.mubr.bf16.mxu0 %v763
  %1331 = vmatmul.mubr.bf16.gmra.mrb[0].mxu0 %v762
  %v1332 = vpop.f32.mrb[0].mxu0
  %v1333 = vadd.f32 0.0, %v1332
  %v1334 = vpop.f32.mrb[0].mxu0
  %v1335 = vpop.f32.mrb[0].mxu0
  %v1336 = vadd.f32 0.0, %v1335
  %v1337 = vpop.f32.mrb[0].mxu0
  %1338 = vmatprep.mubr.bf16.mxu0 %v767
  %1339 = vmatmul.mubr.bf16.gmra.mrb[0].mxu0 %v766
  %v1340 = vpop.f32.mrb[0].mxu0
  %v1341 = vadd.f32 0.0, %v1340
  %v1342 = vpop.f32.mrb[0].mxu0
  %v1343 = vpop.f32.mrb[0].mxu0
  %v1344 = vadd.f32 0.0, %v1343
  %v1345 = vpop.f32.mrb[0].mxu0
  %1346 = vmatprep.mubr.bf16.mxu0 %v771
  %1347 = vmatmul.mubr.bf16.gmra.mrb[0].mxu0 %v770
  %v1348 = vpop.f32.mrb[0].mxu0
  %v1349 = vadd.f32 0.0, %v1348
  %v1350 = vpop.f32.mrb[0].mxu0
  %v1351 = vpop.f32.mrb[0].mxu0
  %v1352 = vadd.f32 0.0, %v1351
  %v1353 = vpop.f32.mrb[0].mxu0
  %1354 = vmatprep.mubr.bf16.mxu0 %v775
  %1355 = vmatmul.mubr.bf16.gmra.mrb[0].mxu0 %v774
  %v1356 = vpop.f32.mrb[0].mxu0
  %v1357 = vadd.f32 0.0, %v1356
  %v1358 = vpop.f32.mrb[0].mxu0
  %v1359 = vpop.f32.mrb[0].mxu0
  %v1360 = vadd.f32 0.0, %v1359
  %v1361 = vpop.f32.mrb[0].mxu0
  %1362 = vmatprep.mubr.bf16.mxu0 %v779
  %1363 = vmatmul.mubr.bf16.gmra.mrb[0].mxu0 %v778
  %v1364 = vpop.f32.mrb[0].mxu0
  %v1365 = vadd.f32 0.0, %v1364
  %v1366 = vpop.f32.mrb[0].mxu0
  %v1367 = vpop.f32.mrb[0].mxu0
  %v1368 = vadd.f32 0.0, %v1367
  %v1369 = vpop.f32.mrb[0].mxu0
  %1370 = vmatprep.mubr.bf16.mxu0 %v783
  %1371 = vmatmul.mubr.bf16.gmra.mrb[0].mxu0 %v782
  %v1372 = vpop.f32.mrb[0].mxu0
  %v1373 = vadd.f32 0.0, %v1372
  %v1374 = vpop.f32.mrb[0].mxu0
  %v1375 = vpop.f32.mrb[0].mxu0
  %v1376 = vadd.f32 0.0, %v1375
  %v1377 = vpop.f32.mrb[0].mxu0
  %1378 = vmatprep.mubr.bf16.mxu0 %v787
  %1379 = vmatmul.mubr.bf16.gmra.mrb[0].mxu0 %v786
  %v1380 = vpop.f32.mrb[0].mxu0
  %v1381 = vadd.f32 0.0, %v1380
  %v1382 = vpop.f32.mrb[0].mxu0
  %v1383 = vpop.f32.mrb[0].mxu0
  %v1384 = vadd.f32 0.0, %v1383
  %v1385 = vpop.f32.mrb[0].mxu0
  %1386 = vmatprep.mubr.bf16.mxu0 %v791
  %1387 = vmatmul.mubr.bf16.gmra.mrb[0].mxu0 %v790
  %v1388 = vpop.f32.mrb[0].mxu0
  %v1389 = vadd.f32 0.0, %v1388
  %v1390 = vpop.f32.mrb[0].mxu0
  %v1391 = vpop.f32.mrb[0].mxu0
  %v1392 = vadd.f32 0.0, %v1391
  %v1393 = vpop.f32.mrb[0].mxu0
  %1394 = vmatprep.mubr.bf16.mxu0 %v795
  %1395 = vmatmul.mubr.bf16.gmra.mrb[0].mxu0 %v794
  %v1396 = vpop.f32.mrb[0].mxu0
  %v1397 = vadd.f32 0.0, %v1396
  %v1398 = vpop.f32.mrb[0].mxu0
  %v1399 = vpop.f32.mrb[0].mxu0
  %v1400 = vadd.f32 0.0, %v1399
  %v1401 = vpop.f32.mrb[0].mxu0
  %1402 = vmatprep.mubr.bf16.mxu0 %v799
  %1403 = vmatmul.mubr.bf16.gmra.mrb[0].mxu0 %v798
  %v1404 = vpop.f32.mrb[0].mxu0
  %v1405 = vadd.f32 0.0, %v1404
  %v1406 = vpop.f32.mrb[0].mxu0
  %v1407 = vpop.f32.mrb[0].mxu0
  %v1408 = vadd.f32 0.0, %v1407
  %v1409 = vpop.f32.mrb[0].mxu0
  %1410 = vdwg.mxu0
  %1411 = vmatprep.subr.bf16.mxu0 0
  %1412 = vmatpush1.bf16.msra.mxu0 %v1074
  %1413 = vmatprep.subr.bf16.mxu0 0
  %1414 = vmatpush1.bf16.msra.mxu0 %v1075
  %1415 = vmatprep.subr.bf16.mxu0 0
  %1416 = vmatpush1.bf16.msra.mxu0 %v1076
  %1417 = vmatprep.subr.bf16.mxu0 0
  %1418 = vmatpush1.bf16.msra.mxu0 %v1077
  %1419 = vmatprep.subr.bf16.mxu0 0
  %1420 = vmatpush1.bf16.msra.mxu0 %v1078
  %1421 = vmatprep.subr.bf16.mxu0 0
  %1422 = vmatpush1.bf16.msra.mxu0 %v1079
  %1423 = vmatprep.subr.bf16.mxu0 0
  %1424 = vmatpush1.bf16.msra.mxu0 %v1080
  %1425 = vmatprep.subr.bf16.mxu0 0
  %1426 = vmatpush1.bf16.msra.mxu0 %v1081
  %1427 = vmatprep.subr.bf16.mxu0 0
  %1428 = vmatpush1.bf16.msra.mxu0 %v1082
  %1429 = vmatprep.subr.bf16.mxu0 0
  %1430 = vmatpush1.bf16.msra.mxu0 %v1083
  %1431 = vmatprep.subr.bf16.mxu0 0
  %1432 = vmatpush1.bf16.msra.mxu0 %v1084
  %1433 = vmatprep.subr.bf16.mxu0 0
  %1434 = vmatpush1.bf16.msra.mxu0 %v1085
  %1435 = vmatprep.subr.bf16.mxu0 0
  %1436 = vmatpush1.bf16.msra.mxu0 %v1086
  %1437 = vmatprep.subr.bf16.mxu0 0
  %1438 = vmatpush1.bf16.msra.mxu0 %v1087
  %1439 = vmatprep.subr.bf16.mxu0 0
  %1440 = vmatpush1.bf16.msra.mxu0 %v1088
  %1441 = vmatprep.subr.bf16.mxu0 0
  %1442 = vmatpush1.bf16.msra.mxu0 %v1089
  %1443 = vmatprep.mubr.bf16.mxu0 %v677
  %1444 = vmatmul.mubr.bf16.gmra.mrb[0].mxu0 %v676
  %v1445 = vpop.f32.mrb[0].mxu0
  %v1446 = vadd.f32 %v1157, %v1445
  %v1447 = vpop.f32.mrb[0].mxu0
  %v1448 = vpop.f32.mrb[0].mxu0
  %v1449 = vadd.f32 %v1160, %v1448
  %v1450 = vpop.f32.mrb[0].mxu0
  %1451 = vmatprep.mubr.bf16.mxu0 %v681
  %1452 = vmatmul.mubr.bf16.gmra.mrb[0].mxu0 %v680
  %v1453 = vpop.f32.mrb[0].mxu0
  %v1454 = vadd.f32 %v1165, %v1453
  %v1455 = vpop.f32.mrb[0].mxu0
  %v1456 = vpop.f32.mrb[0].mxu0
  %v1457 = vadd.f32 %v1168, %v1456
  %v1458 = vpop.f32.mrb[0].mxu0
  %1459 = vmatprep.mubr.bf16.mxu0 %v685
  %1460 = vmatmul.mubr.bf16.gmra.mrb[0].mxu0 %v684
  %v1461 = vpop.f32.mrb[0].mxu0
  %v1462 = vadd.f32 %v1173, %v1461
  %v1463 = vpop.f32.mrb[0].mxu0
  %v1464 = vpop.f32.mrb[0].mxu0
  %v1465 = vadd.f32 %v1176, %v1464
  %v1466 = vpop.f32.mrb[0].mxu0
  %1467 = vmatprep.mubr.bf16.mxu0 %v689
  %1468 = vmatmul.mubr.bf16.gmra.mrb[0].mxu0 %v688
  %v1469 = vpop.f32.mrb[0].mxu0
  %v1470 = vadd.f32 %v1181, %v1469
  %v1471 = vpop.f32.mrb[0].mxu0
  %v1472 = vpop.f32.mrb[0].mxu0
  %v1473 = vadd.f32 %v1184, %v1472
  %v1474 = vpop.f32.mrb[0].mxu0
  %1475 = vmatprep.mubr.bf16.mxu0 %v693
  %1476 = vmatmul.mubr.bf16.gmra.mrb[0].mxu0 %v692
  %v1477 = vpop.f32.mrb[0].mxu0
  %v1478 = vadd.f32 %v1189, %v1477
  %v1479 = vpop.f32.mrb[0].mxu0
  %v1480 = vpop.f32.mrb[0].mxu0
  %v1481 = vadd.f32 %v1192, %v1480
  %v1482 = vpop.f32.mrb[0].mxu0
  %1483 = vmatprep.mubr.bf16.mxu0 %v697
  %1484 = vmatmul.mubr.bf16.gmra.mrb[0].mxu0 %v696
  %v1485 = vpop.f32.mrb[0].mxu0
  %v1486 = vadd.f32 %v1197, %v1485
  %v1487 = vpop.f32.mrb[0].mxu0
  %v1488 = vpop.f32.mrb[0].mxu0
  %v1489 = vadd.f32 %v1200, %v1488
  %v1490 = vpop.f32.mrb[0].mxu0
  %1491 = vmatprep.mubr.bf16.mxu0 %v701
  %1492 = vmatmul.mubr.bf16.gmra.mrb[0].mxu0 %v700
  %v1493 = vpop.f32.mrb[0].mxu0
  %v1494 = vadd.f32 %v1205, %v1493
  %v1495 = vpop.f32.mrb[0].mxu0
  %v1496 = vpop.f32.mrb[0].mxu0
  %v1497 = vadd.f32 %v1208, %v1496
  %v1498 = vpop.f32.mrb[0].mxu0
  %1499 = vmatprep.mubr.bf16.mxu0 %v705
  %1500 = vmatmul.mubr.bf16.gmra.mrb[0].mxu0 %v704
  %v1501 = vpop.f32.mrb[0].mxu0
  %v1502 = vadd.f32 %v1213, %v1501
  %v1503 = vpop.f32.mrb[0].mxu0
  %v1504 = vpop.f32.mrb[0].mxu0
  %v1505 = vadd.f32 %v1216, %v1504
  %v1506 = vpop.f32.mrb[0].mxu0
  %1507 = vmatprep.mubr.bf16.mxu0 %v709
  %1508 = vmatmul.mubr.bf16.gmra.mrb[0].mxu0 %v708
  %v1509 = vpop.f32.mrb[0].mxu0
  %v1510 = vadd.f32 %v1221, %v1509
  %v1511 = vpop.f32.mrb[0].mxu0
  %v1512 = vpop.f32.mrb[0].mxu0
  %v1513 = vadd.f32 %v1224, %v1512
  %v1514 = vpop.f32.mrb[0].mxu0
  %1515 = vmatprep.mubr.bf16.mxu0 %v713
  %1516 = vmatmul.mubr.bf16.gmra.mrb[0].mxu0 %v712
  %v1517 = vpop.f32.mrb[0].mxu0
  %v1518 = vadd.f32 %v1229, %v1517
  %v1519 = vpop.f32.mrb[0].mxu0
  %v1520 = vpop.f32.mrb[0].mxu0
  %v1521 = vadd.f32 %v1232, %v1520
  %v1522 = vpop.f32.mrb[0].mxu0
  %1523 = vmatprep.mubr.bf16.mxu0 %v717
  %1524 = vmatmul.mubr.bf16.gmra.mrb[0].mxu0 %v716
  %v1525 = vpop.f32.mrb[0].mxu0
  %v1526 = vadd.f32 %v1237, %v1525
  %v1527 = vpop.f32.mrb[0].mxu0
  %v1528 = vpop.f32.mrb[0].mxu0
  %v1529 = vadd.f32 %v1240, %v1528
  %v1530 = vpop.f32.mrb[0].mxu0
  %1531 = vmatprep.mubr.bf16.mxu0 %v721
  %1532 = vmatmul.mubr.bf16.gmra.mrb[0].mxu0 %v720
  %v1533 = vpop.f32.mrb[0].mxu0
  %v1534 = vadd.f32 %v1245, %v1533
  %v1535 = vpop.f32.mrb[0].mxu0
  %v1536 = vpop.f32.mrb[0].mxu0
  %v1537 = vadd.f32 %v1248, %v1536
  %v1538 = vpop.f32.mrb[0].mxu0
  %1539 = vmatprep.mubr.bf16.mxu0 %v725
  %1540 = vmatmul.mubr.bf16.gmra.mrb[0].mxu0 %v724
  %v1541 = vpop.f32.mrb[0].mxu0
  %v1542 = vadd.f32 %v1253, %v1541
  %v1543 = vpop.f32.mrb[0].mxu0
  %v1544 = vpop.f32.mrb[0].mxu0
  %v1545 = vadd.f32 %v1256, %v1544
  %v1546 = vpop.f32.mrb[0].mxu0
  %1547 = vmatprep.mubr.bf16.mxu0 %v729
  %1548 = vmatmul.mubr.bf16.gmra.mrb[0].mxu0 %v728
  %v1549 = vpop.f32.mrb[0].mxu0
  %v1550 = vadd.f32 %v1261, %v1549
  %v1551 = vpop.f32.mrb[0].mxu0
  %v1552 = vpop.f32.mrb[0].mxu0
  %v1553 = vadd.f32 %v1264, %v1552
  %v1554 = vpop.f32.mrb[0].mxu0
  %1555 = vmatprep.mubr.bf16.mxu0 %v733
  %1556 = vmatmul.mubr.bf16.gmra.mrb[0].mxu0 %v732
  %v1557 = vpop.f32.mrb[0].mxu0
  %v1558 = vadd.f32 %v1269, %v1557
  %v1559 = vpop.f32.mrb[0].mxu0
  %v1560 = vpop.f32.mrb[0].mxu0
  %v1561 = vadd.f32 %v1272, %v1560
  %v1562 = vpop.f32.mrb[0].mxu0
  %1563 = vmatprep.mubr.bf16.mxu0 %v737
  %1564 = vmatmul.mubr.bf16.gmra.mrb[0].mxu0 %v736
  %v1565 = vpop.f32.mrb[0].mxu0
  %v1566 = vadd.f32 %v1277, %v1565
  %v1567 = vpop.f32.mrb[0].mxu0
  %v1568 = vpop.f32.mrb[0].mxu0
  %v1569 = vadd.f32 %v1280, %v1568
  %v1570 = vpop.f32.mrb[0].mxu0
  %1571 = vmatprep.mubr.bf16.mxu0 %v741
  %1572 = vmatmul.mubr.bf16.gmra.mrb[0].mxu0 %v740
  %v1573 = vpop.f32.mrb[0].mxu0
  %v1574 = vadd.f32 %v1285, %v1573
  %v1575 = vpop.f32.mrb[0].mxu0
  %v1576 = vpop.f32.mrb[0].mxu0
  %v1577 = vadd.f32 %v1288, %v1576
  %v1578 = vpop.f32.mrb[0].mxu0
  %1579 = vmatprep.mubr.bf16.mxu0 %v745
  %1580 = vmatmul.mubr.bf16.gmra.mrb[0].mxu0 %v744
  %v1581 = vpop.f32.mrb[0].mxu0
  %v1582 = vadd.f32 %v1293, %v1581
  %v1583 = vpop.f32.mrb[0].mxu0
  %v1584 = vpop.f32.mrb[0].mxu0
  %v1585 = vadd.f32 %v1296, %v1584
  %v1586 = vpop.f32.mrb[0].mxu0
  %1587 = vmatprep.mubr.bf16.mxu0 %v749
  %1588 = vmatmul.mubr.bf16.gmra.mrb[0].mxu0 %v748
  %v1589 = vpop.f32.mrb[0].mxu0
  %v1590 = vadd.f32 %v1301, %v1589
  %v1591 = vpop.f32.mrb[0].mxu0
  %v1592 = vpop.f32.mrb[0].mxu0
  %v1593 = vadd.f32 %v1304, %v1592
  %v1594 = vpop.f32.mrb[0].mxu0
  %1595 = vmatprep.mubr.bf16.mxu0 %v753
  %1596 = vmatmul.mubr.bf16.gmra.mrb[0].mxu0 %v752
  %v1597 = vpop.f32.mrb[0].mxu0
  %v1598 = vadd.f32 %v1309, %v1597
  %v1599 = vpop.f32.mrb[0].mxu0
  %v1600 = vpop.f32.mrb[0].mxu0
  %v1601 = vadd.f32 %v1312, %v1600
  %v1602 = vpop.f32.mrb[0].mxu0
  %1603 = vmatprep.mubr.bf16.mxu0 %v757
  %1604 = vmatmul.mubr.bf16.gmra.mrb[0].mxu0 %v756
  %v1605 = vpop.f32.mrb[0].mxu0
  %v1606 = vadd.f32 %v1317, %v1605
  %v1607 = vpop.f32.mrb[0].mxu0
  %v1608 = vpop.f32.mrb[0].mxu0
  %v1609 = vadd.f32 %v1320, %v1608
  %v1610 = vpop.f32.mrb[0].mxu0
  %1611 = vmatprep.mubr.bf16.mxu0 %v761
  %1612 = vmatmul.mubr.bf16.gmra.mrb[0].mxu0 %v760
  %v1613 = vpop.f32.mrb[0].mxu0
  %v1614 = vadd.f32 %v1325, %v1613
  %v1615 = vpop.f32.mrb[0].mxu0
  %v1616 = vpop.f32.mrb[0].mxu0
  %v1617 = vadd.f32 %v1328, %v1616
  %v1618 = vpop.f32.mrb[0].mxu0
  %1619 = vmatprep.mubr.bf16.mxu0 %v765
  %1620 = vmatmul.mubr.bf16.gmra.mrb[0].mxu0 %v764
  %v1621 = vpop.f32.mrb[0].mxu0
  %v1622 = vadd.f32 %v1333, %v1621
  %v1623 = vpop.f32.mrb[0].mxu0
  %v1624 = vpop.f32.mrb[0].mxu0
  %v1625 = vadd.f32 %v1336, %v1624
  %v1626 = vpop.f32.mrb[0].mxu0
  %1627 = vmatprep.mubr.bf16.mxu0 %v769
  %1628 = vmatmul.mubr.bf16.gmra.mrb[0].mxu0 %v768
  %v1629 = vpop.f32.mrb[0].mxu0
  %v1630 = vadd.f32 %v1341, %v1629
  %v1631 = vpop.f32.mrb[0].mxu0
  %v1632 = vpop.f32.mrb[0].mxu0
  %v1633 = vadd.f32 %v1344, %v1632
  %v1634 = vpop.f32.mrb[0].mxu0
  %1635 = vmatprep.mubr.bf16.mxu0 %v773
  %1636 = vmatmul.mubr.bf16.gmra.mrb[0].mxu0 %v772
  %v1637 = vpop.f32.mrb[0].mxu0
  %v1638 = vadd.f32 %v1349, %v1637
  %v1639 = vpop.f32.mrb[0].mxu0
  %v1640 = vpop.f32.mrb[0].mxu0
  %v1641 = vadd.f32 %v1352, %v1640
  %v1642 = vpop.f32.mrb[0].mxu0
  %1643 = vmatprep.mubr.bf16.mxu0 %v777
  %1644 = vmatmul.mubr.bf16.gmra.mrb[0].mxu0 %v776
  %v1645 = vpop.f32.mrb[0].mxu0
  %v1646 = vadd.f32 %v1357, %v1645
  %v1647 = vpop.f32.mrb[0].mxu0
  %v1648 = vpop.f32.mrb[0].mxu0
  %v1649 = vadd.f32 %v1360, %v1648
  %v1650 = vpop.f32.mrb[0].mxu0
  %1651 = vmatprep.mubr.bf16.mxu0 %v781
  %1652 = vmatmul.mubr.bf16.gmra.mrb[0].mxu0 %v780
  %v1653 = vpop.f32.mrb[0].mxu0
  %v1654 = vadd.f32 %v1365, %v1653
  %v1655 = vpop.f32.mrb[0].mxu0
  %v1656 = vpop.f32.mrb[0].mxu0
  %v1657 = vadd.f32 %v1368, %v1656
  %v1658 = vpop.f32.mrb[0].mxu0
  %1659 = vmatprep.mubr.bf16.mxu0 %v785
  %1660 = vmatmul.mubr.bf16.gmra.mrb[0].mxu0 %v784
  %v1661 = vpop.f32.mrb[0].mxu0
  %v1662 = vadd.f32 %v1373, %v1661
  %v1663 = vpop.f32.mrb[0].mxu0
  %v1664 = vpop.f32.mrb[0].mxu0
  %v1665 = vadd.f32 %v1376, %v1664
  %v1666 = vpop.f32.mrb[0].mxu0
  %1667 = vmatprep.mubr.bf16.mxu0 %v789
  %1668 = vmatmul.mubr.bf16.gmra.mrb[0].mxu0 %v788
  %v1669 = vpop.f32.mrb[0].mxu0
  %v1670 = vadd.f32 %v1381, %v1669
  %v1671 = vpop.f32.mrb[0].mxu0
  %v1672 = vpop.f32.mrb[0].mxu0
  %v1673 = vadd.f32 %v1384, %v1672
  %v1674 = vpop.f32.mrb[0].mxu0
  %1675 = vmatprep.mubr.bf16.mxu0 %v793
  %1676 = vmatmul.mubr.bf16.gmra.mrb[0].mxu0 %v792
  %v1677 = vpop.f32.mrb[0].mxu0
  %v1678 = vadd.f32 %v1389, %v1677
  %v1679 = vpop.f32.mrb[0].mxu0
  %v1680 = vpop.f32.mrb[0].mxu0
  %v1681 = vadd.f32 %v1392, %v1680
  %v1682 = vpop.f32.mrb[0].mxu0
  %1683 = vmatprep.mubr.bf16.mxu0 %v797
  %1684 = vmatmul.mubr.bf16.gmra.mrb[0].mxu0 %v796
  %v1685 = vpop.f32.mrb[0].mxu0
  %v1686 = vadd.f32 %v1397, %v1685
  %v1687 = vpop.f32.mrb[0].mxu0
  %v1688 = vpop.f32.mrb[0].mxu0
  %v1689 = vadd.f32 %v1400, %v1688
  %v1690 = vpop.f32.mrb[0].mxu0
  %1691 = vmatprep.mubr.bf16.mxu0 %v801
  %1692 = vmatmul.mubr.bf16.gmra.mrb[0].mxu0 %v800
  %v1693 = vpop.f32.mrb[0].mxu0
  %v1694 = vadd.f32 %v1405, %v1693
  %v1695 = vpop.f32.mrb[0].mxu0
  %v1696 = vpop.f32.mrb[0].mxu0
  %v1697 = vadd.f32 %v1408, %v1696
  %v1698 = vpop.f32.mrb[0].mxu0
  %1699 = vdwg.mxu0
  %v1700 = vld [vmem:[%s3] sm:$0xf]
  %v1701 = vld [vmem:[%s3 + $0x4] sm:$0xf]
  %v1702 = vld [vmem:[%s3 + $0x8] sm:$0xf]
  %v1703 = vld [vmem:[%s3 + $0xc] sm:$0xf]
  %v1704 = vld [vmem:[%s3 + $0x10] sm:$0xf]
  %v1705 = vld [vmem:[%s3 + $0x14] sm:$0xf]
  %v1706 = vld [vmem:[%s3 + $0x18] sm:$0xf]
  %v1707 = vld [vmem:[%s3 + $0x1c] sm:$0xf]
  %v1708 = vld [vmem:[%s3 + $0x20] sm:$0xf]
  %v1709 = vld [vmem:[%s3 + $0x24] sm:$0xf]
  %v1710 = vld [vmem:[%s3 + $0x28] sm:$0xf]
  %v1711 = vld [vmem:[%s3 + $0x2c] sm:$0xf]
  %v1712 = vld [vmem:[%s3 + $0x30] sm:$0xf]
  %v1713 = vld [vmem:[%s3 + $0x34] sm:$0xf]
  %v1714 = vld [vmem:[%s3 + $0x38] sm:$0xf]
  %v1715 = vld [vmem:[%s3 + $0x3c] sm:$0xf]
  %v1716 = vld [vmem:[%s3 + $0x40] sm:$0xf]
  %v1717 = vld [vmem:[%s3 + $0x44] sm:$0xf]
  %v1718 = vld [vmem:[%s3 + $0x48] sm:$0xf]
  %v1719 = vld [vmem:[%s3 + $0x4c] sm:$0xf]
  %v1720 = vld [vmem:[%s3 + $0x50] sm:$0xf]
  %v1721 = vld [vmem:[%s3 + $0x54] sm:$0xf]
  %v1722 = vld [vmem:[%s3 + $0x58] sm:$0xf]
  %v1723 = vld [vmem:[%s3 + $0x5c] sm:$0xf]
  %v1724 = vld [vmem:[%s3 + $0x60] sm:$0xf]
  %v1725 = vld [vmem:[%s3 + $0x64] sm:$0xf]
  %v1726 = vld [vmem:[%s3 + $0x68] sm:$0xf]
  %v1727 = vld [vmem:[%s3 + $0x6c] sm:$0xf]
  %v1728 = vld [vmem:[%s3 + $0x70] sm:$0xf]
  %v1729 = vld [vmem:[%s3 + $0x74] sm:$0xf]
  %v1730 = vld [vmem:[%s3 + $0x78] sm:$0xf]
  %v1731 = vld [vmem:[%s3 + $0x7c] sm:$0xf]
  %v1732 = vld [vmem:[%s3 + $0x80] sm:$0xf]
  %v1733 = vld [vmem:[%s3 + $0x84] sm:$0xf]
  %v1734 = vld [vmem:[%s3 + $0x88] sm:$0xf]
  %v1735 = vld [vmem:[%s3 + $0x8c] sm:$0xf]
  %v1736 = vld [vmem:[%s3 + $0x90] sm:$0xf]
  %v1737 = vld [vmem:[%s3 + $0x94] sm:$0xf]
  %v1738 = vld [vmem:[%s3 + $0x98] sm:$0xf]
  %v1739 = vld [vmem:[%s3 + $0x9c] sm:$0xf]
  %v1740 = vld [vmem:[%s3 + $0xa0] sm:$0xf]
  %v1741 = vld [vmem:[%s3 + $0xa4] sm:$0xf]
  %v1742 = vld [vmem:[%s3 + $0xa8] sm:$0xf]
  %v1743 = vld [vmem:[%s3 + $0xac] sm:$0xf]
  %v1744 = vld [vmem:[%s3 + $0xb0] sm:$0xf]
  %v1745 = vld [vmem:[%s3 + $0xb4] sm:$0xf]
  %v1746 = vld [vmem:[%s3 + $0xb8] sm:$0xf]
  %v1747 = vld [vmem:[%s3 + $0xbc] sm:$0xf]
  %v1748 = vld [vmem:[%s3 + $0xc0] sm:$0xf]
  %v1749 = vld [vmem:[%s3 + $0xc4] sm:$0xf]
  %v1750 = vld [vmem:[%s3 + $0xc8] sm:$0xf]
  %v1751 = vld [vmem:[%s3 + $0xcc] sm:$0xf]
  %v1752 = vld [vmem:[%s3 + $0xd0] sm:$0xf]
  %v1753 = vld [vmem:[%s3 + $0xd4] sm:$0xf]
  %v1754 = vld [vmem:[%s3 + $0xd8] sm:$0xf]
  %v1755 = vld [vmem:[%s3 + $0xdc] sm:$0xf]
  %v1756 = vld [vmem:[%s3 + $0xe0] sm:$0xf]
  %v1757 = vld [vmem:[%s3 + $0xe4] sm:$0xf]
  %v1758 = vld [vmem:[%s3 + $0xe8] sm:$0xf]
  %v1759 = vld [vmem:[%s3 + $0xec] sm:$0xf]
  %v1760 = vld [vmem:[%s3 + $0xf0] sm:$0xf]
  %v1761 = vld [vmem:[%s3 + $0xf4] sm:$0xf]
  %v1762 = vld [vmem:[%s3 + $0xf8] sm:$0xf]
  %v1763 = vld [vmem:[%s3 + $0xfc] sm:$0xf]
  %v1764 = vunpack.c.l.bf16 %v1700
  %v1765 = vunpack.c.l.bf16 %v1701
  %v1766 = vunpack.c.l.bf16 %v1702
  %v1767 = vunpack.c.l.bf16 %v1703
  %v1768 = vunpack.c.l.bf16 %v1704
  %v1769 = vunpack.c.l.bf16 %v1705
  %v1770 = vunpack.c.l.bf16 %v1706
  %v1771 = vunpack.c.l.bf16 %v1707
  %v1772 = vunpack.c.l.bf16 %v1708
  %v1773 = vunpack.c.l.bf16 %v1709
  %v1774 = vunpack.c.l.bf16 %v1710
  %v1775 = vunpack.c.l.bf16 %v1711
  %v1776 = vunpack.c.l.bf16 %v1712
  %v1777 = vunpack.c.l.bf16 %v1713
  %v1778 = vunpack.c.l.bf16 %v1714
  %v1779 = vunpack.c.l.bf16 %v1715
  %v1780 = vunpack.c.l.bf16 %v1716
  %v1781 = vunpack.c.l.bf16 %v1717
  %v1782 = vunpack.c.l.bf16 %v1718
  %v1783 = vunpack.c.l.bf16 %v1719
  %v1784 = vunpack.c.l.bf16 %v1720
  %v1785 = vunpack.c.l.bf16 %v1721
  %v1786 = vunpack.c.l.bf16 %v1722
  %v1787 = vunpack.c.l.bf16 %v1723
  %v1788 = vunpack.c.l.bf16 %v1724
  %v1789 = vunpack.c.l.bf16 %v1725
  %v1790 = vunpack.c.l.bf16 %v1726
  %v1791 = vunpack.c.l.bf16 %v1727
  %v1792 = vunpack.c.l.bf16 %v1728
  %v1793 = vunpack.c.l.bf16 %v1729
  %v1794 = vunpack.c.l.bf16 %v1730
  %v1795 = vunpack.c.l.bf16 %v1731
  %v1796 = vunpack.c.l.bf16 %v1732
  %v1797 = vunpack.c.l.bf16 %v1733
  %v1798 = vunpack.c.l.bf16 %v1734
  %v1799 = vunpack.c.l.bf16 %v1735
  %v1800 = vunpack.c.l.bf16 %v1736
  %v1801 = vunpack.c.l.bf16 %v1737
  %v1802 = vunpack.c.l.bf16 %v1738
  %v1803 = vunpack.c.l.bf16 %v1739
  %v1804 = vunpack.c.l.bf16 %v1740
  %v1805 = vunpack.c.l.bf16 %v1741
  %v1806 = vunpack.c.l.bf16 %v1742
  %v1807 = vunpack.c.l.bf16 %v1743
  %v1808 = vunpack.c.l.bf16 %v1744
  %v1809 = vunpack.c.l.bf16 %v1745
  %v1810 = vunpack.c.l.bf16 %v1746
  %v1811 = vunpack.c.l.bf16 %v1747
  %v1812 = vunpack.c.l.bf16 %v1748
  %v1813 = vunpack.c.l.bf16 %v1749
  %v1814 = vunpack.c.l.bf16 %v1750
  %v1815 = vunpack.c.l.bf16 %v1751
  %v1816 = vunpack.c.l.bf16 %v1752
  %v1817 = vunpack.c.l.bf16 %v1753
  %v1818 = vunpack.c.l.bf16 %v1754
  %v1819 = vunpack.c.l.bf16 %v1755
  %v1820 = vunpack.c.l.bf16 %v1756
  %v1821 = vunpack.c.l.bf16 %v1757
  %v1822 = vunpack.c.l.bf16 %v1758
  %v1823 = vunpack.c.l.bf16 %v1759
  %v1824 = vunpack.c.l.bf16 %v1760
  %v1825 = vunpack.c.l.bf16 %v1761
  %v1826 = vunpack.c.l.bf16 %v1762
  %v1827 = vunpack.c.l.bf16 %v1763
  %s1828 = sld [smem:[#allocation2]]
  %v1829 = vstv %s1828
  %v1830 = vmul.f32 %v1764, %v1829
  %v1831 = vmul.f32 %v1765, %v1829
  %v1832 = vmul.f32 %v1766, %v1829
  %v1833 = vmul.f32 %v1767, %v1829
  %v1834 = vmul.f32 %v1768, %v1829
  %v1835 = vmul.f32 %v1769, %v1829
  %v1836 = vmul.f32 %v1770, %v1829
  %v1837 = vmul.f32 %v1771, %v1829
  %v1838 = vmul.f32 %v1772, %v1829
  %v1839 = vmul.f32 %v1773, %v1829
  %v1840 = vmul.f32 %v1774, %v1829
  %v1841 = vmul.f32 %v1775, %v1829
  %v1842 = vmul.f32 %v1776, %v1829
  %v1843 = vmul.f32 %v1777, %v1829
  %v1844 = vmul.f32 %v1778, %v1829
  %v1845 = vmul.f32 %v1779, %v1829
  %v1846 = vmul.f32 %v1780, %v1829
  %v1847 = vmul.f32 %v1781, %v1829
  %v1848 = vmul.f32 %v1782, %v1829
  %v1849 = vmul.f32 %v1783, %v1829
  %v1850 = vmul.f32 %v1784, %v1829
  %v1851 = vmul.f32 %v1785, %v1829
  %v1852 = vmul.f32 %v1786, %v1829
  %v1853 = vmul.f32 %v1787, %v1829
  %v1854 = vmul.f32 %v1788, %v1829
  %v1855 = vmul.f32 %v1789, %v1829
  %v1856 = vmul.f32 %v1790, %v1829
  %v1857 = vmul.f32 %v1791, %v1829
  %v1858 = vmul.f32 %v1792, %v1829
  %v1859 = vmul.f32 %v1793, %v1829
  %v1860 = vmul.f32 %v1794, %v1829
  %v1861 = vmul.f32 %v1795, %v1829
  %v1862 = vmul.f32 %v1796, %v1829
  %v1863 = vmul.f32 %v1797, %v1829
  %v1864 = vmul.f32 %v1798, %v1829
  %v1865 = vmul.f32 %v1799, %v1829
  %v1866 = vmul.f32 %v1800, %v1829
  %v1867 = vmul.f32 %v1801, %v1829
  %v1868 = vmul.f32 %v1802, %v1829
  %v1869 = vmul.f32 %v1803, %v1829
  %v1870 = vmul.f32 %v1804, %v1829
  %v1871 = vmul.f32 %v1805, %v1829
  %v1872 = vmul.f32 %v1806, %v1829
  %v1873 = vmul.f32 %v1807, %v1829
  %v1874 = vmul.f32 %v1808, %v1829
  %v1875 = vmul.f32 %v1809, %v1829
  %v1876 = vmul.f32 %v1810, %v1829
  %v1877 = vmul.f32 %v1811, %v1829
  %v1878 = vmul.f32 %v1812, %v1829
  %v1879 = vmul.f32 %v1813, %v1829
  %v1880 = vmul.f32 %v1814, %v1829
  %v1881 = vmul.f32 %v1815, %v1829
  %v1882 = vmul.f32 %v1816, %v1829
  %v1883 = vmul.f32 %v1817, %v1829
  %v1884 = vmul.f32 %v1818, %v1829
  %v1885 = vmul.f32 %v1819, %v1829
  %v1886 = vmul.f32 %v1820, %v1829
  %v1887 = vmul.f32 %v1821, %v1829
  %v1888 = vmul.f32 %v1822, %v1829
  %v1889 = vmul.f32 %v1823, %v1829
  %v1890 = vmul.f32 %v1824, %v1829
  %v1891 = vmul.f32 %v1825, %v1829
  %v1892 = vmul.f32 %v1826, %v1829
  %v1893 = vmul.f32 %v1827, %v1829
  %v1894 = vadd.f32 %v1830, %v1446
  %v1895 = vadd.f32 %v1831, %v1449
  %v1896 = vadd.f32 %v1832, %v1454
  %v1897 = vadd.f32 %v1833, %v1457
  %v1898 = vadd.f32 %v1834, %v1462
  %v1899 = vadd.f32 %v1835, %v1465
  %v1900 = vadd.f32 %v1836, %v1470
  %v1901 = vadd.f32 %v1837, %v1473
  %v1902 = vadd.f32 %v1838, %v1478
  %v1903 = vadd.f32 %v1839, %v1481
  %v1904 = vadd.f32 %v1840, %v1486
  %v1905 = vadd.f32 %v1841, %v1489
  %v1906 = vadd.f32 %v1842, %v1494
  %v1907 = vadd.f32 %v1843, %v1497
  %v1908 = vadd.f32 %v1844, %v1502
  %v1909 = vadd.f32 %v1845, %v1505
  %v1910 = vadd.f32 %v1846, %v1510
  %v1911 = vadd.f32 %v1847, %v1513
  %v1912 = vadd.f32 %v1848, %v1518
  %v1913 = vadd.f32 %v1849, %v1521
  %v1914 = vadd.f32 %v1850, %v1526
  %v1915 = vadd.f32 %v1851, %v1529
  %v1916 = vadd.f32 %v1852, %v1534
  %v1917 = vadd.f32 %v1853, %v1537
  %v1918 = vadd.f32 %v1854, %v1542
  %v1919 = vadd.f32 %v1855, %v1545
  %v1920 = vadd.f32 %v1856, %v1550
  %v1921 = vadd.f32 %v1857, %v1553
  %v1922 = vadd.f32 %v1858, %v1558
  %v1923 = vadd.f32 %v1859, %v1561
  %v1924 = vadd.f32 %v1860, %v1566
  %v1925 = vadd.f32 %v1861, %v1569
  %v1926 = vadd.f32 %v1862, %v1574
  %v1927 = vadd.f32 %v1863, %v1577
  %v1928 = vadd.f32 %v1864, %v1582
  %v1929 = vadd.f32 %v1865, %v1585
  %v1930 = vadd.f32 %v1866, %v1590
  %v1931 = vadd.f32 %v1867, %v1593
  %v1932 = vadd.f32 %v1868, %v1598
  %v1933 = vadd.f32 %v1869, %v1601
  %v1934 = vadd.f32 %v1870, %v1606
  %v1935 = vadd.f32 %v1871, %v1609
  %v1936 = vadd.f32 %v1872, %v1614
  %v1937 = vadd.f32 %v1873, %v1617
  %v1938 = vadd.f32 %v1874, %v1622
  %v1939 = vadd.f32 %v1875, %v1625
  %v1940 = vadd.f32 %v1876, %v1630
  %v1941 = vadd.f32 %v1877, %v1633
  %v1942 = vadd.f32 %v1878, %v1638
  %v1943 = vadd.f32 %v1879, %v1641
  %v1944 = vadd.f32 %v1880, %v1646
  %v1945 = vadd.f32 %v1881, %v1649
  %v1946 = vadd.f32 %v1882, %v1654
  %v1947 = vadd.f32 %v1883, %v1657
  %v1948 = vadd.f32 %v1884, %v1662
  %v1949 = vadd.f32 %v1885, %v1665
  %v1950 = vadd.f32 %v1886, %v1670
  %v1951 = vadd.f32 %v1887, %v1673
  %v1952 = vadd.f32 %v1888, %v1678
  %v1953 = vadd.f32 %v1889, %v1681
  %v1954 = vadd.f32 %v1890, %v1686
  %v1955 = vadd.f32 %v1891, %v1689
  %v1956 = vadd.f32 %v1892, %v1694
  %v1957 = vadd.f32 %v1893, %v1697
  %v1958 = vpack.c.bf16 %v1895, %v1894
  %v1959 = vpack.c.bf16 %v1897, %v1896
  %v1960 = vpack.c.bf16 %v1899, %v1898
  %v1961 = vpack.c.bf16 %v1901, %v1900
  %v1962 = vpack.c.bf16 %v1903, %v1902
  %v1963 = vpack.c.bf16 %v1905, %v1904
  %v1964 = vpack.c.bf16 %v1907, %v1906
  %v1965 = vpack.c.bf16 %v1909, %v1908
  %v1966 = vpack.c.bf16 %v1911, %v1910
  %v1967 = vpack.c.bf16 %v1913, %v1912
  %v1968 = vpack.c.bf16 %v1915, %v1914
  %v1969 = vpack.c.bf16 %v1917, %v1916
  %v1970 = vpack.c.bf16 %v1919, %v1918
  %v1971 = vpack.c.bf16 %v1921, %v1920
  %v1972 = vpack.c.bf16 %v1923, %v1922
  %v1973 = vpack.c.bf16 %v1925, %v1924
  %v1974 = vpack.c.bf16 %v1927, %v1926
  %v1975 = vpack.c.bf16 %v1929, %v1928
  %v1976 = vpack.c.bf16 %v1931, %v1930
  %v1977 = vpack.c.bf16 %v1933, %v1932
  %v1978 = vpack.c.bf16 %v1935, %v1934
  %v1979 = vpack.c.bf16 %v1937, %v1936
  %v1980 = vpack.c.bf16 %v1939, %v1938
  %v1981 = vpack.c.bf16 %v1941, %v1940
  %v1982 = vpack.c.bf16 %v1943, %v1942
  %v1983 = vpack.c.bf16 %v1945, %v1944
  %v1984 = vpack.c.bf16 %v1947, %v1946
  %v1985 = vpack.c.bf16 %v1949, %v1948
  %v1986 = vpack.c.bf16 %v1951, %v1950
  %v1987 = vpack.c.bf16 %v1953, %v1952
  %v1988 = vpack.c.bf16 %v1955, %v1954
  %v1989 = vpack.c.bf16 %v1957, %v1956
  %v1990 = vld [vmem:[%s5] sm:$0xf]
  %v1991 = vld [vmem:[%s5 + $0x4] sm:$0xf]
  %v1992 = vld [vmem:[%s5 + $0x8] sm:$0xf]
  %v1993 = vld [vmem:[%s5 + $0xc] sm:$0xf]
  %v1994 = vld [vmem:[%s5 + $0x10] sm:$0xf]
  %v1995 = vld [vmem:[%s5 + $0x14] sm:$0xf]
  %v1996 = vld [vmem:[%s5 + $0x18] sm:$0xf]
  %v1997 = vld [vmem:[%s5 + $0x1c] sm:$0xf]
  %v1998 = vld [vmem:[%s5 + $0x20] sm:$0xf]
  %v1999 = vld [vmem:[%s5 + $0x24] sm:$0xf]
  %v2000 = vld [vmem:[%s5 + $0x28] sm:$0xf]
  %v2001 = vld [vmem:[%s5 + $0x2c] sm:$0xf]
  %v2002 = vld [vmem:[%s5 + $0x30] sm:$0xf]
  %v2003 = vld [vmem:[%s5 + $0x34] sm:$0xf]
  %v2004 = vld [vmem:[%s5 + $0x38] sm:$0xf]
  %v2005 = vld [vmem:[%s5 + $0x3c] sm:$0xf]
  %v2006 = vld [vmem:[%s6] sm:$0x1]
  %v2008 = vlaneseq
  %v2009 = vshrl.u32 %v2008, 7
  %v2010 = vsub.s32 0, %v2009
  %v2011 = vrot.slane %v2006, %v2010
  %v2029 = vunpack.c.l.b16 %v1990
  %v2030 = vunpack.c.l.b16 %v1991
  %v2031 = vunpack.c.l.b16 %v1992
  %v2032 = vunpack.c.l.b16 %v1993
  %v2033 = vunpack.c.l.b16 %v1994
  %v2034 = vunpack.c.l.b16 %v1995
  %v2035 = vunpack.c.l.b16 %v1996
  %v2036 = vunpack.c.l.b16 %v1997
  %v2037 = vunpack.c.l.b16 %v1998
  %v2038 = vunpack.c.l.b16 %v1999
  %v2039 = vunpack.c.l.b16 %v2000
  %v2040 = vunpack.c.l.b16 %v2001
  %v2041 = vunpack.c.l.b16 %v2002
  %v2042 = vunpack.c.l.b16 %v2003
  %v2043 = vunpack.c.l.b16 %v2004
  %v2044 = vunpack.c.l.b16 %v2005
  %v2045 = vpack.c.b16 %v2030, %v2029
  %v2046 = vpack.c.b16 %v2032, %v2031
  %v2047 = vpack.c.b16 %v2034, %v2033
  %v2048 = vpack.c.b16 %v2036, %v2035
  %v2049 = vpack.c.b16 %v2038, %v2037
  %v2050 = vpack.c.b16 %v2040, %v2039
  %v2051 = vpack.c.b16 %v2042, %v2041
  %v2052 = vpack.c.b16 %v2044, %v2043
  %2061 = vmatprep.subr.bf16.mxu0 0
  %2062 = vmatpush1.bf16.msra.mxu0 %v2045
  %2063 = vmatprep.subr.bf16.mxu0 0
  %2064 = vmatpush1.bf16.msra.mxu0 %v2046
  %2065 = vmatprep.subr.bf16.mxu0 0
  %2066 = vmatpush1.bf16.msra.mxu0 %v2047
  %2067 = vmatprep.subr.bf16.mxu0 0
  %2068 = vmatpush1.bf16.msra.mxu0 %v2048
  %2069 = vmatprep.subr.bf16.mxu0 0
  %2070 = vmatpush1.bf16.msra.mxu0 %v2049
  %2071 = vmatprep.subr.bf16.mxu0 0
  %2072 = vmatpush1.bf16.msra.mxu0 %v2050
  %2073 = vmatprep.subr.bf16.mxu0 0
  %2074 = vmatpush1.bf16.msra.mxu0 %v2051
  %2075 = vmatprep.subr.bf16.mxu0 0
  %2076 = vmatpush1.bf16.msra.mxu0 %v2052
  %2077 = vmatprep.subr.bf16.mxu0 0
  %2078 = vmatpush1.bf16.msra.mxu0 0
  %2079 = vmatprep.subr.bf16.mxu0 0
  %2080 = vmatpush1.bf16.msra.mxu0 0
  %2081 = vmatprep.subr.bf16.mxu0 0
  %2082 = vmatpush1.bf16.msra.mxu0 0
  %2083 = vmatprep.subr.bf16.mxu0 0
  %2084 = vmatpush1.bf16.msra.mxu0 0
  %2085 = vmatprep.subr.bf16.mxu0 0
  %2086 = vmatpush1.bf16.msra.mxu0 0
  %2087 = vmatprep.subr.bf16.mxu0 0
  %2088 = vmatpush1.bf16.msra.mxu0 0
  %2089 = vmatprep.subr.bf16.mxu0 0
  %2090 = vmatpush1.bf16.msra.mxu0 0
  %2091 = vmatprep.subr.bf16.mxu0 0
  %2092 = vmatpush1.bf16.msra.mxu0 0
  %2093 = vmatprep.mubr.bf16.mxu0 0
  %2094 = vmatmul.mubr.bf16.gmra.mrb[0].mxu0 %v1958
  %v2095 = vpop.f32.mrb[0].mxu0
  %v2096 = vadd.f32 %v2011, %v2095
  %v2097 = vpop.f32.mrb[0].mxu0
  %v2098 = vpop.f32.mrb[0].mxu0
  %v2099 = vadd.f32 %v2011, %v2098
  %v2100 = vpop.f32.mrb[0].mxu0
  %2101 = vmatprep.mubr.bf16.mxu0 0
  %2102 = vmatmul.mubr.bf16.gmra.mrb[0].mxu0 %v1959
  %v2103 = vpop.f32.mrb[0].mxu0
  %v2104 = vadd.f32 %v2011, %v2103
  %v2105 = vpop.f32.mrb[0].mxu0
  %v2106 = vpop.f32.mrb[0].mxu0
  %v2107 = vadd.f32 %v2011, %v2106
  %v2108 = vpop.f32.mrb[0].mxu0
  %2109 = vmatprep.mubr.bf16.mxu0 0
  %2110 = vmatmul.mubr.bf16.gmra.mrb[0].mxu0 %v1960
  %v2111 = vpop.f32.mrb[0].mxu0
  %v2112 = vadd.f32 %v2011, %v2111
  %v2113 = vpop.f32.mrb[0].mxu0
  %v2114 = vpop.f32.mrb[0].mxu0
  %v2115 = vadd.f32 %v2011, %v2114
  %v2116 = vpop.f32.mrb[0].mxu0
  %2117 = vmatprep.mubr.bf16.mxu0 0
  %2118 = vmatmul.mubr.bf16.gmra.mrb[0].mxu0 %v1961
  %v2119 = vpop.f32.mrb[0].mxu0
  %v2120 = vadd.f32 %v2011, %v2119
  %v2121 = vpop.f32.mrb[0].mxu0
  %v2122 = vpop.f32.mrb[0].mxu0
  %v2123 = vadd.f32 %v2011, %v2122
  %v2124 = vpop.f32.mrb[0].mxu0
  %2125 = vmatprep.mubr.bf16.mxu0 0
  %2126 = vmatmul.mubr.bf16.gmra.mrb[0].mxu0 %v1962
  %v2127 = vpop.f32.mrb[0].mxu0
  %v2128 = vadd.f32 %v2011, %v2127
  %v2129 = vpop.f32.mrb[0].mxu0
  %v2130 = vpop.f32.mrb[0].mxu0
  %v2131 = vadd.f32 %v2011, %v2130
  %v2132 = vpop.f32.mrb[0].mxu0
  %2133 = vmatprep.mubr.bf16.mxu0 0
  %2134 = vmatmul.mubr.bf16.gmra.mrb[0].mxu0 %v1963
  %v2135 = vpop.f32.mrb[0].mxu0
  %v2136 = vadd.f32 %v2011, %v2135
  %v2137 = vpop.f32.mrb[0].mxu0
  %v2138 = vpop.f32.mrb[0].mxu0
  %v2139 = vadd.f32 %v2011, %v2138
  %v2140 = vpop.f32.mrb[0].mxu0
  %2141 = vmatprep.mubr.bf16.mxu0 0
  %2142 = vmatmul.mubr.bf16.gmra.mrb[0].mxu0 %v1964
  %v2143 = vpop.f32.mrb[0].mxu0
  %v2144 = vadd.f32 %v2011, %v2143
  %v2145 = vpop.f32.mrb[0].mxu0
  %v2146 = vpop.f32.mrb[0].mxu0
  %v2147 = vadd.f32 %v2011, %v2146
  %v2148 = vpop.f32.mrb[0].mxu0
  %2149 = vmatprep.mubr.bf16.mxu0 0
  %2150 = vmatmul.mubr.bf16.gmra.mrb[0].mxu0 %v1965
  %v2151 = vpop.f32.mrb[0].mxu0
  %v2152 = vadd.f32 %v2011, %v2151
  %v2153 = vpop.f32.mrb[0].mxu0
  %v2154 = vpop.f32.mrb[0].mxu0
  %v2155 = vadd.f32 %v2011, %v2154
  %v2156 = vpop.f32.mrb[0].mxu0
  %2157 = vmatprep.mubr.bf16.mxu0 0
  %2158 = vmatmul.mubr.bf16.gmra.mrb[0].mxu0 %v1966
  %v2159 = vpop.f32.mrb[0].mxu0
  %v2160 = vadd.f32 %v2011, %v2159
  %v2161 = vpop.f32.mrb[0].mxu0
  %v2162 = vpop.f32.mrb[0].mxu0
  %v2163 = vadd.f32 %v2011, %v2162
  %v2164 = vpop.f32.mrb[0].mxu0
  %2165 = vmatprep.mubr.bf16.mxu0 0
  %2166 = vmatmul.mubr.bf16.gmra.mrb[0].mxu0 %v1967
  %v2167 = vpop.f32.mrb[0].mxu0
  %v2168 = vadd.f32 %v2011, %v2167
  %v2169 = vpop.f32.mrb[0].mxu0
  %v2170 = vpop.f32.mrb[0].mxu0
  %v2171 = vadd.f32 %v2011, %v2170
  %v2172 = vpop.f32.mrb[0].mxu0
  %2173 = vmatprep.mubr.bf16.mxu0 0
  %2174 = vmatmul.mubr.bf16.gmra.mrb[0].mxu0 %v1968
  %v2175 = vpop.f32.mrb[0].mxu0
  %v2176 = vadd.f32 %v2011, %v2175
  %v2177 = vpop.f32.mrb[0].mxu0
  %v2178 = vpop.f32.mrb[0].mxu0
  %v2179 = vadd.f32 %v2011, %v2178
  %v2180 = vpop.f32.mrb[0].mxu0
  %2181 = vmatprep.mubr.bf16.mxu0 0
  %2182 = vmatmul.mubr.bf16.gmra.mrb[0].mxu0 %v1969
  %v2183 = vpop.f32.mrb[0].mxu0
  %v2184 = vadd.f32 %v2011, %v2183
  %v2185 = vpop.f32.mrb[0].mxu0
  %v2186 = vpop.f32.mrb[0].mxu0
  %v2187 = vadd.f32 %v2011, %v2186
  %v2188 = vpop.f32.mrb[0].mxu0
  %2189 = vmatprep.mubr.bf16.mxu0 0
  %2190 = vmatmul.mubr.bf16.gmra.mrb[0].mxu0 %v1970
  %v2191 = vpop.f32.mrb[0].mxu0
  %v2192 = vadd.f32 %v2011, %v2191
  %v2193 = vpop.f32.mrb[0].mxu0
  %v2194 = vpop.f32.mrb[0].mxu0
  %v2195 = vadd.f32 %v2011, %v2194
  %v2196 = vpop.f32.mrb[0].mxu0
  %2197 = vmatprep.mubr.bf16.mxu0 0
  %2198 = vmatmul.mubr.bf16.gmra.mrb[0].mxu0 %v1971
  %v2199 = vpop.f32.mrb[0].mxu0
  %v2200 = vadd.f32 %v2011, %v2199
  %v2201 = vpop.f32.mrb[0].mxu0
  %v2202 = vpop.f32.mrb[0].mxu0
  %v2203 = vadd.f32 %v2011, %v2202
  %v2204 = vpop.f32.mrb[0].mxu0
  %2205 = vmatprep.mubr.bf16.mxu0 0
  %2206 = vmatmul.mubr.bf16.gmra.mrb[0].mxu0 %v1972
  %v2207 = vpop.f32.mrb[0].mxu0
  %v2208 = vadd.f32 %v2011, %v2207
  %v2209 = vpop.f32.mrb[0].mxu0
  %v2210 = vpop.f32.mrb[0].mxu0
  %v2211 = vadd.f32 %v2011, %v2210
  %v2212 = vpop.f32.mrb[0].mxu0
  %2213 = vmatprep.mubr.bf16.mxu0 0
  %2214 = vmatmul.mubr.bf16.gmra.mrb[0].mxu0 %v1973
  %v2215 = vpop.f32.mrb[0].mxu0
  %v2216 = vadd.f32 %v2011, %v2215
  %v2217 = vpop.f32.mrb[0].mxu0
  %v2218 = vpop.f32.mrb[0].mxu0
  %v2219 = vadd.f32 %v2011, %v2218
  %v2220 = vpop.f32.mrb[0].mxu0
  %2221 = vmatprep.mubr.bf16.mxu0 0
  %2222 = vmatmul.mubr.bf16.gmra.mrb[0].mxu0 %v1974
  %v2223 = vpop.f32.mrb[0].mxu0
  %v2224 = vadd.f32 %v2011, %v2223
  %v2225 = vpop.f32.mrb[0].mxu0
  %v2226 = vpop.f32.mrb[0].mxu0
  %v2227 = vadd.f32 %v2011, %v2226
  %v2228 = vpop.f32.mrb[0].mxu0
  %2229 = vmatprep.mubr.bf16.mxu0 0
  %2230 = vmatmul.mubr.bf16.gmra.mrb[0].mxu0 %v1975
  %v2231 = vpop.f32.mrb[0].mxu0
  %v2232 = vadd.f32 %v2011, %v2231
  %v2233 = vpop.f32.mrb[0].mxu0
  %v2234 = vpop.f32.mrb[0].mxu0
  %v2235 = vadd.f32 %v2011, %v2234
  %v2236 = vpop.f32.mrb[0].mxu0
  %2237 = vmatprep.mubr.bf16.mxu0 0
  %2238 = vmatmul.mubr.bf16.gmra.mrb[0].mxu0 %v1976
  %v2239 = vpop.f32.mrb[0].mxu0
  %v2240 = vadd.f32 %v2011, %v2239
  %v2241 = vpop.f32.mrb[0].mxu0
  %v2242 = vpop.f32.mrb[0].mxu0
  %v2243 = vadd.f32 %v2011, %v2242
  %v2244 = vpop.f32.mrb[0].mxu0
  %2245 = vmatprep.mubr.bf16.mxu0 0
  %2246 = vmatmul.mubr.bf16.gmra.mrb[0].mxu0 %v1977
  %v2247 = vpop.f32.mrb[0].mxu0
  %v2248 = vadd.f32 %v2011, %v2247
  %v2249 = vpop.f32.mrb[0].mxu0
  %v2250 = vpop.f32.mrb[0].mxu0
  %v2251 = vadd.f32 %v2011, %v2250
  %v2252 = vpop.f32.mrb[0].mxu0
  %2253 = vmatprep.mubr.bf16.mxu0 0
  %2254 = vmatmul.mubr.bf16.gmra.mrb[0].mxu0 %v1978
  %v2255 = vpop.f32.mrb[0].mxu0
  %v2256 = vadd.f32 %v2011, %v2255
  %v2257 = vpop.f32.mrb[0].mxu0
  %v2258 = vpop.f32.mrb[0].mxu0
  %v2259 = vadd.f32 %v2011, %v2258
  %v2260 = vpop.f32.mrb[0].mxu0
  %2261 = vmatprep.mubr.bf16.mxu0 0
  %2262 = vmatmul.mubr.bf16.gmra.mrb[0].mxu0 %v1979
  %v2263 = vpop.f32.mrb[0].mxu0
  %v2264 = vadd.f32 %v2011, %v2263
  %v2265 = vpop.f32.mrb[0].mxu0
  %v2266 = vpop.f32.mrb[0].mxu0
  %v2267 = vadd.f32 %v2011, %v2266
  %v2268 = vpop.f32.mrb[0].mxu0
  %2269 = vmatprep.mubr.bf16.mxu0 0
  %2270 = vmatmul.mubr.bf16.gmra.mrb[0].mxu0 %v1980
  %v2271 = vpop.f32.mrb[0].mxu0
  %v2272 = vadd.f32 %v2011, %v2271
  %v2273 = vpop.f32.mrb[0].mxu0
  %v2274 = vpop.f32.mrb[0].mxu0
  %v2275 = vadd.f32 %v2011, %v2274
  %v2276 = vpop.f32.mrb[0].mxu0
  %2277 = vmatprep.mubr.bf16.mxu0 0
  %2278 = vmatmul.mubr.bf16.gmra.mrb[0].mxu0 %v1981
  %v2279 = vpop.f32.mrb[0].mxu0
  %v2280 = vadd.f32 %v2011, %v2279
  %v2281 = vpop.f32.mrb[0].mxu0
  %v2282 = vpop.f32.mrb[0].mxu0
  %v2283 = vadd.f32 %v2011, %v2282
  %v2284 = vpop.f32.mrb[0].mxu0
  %2285 = vmatprep.mubr.bf16.mxu0 0
  %2286 = vmatmul.mubr.bf16.gmra.mrb[0].mxu0 %v1982
  %v2287 = vpop.f32.mrb[0].mxu0
  %v2288 = vadd.f32 %v2011, %v2287
  %v2289 = vpop.f32.mrb[0].mxu0
  %v2290 = vpop.f32.mrb[0].mxu0
  %v2291 = vadd.f32 %v2011, %v2290
  %v2292 = vpop.f32.mrb[0].mxu0
  %2293 = vmatprep.mubr.bf16.mxu0 0
  %2294 = vmatmul.mubr.bf16.gmra.mrb[0].mxu0 %v1983
  %v2295 = vpop.f32.mrb[0].mxu0
  %v2296 = vadd.f32 %v2011, %v2295
  %v2297 = vpop.f32.mrb[0].mxu0
  %v2298 = vpop.f32.mrb[0].mxu0
  %v2299 = vadd.f32 %v2011, %v2298
  %v2300 = vpop.f32.mrb[0].mxu0
  %2301 = vmatprep.mubr.bf16.mxu0 0
  %2302 = vmatmul.mubr.bf16.gmra.mrb[0].mxu0 %v1984
  %v2303 = vpop.f32.mrb[0].mxu0
  %v2304 = vadd.f32 %v2011, %v2303
  %v2305 = vpop.f32.mrb[0].mxu0
  %v2306 = vpop.f32.mrb[0].mxu0
  %v2307 = vadd.f32 %v2011, %v2306
  %v2308 = vpop.f32.mrb[0].mxu0
  %2309 = vmatprep.mubr.bf16.mxu0 0
  %2310 = vmatmul.mubr.bf16.gmra.mrb[0].mxu0 %v1985
  %v2311 = vpop.f32.mrb[0].mxu0
  %v2312 = vadd.f32 %v2011, %v2311
  %v2313 = vpop.f32.mrb[0].mxu0
  %v2314 = vpop.f32.mrb[0].mxu0
  %v2315 = vadd.f32 %v2011, %v2314
  %v2316 = vpop.f32.mrb[0].mxu0
  %2317 = vmatprep.mubr.bf16.mxu0 0
  %2318 = vmatmul.mubr.bf16.gmra.mrb[0].mxu0 %v1986
  %v2319 = vpop.f32.mrb[0].mxu0
  %v2320 = vadd.f32 %v2011, %v2319
  %v2321 = vpop.f32.mrb[0].mxu0
  %v2322 = vpop.f32.mrb[0].mxu0
  %v2323 = vadd.f32 %v2011, %v2322
  %v2324 = vpop.f32.mrb[0].mxu0
  %2325 = vmatprep.mubr.bf16.mxu0 0
  %2326 = vmatmul.mubr.bf16.gmra.mrb[0].mxu0 %v1987
  %v2327 = vpop.f32.mrb[0].mxu0
  %v2328 = vadd.f32 %v2011, %v2327
  %v2329 = vpop.f32.mrb[0].mxu0
  %v2330 = vpop.f32.mrb[0].mxu0
  %v2331 = vadd.f32 %v2011, %v2330
  %v2332 = vpop.f32.mrb[0].mxu0
  %2333 = vmatprep.mubr.bf16.mxu0 0
  %2334 = vmatmul.mubr.bf16.gmra.mrb[0].mxu0 %v1988
  %v2335 = vpop.f32.mrb[0].mxu0
  %v2336 = vadd.f32 %v2011, %v2335
  %v2337 = vpop.f32.mrb[0].mxu0
  %v2338 = vpop.f32.mrb[0].mxu0
  %v2339 = vadd.f32 %v2011, %v2338
  %v2340 = vpop.f32.mrb[0].mxu0
  %2341 = vmatprep.mubr.bf16.mxu0 0
  %2342 = vmatmul.mubr.bf16.gmra.mrb[0].mxu0 %v1989
  %v2343 = vpop.f32.mrb[0].mxu0
  %v2344 = vadd.f32 %v2011, %v2343
  %v2345 = vpop.f32.mrb[0].mxu0
  %v2346 = vpop.f32.mrb[0].mxu0
  %v2347 = vadd.f32 %v2011, %v2346
  %v2348 = vpop.f32.mrb[0].mxu0
  %2349 = vdwg.mxu0
  %v2350 = vmax.f32 %v2096, 0.0
  %v2351 = vmax.f32 %v2099, 0.0
  %v2352 = vmax.f32 %v2104, 0.0
  %v2353 = vmax.f32 %v2107, 0.0
  %v2354 = vmax.f32 %v2112, 0.0
  %v2355 = vmax.f32 %v2115, 0.0
  %v2356 = vmax.f32 %v2120, 0.0
  %v2357 = vmax.f32 %v2123, 0.0
  %v2358 = vmax.f32 %v2128, 0.0
  %v2359 = vmax.f32 %v2131, 0.0
  %v2360 = vmax.f32 %v2136, 0.0
  %v2361 = vmax.f32 %v2139, 0.0
  %v2362 = vmax.f32 %v2144, 0.0
  %v2363 = vmax.f32 %v2147, 0.0
  %v2364 = vmax.f32 %v2152, 0.0
  %v2365 = vmax.f32 %v2155, 0.0
  %v2366 = vmax.f32 %v2160, 0.0
  %v2367 = vmax.f32 %v2163, 0.0
  %v2368 = vmax.f32 %v2168, 0.0
  %v2369 = vmax.f32 %v2171, 0.0
  %v2370 = vmax.f32 %v2176, 0.0
  %v2371 = vmax.f32 %v2179, 0.0
  %v2372 = vmax.f32 %v2184, 0.0
  %v2373 = vmax.f32 %v2187, 0.0
  %v2374 = vmax.f32 %v2192, 0.0
  %v2375 = vmax.f32 %v2195, 0.0
  %v2376 = vmax.f32 %v2200, 0.0
  %v2377 = vmax.f32 %v2203, 0.0
  %v2378 = vmax.f32 %v2208, 0.0
  %v2379 = vmax.f32 %v2211, 0.0
  %v2380 = vmax.f32 %v2216, 0.0
  %v2381 = vmax.f32 %v2219, 0.0
  %v2382 = vmax.f32 %v2224, 0.0
  %v2383 = vmax.f32 %v2227, 0.0
  %v2384 = vmax.f32 %v2232, 0.0
  %v2385 = vmax.f32 %v2235, 0.0
  %v2386 = vmax.f32 %v2240, 0.0
  %v2387 = vmax.f32 %v2243, 0.0
  %v2388 = vmax.f32 %v2248, 0.0
  %v2389 = vmax.f32 %v2251, 0.0
  %v2390 = vmax.f32 %v2256, 0.0
  %v2391 = vmax.f32 %v2259, 0.0
  %v2392 = vmax.f32 %v2264, 0.0
  %v2393 = vmax.f32 %v2267, 0.0
  %v2394 = vmax.f32 %v2272, 0.0
  %v2395 = vmax.f32 %v2275, 0.0
  %v2396 = vmax.f32 %v2280, 0.0
  %v2397 = vmax.f32 %v2283, 0.0
  %v2398 = vmax.f32 %v2288, 0.0
  %v2399 = vmax.f32 %v2291, 0.0
  %v2400 = vmax.f32 %v2296, 0.0
  %v2401 = vmax.f32 %v2299, 0.0
  %v2402 = vmax.f32 %v2304, 0.0
  %v2403 = vmax.f32 %v2307, 0.0
  %v2404 = vmax.f32 %v2312, 0.0
  %v2405 = vmax.f32 %v2315, 0.0
  %v2406 = vmax.f32 %v2320, 0.0
  %v2407 = vmax.f32 %v2323, 0.0
  %v2408 = vmax.f32 %v2328, 0.0
  %v2409 = vmax.f32 %v2331, 0.0
  %v2410 = vmax.f32 %v2336, 0.0
  %v2411 = vmax.f32 %v2339, 0.0
  %v2412 = vmax.f32 %v2344, 0.0
  %v2413 = vmax.f32 %v2347, 0.0
  %v2414 = vpack.c.bf16 %v2351, %v2350
  %v2415 = vpack.c.bf16 %v2353, %v2352
  %v2416 = vpack.c.bf16 %v2355, %v2354
  %v2417 = vpack.c.bf16 %v2357, %v2356
  %v2418 = vpack.c.bf16 %v2359, %v2358
  %v2419 = vpack.c.bf16 %v2361, %v2360
  %v2420 = vpack.c.bf16 %v2363, %v2362
  %v2421 = vpack.c.bf16 %v2365, %v2364
  %v2422 = vpack.c.bf16 %v2367, %v2366
  %v2423 = vpack.c.bf16 %v2369, %v2368
  %v2424 = vpack.c.bf16 %v2371, %v2370
  %v2425 = vpack.c.bf16 %v2373, %v2372
  %v2426 = vpack.c.bf16 %v2375, %v2374
  %v2427 = vpack.c.bf16 %v2377, %v2376
  %v2428 = vpack.c.bf16 %v2379, %v2378
  %v2429 = vpack.c.bf16 %v2381, %v2380
  %v2430 = vpack.c.bf16 %v2383, %v2382
  %v2431 = vpack.c.bf16 %v2385, %v2384
  %v2432 = vpack.c.bf16 %v2387, %v2386
  %v2433 = vpack.c.bf16 %v2389, %v2388
  %v2434 = vpack.c.bf16 %v2391, %v2390
  %v2435 = vpack.c.bf16 %v2393, %v2392
  %v2436 = vpack.c.bf16 %v2395, %v2394
  %v2437 = vpack.c.bf16 %v2397, %v2396
  %v2438 = vpack.c.bf16 %v2399, %v2398
  %v2439 = vpack.c.bf16 %v2401, %v2400
  %v2440 = vpack.c.bf16 %v2403, %v2402
  %v2441 = vpack.c.bf16 %v2405, %v2404
  %v2442 = vpack.c.bf16 %v2407, %v2406
  %v2443 = vpack.c.bf16 %v2409, %v2408
  %v2444 = vpack.c.bf16 %v2411, %v2410
  %v2445 = vpack.c.bf16 %v2413, %v2412
  %v2446 = vld [vmem:[%s7] sm:$0xf]
  %v2447 = vld [vmem:[%s7 + $0x4] sm:$0xf]
  %v2448 = vld [vmem:[%s7 + $0x8] sm:$0xf]
  %v2449 = vld [vmem:[%s7 + $0xc] sm:$0xf]
  %v2450 = vld [vmem:[%s7 + $0x10] sm:$0xf]
  %v2451 = vld [vmem:[%s7 + $0x14] sm:$0xf]
  %v2452 = vld [vmem:[%s7 + $0x18] sm:$0xf]
  %v2453 = vld [vmem:[%s7 + $0x1c] sm:$0xf]
  %v2454 = vld [vmem:[%s7 + $0x20] sm:$0xf]
  %v2455 = vld [vmem:[%s7 + $0x24] sm:$0xf]
  %v2456 = vld [vmem:[%s7 + $0x28] sm:$0xf]
  %v2457 = vld [vmem:[%s7 + $0x2c] sm:$0xf]
  %v2458 = vld [vmem:[%s7 + $0x30] sm:$0xf]
  %v2459 = vld [vmem:[%s7 + $0x34] sm:$0xf]
  %v2460 = vld [vmem:[%s7 + $0x38] sm:$0xf]
  %v2461 = vld [vmem:[%s7 + $0x3c] sm:$0xf]
  %v2462 = vld [vmem:[%s8] sm:$0x1]
  %v2464 = vlaneseq
  %v2465 = vshrl.u32 %v2464, 7
  %v2466 = vsub.s32 0, %v2465
  %v2467 = vrot.slane %v2462, %v2466
  %v2485 = vunpack.c.l.b16 %v2446
  %v2486 = vunpack.c.l.b16 %v2447
  %v2487 = vunpack.c.l.b16 %v2448
  %v2488 = vunpack.c.l.b16 %v2449
  %v2489 = vunpack.c.l.b16 %v2450
  %v2490 = vunpack.c.l.b16 %v2451
  %v2491 = vunpack.c.l.b16 %v2452
  %v2492 = vunpack.c.l.b16 %v2453
  %v2493 = vunpack.c.l.b16 %v2454
  %v2494 = vunpack.c.l.b16 %v2455
  %v2495 = vunpack.c.l.b16 %v2456
  %v2496 = vunpack.c.l.b16 %v2457
  %v2497 = vunpack.c.l.b16 %v2458
  %v2498 = vunpack.c.l.b16 %v2459
  %v2499 = vunpack.c.l.b16 %v2460
  %v2500 = vunpack.c.l.b16 %v2461
  %v2501 = vpack.c.b16 %v2486, %v2485
  %v2502 = vpack.c.b16 %v2488, %v2487
  %v2503 = vpack.c.b16 %v2490, %v2489
  %v2504 = vpack.c.b16 %v2492, %v2491
  %v2505 = vpack.c.b16 %v2494, %v2493
  %v2506 = vpack.c.b16 %v2496, %v2495
  %v2507 = vpack.c.b16 %v2498, %v2497
  %v2508 = vpack.c.b16 %v2500, %v2499
  %2517 = vmatprep.subr.bf16.mxu0 0
  %2518 = vmatpush1.bf16.msra.mxu0 %v2501
  %2519 = vmatprep.subr.bf16.mxu0 0
  %2520 = vmatpush1.bf16.msra.mxu0 %v2502
  %2521 = vmatprep.subr.bf16.mxu0 0
  %2522 = vmatpush1.bf16.msra.mxu0 %v2503
  %2523 = vmatprep.subr.bf16.mxu0 0
  %2524 = vmatpush1.bf16.msra.mxu0 %v2504
  %2525 = vmatprep.subr.bf16.mxu0 0
  %2526 = vmatpush1.bf16.msra.mxu0 %v2505
  %2527 = vmatprep.subr.bf16.mxu0 0
  %2528 = vmatpush1.bf16.msra.mxu0 %v2506
  %2529 = vmatprep.subr.bf16.mxu0 0
  %2530 = vmatpush1.bf16.msra.mxu0 %v2507
  %2531 = vmatprep.subr.bf16.mxu0 0
  %2532 = vmatpush1.bf16.msra.mxu0 %v2508
  %2533 = vmatprep.subr.bf16.mxu0 0
  %2534 = vmatpush1.bf16.msra.mxu0 0
  %2535 = vmatprep.subr.bf16.mxu0 0
  %2536 = vmatpush1.bf16.msra.mxu0 0
  %2537 = vmatprep.subr.bf16.mxu0 0
  %2538 = vmatpush1.bf16.msra.mxu0 0
  %2539 = vmatprep.subr.bf16.mxu0 0
  %2540 = vmatpush1.bf16.msra.mxu0 0
  %2541 = vmatprep.subr.bf16.mxu0 0
  %2542 = vmatpush1.bf16.msra.mxu0 0
  %2543 = vmatprep.subr.bf16.mxu0 0
  %2544 = vmatpush1.bf16.msra.mxu0 0
  %2545 = vmatprep.subr.bf16.mxu0 0
  %2546 = vmatpush1.bf16.msra.mxu0 0
  %2547 = vmatprep.subr.bf16.mxu0 0
  %2548 = vmatpush1.bf16.msra.mxu0 0
  %2549 = vmatprep.mubr.bf16.mxu0 0
  %2550 = vmatmul.mubr.bf16.gmra.mrb[0].mxu0 %v2414
  %v2551 = vpop.f32.mrb[0].mxu0
  %v2552 = vadd.f32 %v2467, %v2551
  %v2553 = vpop.f32.mrb[0].mxu0
  %v2554 = vpop.f32.mrb[0].mxu0
  %v2555 = vadd.f32 %v2467, %v2554
  %v2556 = vpop.f32.mrb[0].mxu0
  %2557 = vmatprep.mubr.bf16.mxu0 0
  %2558 = vmatmul.mubr.bf16.gmra.mrb[0].mxu0 %v2415
  %v2559 = vpop.f32.mrb[0].mxu0
  %v2560 = vadd.f32 %v2467, %v2559
  %v2561 = vpop.f32.mrb[0].mxu0
  %v2562 = vpop.f32.mrb[0].mxu0
  %v2563 = vadd.f32 %v2467, %v2562
  %v2564 = vpop.f32.mrb[0].mxu0
  %2565 = vmatprep.mubr.bf16.mxu0 0
  %2566 = vmatmul.mubr.bf16.gmra.mrb[0].mxu0 %v2416
  %v2567 = vpop.f32.mrb[0].mxu0
  %v2568 = vadd.f32 %v2467, %v2567
  %v2569 = vpop.f32.mrb[0].mxu0
  %v2570 = vpop.f32.mrb[0].mxu0
  %v2571 = vadd.f32 %v2467, %v2570
  %v2572 = vpop.f32.mrb[0].mxu0
  %2573 = vmatprep.mubr.bf16.mxu0 0
  %2574 = vmatmul.mubr.bf16.gmra.mrb[0].mxu0 %v2417
  %v2575 = vpop.f32.mrb[0].mxu0
  %v2576 = vadd.f32 %v2467, %v2575
  %v2577 = vpop.f32.mrb[0].mxu0
  %v2578 = vpop.f32.mrb[0].mxu0
  %v2579 = vadd.f32 %v2467, %v2578
  %v2580 = vpop.f32.mrb[0].mxu0
  %2581 = vmatprep.mubr.bf16.mxu0 0
  %2582 = vmatmul.mubr.bf16.gmra.mrb[0].mxu0 %v2418
  %v2583 = vpop.f32.mrb[0].mxu0
  %v2584 = vadd.f32 %v2467, %v2583
  %v2585 = vpop.f32.mrb[0].mxu0
  %v2586 = vpop.f32.mrb[0].mxu0
  %v2587 = vadd.f32 %v2467, %v2586
  %v2588 = vpop.f32.mrb[0].mxu0
  %2589 = vmatprep.mubr.bf16.mxu0 0
  %2590 = vmatmul.mubr.bf16.gmra.mrb[0].mxu0 %v2419
  %v2591 = vpop.f32.mrb[0].mxu0
  %v2592 = vadd.f32 %v2467, %v2591
  %v2593 = vpop.f32.mrb[0].mxu0
  %v2594 = vpop.f32.mrb[0].mxu0
  %v2595 = vadd.f32 %v2467, %v2594
  %v2596 = vpop.f32.mrb[0].mxu0
  %2597 = vmatprep.mubr.bf16.mxu0 0
  %2598 = vmatmul.mubr.bf16.gmra.mrb[0].mxu0 %v2420
  %v2599 = vpop.f32.mrb[0].mxu0
  %v2600 = vadd.f32 %v2467, %v2599
  %v2601 = vpop.f32.mrb[0].mxu0
  %v2602 = vpop.f32.mrb[0].mxu0
  %v2603 = vadd.f32 %v2467, %v2602
  %v2604 = vpop.f32.mrb[0].mxu0
  %2605 = vmatprep.mubr.bf16.mxu0 0
  %2606 = vmatmul.mubr.bf16.gmra.mrb[0].mxu0 %v2421
  %v2607 = vpop.f32.mrb[0].mxu0
  %v2608 = vadd.f32 %v2467, %v2607
  %v2609 = vpop.f32.mrb[0].mxu0
  %v2610 = vpop.f32.mrb[0].mxu0
  %v2611 = vadd.f32 %v2467, %v2610
  %v2612 = vpop.f32.mrb[0].mxu0
  %2613 = vmatprep.mubr.bf16.mxu0 0
  %2614 = vmatmul.mubr.bf16.gmra.mrb[0].mxu0 %v2422
  %v2615 = vpop.f32.mrb[0].mxu0
  %v2616 = vadd.f32 %v2467, %v2615
  %v2617 = vpop.f32.mrb[0].mxu0
  %v2618 = vpop.f32.mrb[0].mxu0
  %v2619 = vadd.f32 %v2467, %v2618
  %v2620 = vpop.f32.mrb[0].mxu0
  %2621 = vmatprep.mubr.bf16.mxu0 0
  %2622 = vmatmul.mubr.bf16.gmra.mrb[0].mxu0 %v2423
  %v2623 = vpop.f32.mrb[0].mxu0
  %v2624 = vadd.f32 %v2467, %v2623
  %v2625 = vpop.f32.mrb[0].mxu0
  %v2626 = vpop.f32.mrb[0].mxu0
  %v2627 = vadd.f32 %v2467, %v2626
  %v2628 = vpop.f32.mrb[0].mxu0
  %2629 = vmatprep.mubr.bf16.mxu0 0
  %2630 = vmatmul.mubr.bf16.gmra.mrb[0].mxu0 %v2424
  %v2631 = vpop.f32.mrb[0].mxu0
  %v2632 = vadd.f32 %v2467, %v2631
  %v2633 = vpop.f32.mrb[0].mxu0
  %v2634 = vpop.f32.mrb[0].mxu0
  %v2635 = vadd.f32 %v2467, %v2634
  %v2636 = vpop.f32.mrb[0].mxu0
  %2637 = vmatprep.mubr.bf16.mxu0 0
  %2638 = vmatmul.mubr.bf16.gmra.mrb[0].mxu0 %v2425
  %v2639 = vpop.f32.mrb[0].mxu0
  %v2640 = vadd.f32 %v2467, %v2639
  %v2641 = vpop.f32.mrb[0].mxu0
  %v2642 = vpop.f32.mrb[0].mxu0
  %v2643 = vadd.f32 %v2467, %v2642
  %v2644 = vpop.f32.mrb[0].mxu0
  %2645 = vmatprep.mubr.bf16.mxu0 0
  %2646 = vmatmul.mubr.bf16.gmra.mrb[0].mxu0 %v2426
  %v2647 = vpop.f32.mrb[0].mxu0
  %v2648 = vadd.f32 %v2467, %v2647
  %v2649 = vpop.f32.mrb[0].mxu0
  %v2650 = vpop.f32.mrb[0].mxu0
  %v2651 = vadd.f32 %v2467, %v2650
  %v2652 = vpop.f32.mrb[0].mxu0
  %2653 = vmatprep.mubr.bf16.mxu0 0
  %2654 = vmatmul.mubr.bf16.gmra.mrb[0].mxu0 %v2427
  %v2655 = vpop.f32.mrb[0].mxu0
  %v2656 = vadd.f32 %v2467, %v2655
  %v2657 = vpop.f32.mrb[0].mxu0
  %v2658 = vpop.f32.mrb[0].mxu0
  %v2659 = vadd.f32 %v2467, %v2658
  %v2660 = vpop.f32.mrb[0].mxu0
  %2661 = vmatprep.mubr.bf16.mxu0 0
  %2662 = vmatmul.mubr.bf16.gmra.mrb[0].mxu0 %v2428
  %v2663 = vpop.f32.mrb[0].mxu0
  %v2664 = vadd.f32 %v2467, %v2663
  %v2665 = vpop.f32.mrb[0].mxu0
  %v2666 = vpop.f32.mrb[0].mxu0
  %v2667 = vadd.f32 %v2467, %v2666
  %v2668 = vpop.f32.mrb[0].mxu0
  %2669 = vmatprep.mubr.bf16.mxu0 0
  %2670 = vmatmul.mubr.bf16.gmra.mrb[0].mxu0 %v2429
  %v2671 = vpop.f32.mrb[0].mxu0
  %v2672 = vadd.f32 %v2467, %v2671
  %v2673 = vpop.f32.mrb[0].mxu0
  %v2674 = vpop.f32.mrb[0].mxu0
  %v2675 = vadd.f32 %v2467, %v2674
  %v2676 = vpop.f32.mrb[0].mxu0
  %2677 = vmatprep.mubr.bf16.mxu0 0
  %2678 = vmatmul.mubr.bf16.gmra.mrb[0].mxu0 %v2430
  %v2679 = vpop.f32.mrb[0].mxu0
  %v2680 = vadd.f32 %v2467, %v2679
  %v2681 = vpop.f32.mrb[0].mxu0
  %v2682 = vpop.f32.mrb[0].mxu0
  %v2683 = vadd.f32 %v2467, %v2682
  %v2684 = vpop.f32.mrb[0].mxu0
  %2685 = vmatprep.mubr.bf16.mxu0 0
  %2686 = vmatmul.mubr.bf16.gmra.mrb[0].mxu0 %v2431
  %v2687 = vpop.f32.mrb[0].mxu0
  %v2688 = vadd.f32 %v2467, %v2687
  %v2689 = vpop.f32.mrb[0].mxu0
  %v2690 = vpop.f32.mrb[0].mxu0
  %v2691 = vadd.f32 %v2467, %v2690
  %v2692 = vpop.f32.mrb[0].mxu0
  %2693 = vmatprep.mubr.bf16.mxu0 0
  %2694 = vmatmul.mubr.bf16.gmra.mrb[0].mxu0 %v2432
  %v2695 = vpop.f32.mrb[0].mxu0
  %v2696 = vadd.f32 %v2467, %v2695
  %v2697 = vpop.f32.mrb[0].mxu0
  %v2698 = vpop.f32.mrb[0].mxu0
  %v2699 = vadd.f32 %v2467, %v2698
  %v2700 = vpop.f32.mrb[0].mxu0
  %2701 = vmatprep.mubr.bf16.mxu0 0
  %2702 = vmatmul.mubr.bf16.gmra.mrb[0].mxu0 %v2433
  %v2703 = vpop.f32.mrb[0].mxu0
  %v2704 = vadd.f32 %v2467, %v2703
  %v2705 = vpop.f32.mrb[0].mxu0
  %v2706 = vpop.f32.mrb[0].mxu0
  %v2707 = vadd.f32 %v2467, %v2706
  %v2708 = vpop.f32.mrb[0].mxu0
  %2709 = vmatprep.mubr.bf16.mxu0 0
  %2710 = vmatmul.mubr.bf16.gmra.mrb[0].mxu0 %v2434
  %v2711 = vpop.f32.mrb[0].mxu0
  %v2712 = vadd.f32 %v2467, %v2711
  %v2713 = vpop.f32.mrb[0].mxu0
  %v2714 = vpop.f32.mrb[0].mxu0
  %v2715 = vadd.f32 %v2467, %v2714
  %v2716 = vpop.f32.mrb[0].mxu0
  %2717 = vmatprep.mubr.bf16.mxu0 0
  %2718 = vmatmul.mubr.bf16.gmra.mrb[0].mxu0 %v2435
  %v2719 = vpop.f32.mrb[0].mxu0
  %v2720 = vadd.f32 %v2467, %v2719
  %v2721 = vpop.f32.mrb[0].mxu0
  %v2722 = vpop.f32.mrb[0].mxu0
  %v2723 = vadd.f32 %v2467, %v2722
  %v2724 = vpop.f32.mrb[0].mxu0
  %2725 = vmatprep.mubr.bf16.mxu0 0
  %2726 = vmatmul.mubr.bf16.gmra.mrb[0].mxu0 %v2436
  %v2727 = vpop.f32.mrb[0].mxu0
  %v2728 = vadd.f32 %v2467, %v2727
  %v2729 = vpop.f32.mrb[0].mxu0
  %v2730 = vpop.f32.mrb[0].mxu0
  %v2731 = vadd.f32 %v2467, %v2730
  %v2732 = vpop.f32.mrb[0].mxu0
  %2733 = vmatprep.mubr.bf16.mxu0 0
  %2734 = vmatmul.mubr.bf16.gmra.mrb[0].mxu0 %v2437
  %v2735 = vpop.f32.mrb[0].mxu0
  %v2736 = vadd.f32 %v2467, %v2735
  %v2737 = vpop.f32.mrb[0].mxu0
  %v2738 = vpop.f32.mrb[0].mxu0
  %v2739 = vadd.f32 %v2467, %v2738
  %v2740 = vpop.f32.mrb[0].mxu0
  %2741 = vmatprep.mubr.bf16.mxu0 0
  %2742 = vmatmul.mubr.bf16.gmra.mrb[0].mxu0 %v2438
  %v2743 = vpop.f32.mrb[0].mxu0
  %v2744 = vadd.f32 %v2467, %v2743
  %v2745 = vpop.f32.mrb[0].mxu0
  %v2746 = vpop.f32.mrb[0].mxu0
  %v2747 = vadd.f32 %v2467, %v2746
  %v2748 = vpop.f32.mrb[0].mxu0
  %2749 = vmatprep.mubr.bf16.mxu0 0
  %2750 = vmatmul.mubr.bf16.gmra.mrb[0].mxu0 %v2439
  %v2751 = vpop.f32.mrb[0].mxu0
  %v2752 = vadd.f32 %v2467, %v2751
  %v2753 = vpop.f32.mrb[0].mxu0
  %v2754 = vpop.f32.mrb[0].mxu0
  %v2755 = vadd.f32 %v2467, %v2754
  %v2756 = vpop.f32.mrb[0].mxu0
  %2757 = vmatprep.mubr.bf16.mxu0 0
  %2758 = vmatmul.mubr.bf16.gmra.mrb[0].mxu0 %v2440
  %v2759 = vpop.f32.mrb[0].mxu0
  %v2760 = vadd.f32 %v2467, %v2759
  %v2761 = vpop.f32.mrb[0].mxu0
  %v2762 = vpop.f32.mrb[0].mxu0
  %v2763 = vadd.f32 %v2467, %v2762
  %v2764 = vpop.f32.mrb[0].mxu0
  %2765 = vmatprep.mubr.bf16.mxu0 0
  %2766 = vmatmul.mubr.bf16.gmra.mrb[0].mxu0 %v2441
  %v2767 = vpop.f32.mrb[0].mxu0
  %v2768 = vadd.f32 %v2467, %v2767
  %v2769 = vpop.f32.mrb[0].mxu0
  %v2770 = vpop.f32.mrb[0].mxu0
  %v2771 = vadd.f32 %v2467, %v2770
  %v2772 = vpop.f32.mrb[0].mxu0
  %2773 = vmatprep.mubr.bf16.mxu0 0
  %2774 = vmatmul.mubr.bf16.gmra.mrb[0].mxu0 %v2442
  %v2775 = vpop.f32.mrb[0].mxu0
  %v2776 = vadd.f32 %v2467, %v2775
  %v2777 = vpop.f32.mrb[0].mxu0
  %v2778 = vpop.f32.mrb[0].mxu0
  %v2779 = vadd.f32 %v2467, %v2778
  %v2780 = vpop.f32.mrb[0].mxu0
  %2781 = vmatprep.mubr.bf16.mxu0 0
  %2782 = vmatmul.mubr.bf16.gmra.mrb[0].mxu0 %v2443
  %v2783 = vpop.f32.mrb[0].mxu0
  %v2784 = vadd.f32 %v2467, %v2783
  %v2785 = vpop.f32.mrb[0].mxu0
  %v2786 = vpop.f32.mrb[0].mxu0
  %v2787 = vadd.f32 %v2467, %v2786
  %v2788 = vpop.f32.mrb[0].mxu0
  %2789 = vmatprep.mubr.bf16.mxu0 0
  %2790 = vmatmul.mubr.bf16.gmra.mrb[0].mxu0 %v2444
  %v2791 = vpop.f32.mrb[0].mxu0
  %v2792 = vadd.f32 %v2467, %v2791
  %v2793 = vpop.f32.mrb[0].mxu0
  %v2794 = vpop.f32.mrb[0].mxu0
  %v2795 = vadd.f32 %v2467, %v2794
  %v2796 = vpop.f32.mrb[0].mxu0
  %2797 = vmatprep.mubr.bf16.mxu0 0
  %2798 = vmatmul.mubr.bf16.gmra.mrb[0].mxu0 %v2445
  %v2799 = vpop.f32.mrb[0].mxu0
  %v2800 = vadd.f32 %v2467, %v2799
  %v2801 = vpop.f32.mrb[0].mxu0
  %v2802 = vpop.f32.mrb[0].mxu0
  %v2803 = vadd.f32 %v2467, %v2802
  %v2804 = vpop.f32.mrb[0].mxu0
  %2805 = vdwg.mxu0
  %v2806 = vmax.f32 %v2552, 0.0
  %v2807 = vmax.f32 %v2555, 0.0
  %v2808 = vmax.f32 %v2560, 0.0
  %v2809 = vmax.f32 %v2563, 0.0
  %v2810 = vmax.f32 %v2568, 0.0
  %v2811 = vmax.f32 %v2571, 0.0
  %v2812 = vmax.f32 %v2576, 0.0
  %v2813 = vmax.f32 %v2579, 0.0
  %v2814 = vmax.f32 %v2584, 0.0
  %v2815 = vmax.f32 %v2587, 0.0
  %v2816 = vmax.f32 %v2592, 0.0
  %v2817 = vmax.f32 %v2595, 0.0
  %v2818 = vmax.f32 %v2600, 0.0
  %v2819 = vmax.f32 %v2603, 0.0
  %v2820 = vmax.f32 %v2608, 0.0
  %v2821 = vmax.f32 %v2611, 0.0
  %v2822 = vmax.f32 %v2616, 0.0
  %v2823 = vmax.f32 %v2619, 0.0
  %v2824 = vmax.f32 %v2624, 0.0
  %v2825 = vmax.f32 %v2627, 0.0
  %v2826 = vmax.f32 %v2632, 0.0
  %v2827 = vmax.f32 %v2635, 0.0
  %v2828 = vmax.f32 %v2640, 0.0
  %v2829 = vmax.f32 %v2643, 0.0
  %v2830 = vmax.f32 %v2648, 0.0
  %v2831 = vmax.f32 %v2651, 0.0
  %v2832 = vmax.f32 %v2656, 0.0
  %v2833 = vmax.f32 %v2659, 0.0
  %v2834 = vmax.f32 %v2664, 0.0
  %v2835 = vmax.f32 %v2667, 0.0
  %v2836 = vmax.f32 %v2672, 0.0
  %v2837 = vmax.f32 %v2675, 0.0
  %v2838 = vmax.f32 %v2680, 0.0
  %v2839 = vmax.f32 %v2683, 0.0
  %v2840 = vmax.f32 %v2688, 0.0
  %v2841 = vmax.f32 %v2691, 0.0
  %v2842 = vmax.f32 %v2696, 0.0
  %v2843 = vmax.f32 %v2699, 0.0
  %v2844 = vmax.f32 %v2704, 0.0
  %v2845 = vmax.f32 %v2707, 0.0
  %v2846 = vmax.f32 %v2712, 0.0
  %v2847 = vmax.f32 %v2715, 0.0
  %v2848 = vmax.f32 %v2720, 0.0
  %v2849 = vmax.f32 %v2723, 0.0
  %v2850 = vmax.f32 %v2728, 0.0
  %v2851 = vmax.f32 %v2731, 0.0
  %v2852 = vmax.f32 %v2736, 0.0
  %v2853 = vmax.f32 %v2739, 0.0
  %v2854 = vmax.f32 %v2744, 0.0
  %v2855 = vmax.f32 %v2747, 0.0
  %v2856 = vmax.f32 %v2752, 0.0
  %v2857 = vmax.f32 %v2755, 0.0
  %v2858 = vmax.f32 %v2760, 0.0
  %v2859 = vmax.f32 %v2763, 0.0
  %v2860 = vmax.f32 %v2768, 0.0
  %v2861 = vmax.f32 %v2771, 0.0
  %v2862 = vmax.f32 %v2776, 0.0
  %v2863 = vmax.f32 %v2779, 0.0
  %v2864 = vmax.f32 %v2784, 0.0
  %v2865 = vmax.f32 %v2787, 0.0
  %v2866 = vmax.f32 %v2792, 0.0
  %v2867 = vmax.f32 %v2795, 0.0
  %v2868 = vmax.f32 %v2800, 0.0
  %v2869 = vmax.f32 %v2803, 0.0
  %v2870 = vld [vmem:[%s4] sm:$0xff]
  %v2871 = vld [vmem:[%s4 + $0x8] sm:$0xff]
  %v2872 = vpack.c.bf16 %v2807, %v2806
  %v2873 = vpack.c.bf16 %v2809, %v2808
  %v2874 = vpack.c.bf16 %v2811, %v2810
  %v2875 = vpack.c.bf16 %v2813, %v2812
  %v2876 = vpack.c.bf16 %v2815, %v2814
  %v2877 = vpack.c.bf16 %v2817, %v2816
  %v2878 = vpack.c.bf16 %v2819, %v2818
  %v2879 = vpack.c.bf16 %v2821, %v2820
  %v2880 = vpack.c.bf16 %v2823, %v2822
  %v2881 = vpack.c.bf16 %v2825, %v2824
  %v2882 = vpack.c.bf16 %v2827, %v2826
  %v2883 = vpack.c.bf16 %v2829, %v2828
  %v2884 = vpack.c.bf16 %v2831, %v2830
  %v2885 = vpack.c.bf16 %v2833, %v2832
  %v2886 = vpack.c.bf16 %v2835, %v2834
  %v2887 = vpack.c.bf16 %v2837, %v2836
  %v2888 = vpack.c.bf16 %v2839, %v2838
  %v2889 = vpack.c.bf16 %v2841, %v2840
  %v2890 = vpack.c.bf16 %v2843, %v2842
  %v2891 = vpack.c.bf16 %v2845, %v2844
  %v2892 = vpack.c.bf16 %v2847, %v2846
  %v2893 = vpack.c.bf16 %v2849, %v2848
  %v2894 = vpack.c.bf16 %v2851, %v2850
  %v2895 = vpack.c.bf16 %v2853, %v2852
  %v2896 = vpack.c.bf16 %v2855, %v2854
  %v2897 = vpack.c.bf16 %v2857, %v2856
  %v2898 = vpack.c.bf16 %v2859, %v2858
  %v2899 = vpack.c.bf16 %v2861, %v2860
  %v2900 = vpack.c.bf16 %v2863, %v2862
  %v2901 = vpack.c.bf16 %v2865, %v2864
  %v2902 = vpack.c.bf16 %v2867, %v2866
  %v2903 = vpack.c.bf16 %v2869, %v2868
  %v2906 = vunpack.c.l.b16 %v2870
  %v2907 = vunpack.c.h.b16 %v2870
  %v2908 = vunpack.c.l.b16 %v2871
  %v2909 = vunpack.c.h.b16 %v2871
  %v2910 = vpack.c.b16 %v2906, %v2906
  %v2911 = vpack.c.b16 %v2907, %v2907
  %v2912 = vpack.c.b16 %v2908, %v2908
  %v2913 = vpack.c.b16 %v2909, %v2909
  %2918 = vmatprep.subr.bf16.mxu0 0
  %2919 = vmatpush1.bf16.msra.mxu0 %v2872
  %2920 = vmatprep.subr.bf16.mxu0 0
  %2921 = vmatpush1.bf16.msra.mxu0 %v2873
  %2922 = vmatprep.subr.bf16.mxu0 0
  %2923 = vmatpush1.bf16.msra.mxu0 %v2874
  %2924 = vmatprep.subr.bf16.mxu0 0
  %2925 = vmatpush1.bf16.msra.mxu0 %v2875
  %2926 = vmatprep.subr.bf16.mxu0 0
  %2927 = vmatpush1.bf16.msra.mxu0 %v2876
  %2928 = vmatprep.subr.bf16.mxu0 0
  %2929 = vmatpush1.bf16.msra.mxu0 %v2877
  %2930 = vmatprep.subr.bf16.mxu0 0
  %2931 = vmatpush1.bf16.msra.mxu0 %v2878
  %2932 = vmatprep.subr.bf16.mxu0 0
  %2933 = vmatpush1.bf16.msra.mxu0 %v2879
  %2934 = vmatprep.subr.bf16.mxu0 0
  %2935 = vmatpush1.bf16.msra.mxu0 %v2880
  %2936 = vmatprep.subr.bf16.mxu0 0
  %2937 = vmatpush1.bf16.msra.mxu0 %v2881
  %2938 = vmatprep.subr.bf16.mxu0 0
  %2939 = vmatpush1.bf16.msra.mxu0 %v2882
  %2940 = vmatprep.subr.bf16.mxu0 0
  %2941 = vmatpush1.bf16.msra.mxu0 %v2883
  %2942 = vmatprep.subr.bf16.mxu0 0
  %2943 = vmatpush1.bf16.msra.mxu0 %v2884
  %2944 = vmatprep.subr.bf16.mxu0 0
  %2945 = vmatpush1.bf16.msra.mxu0 %v2885
  %2946 = vmatprep.subr.bf16.mxu0 0
  %2947 = vmatpush1.bf16.msra.mxu0 %v2886
  %2948 = vmatprep.subr.bf16.mxu0 0
  %2949 = vmatpush1.bf16.msra.mxu0 %v2887
  %2950 = vmatprep.mubr.bf16.mxu0 %v2911
  %2951 = vmatmul.mubr.bf16.gmra.mrb[0].mxu0 %v2910
  %v2952 = vpop.f32.mrb[0].mxu0
  %v2953 = vadd.f32 0.0, %v2952
  %v2954 = vpop.f32.mrb[0].mxu0
  %v2955 = vpop.f32.mrb[0].mxu0
  %v2956 = vpop.f32.mrb[0].mxu0
  %2957 = vdwg.mxu0
  %2958 = vmatprep.subr.bf16.mxu0 0
  %2959 = vmatpush1.bf16.msra.mxu0 %v2888
  %2960 = vmatprep.subr.bf16.mxu0 0
  %2961 = vmatpush1.bf16.msra.mxu0 %v2889
  %2962 = vmatprep.subr.bf16.mxu0 0
  %2963 = vmatpush1.bf16.msra.mxu0 %v2890
  %2964 = vmatprep.subr.bf16.mxu0 0
  %2965 = vmatpush1.bf16.msra.mxu0 %v2891
  %2966 = vmatprep.subr.bf16.mxu0 0
  %2967 = vmatpush1.bf16.msra.mxu0 %v2892
  %2968 = vmatprep.subr.bf16.mxu0 0
  %2969 = vmatpush1.bf16.msra.mxu0 %v2893
  %2970 = vmatprep.subr.bf16.mxu0 0
  %2971 = vmatpush1.bf16.msra.mxu0 %v2894
  %2972 = vmatprep.subr.bf16.mxu0 0
  %2973 = vmatpush1.bf16.msra.mxu0 %v2895
  %2974 = vmatprep.subr.bf16.mxu0 0
  %2975 = vmatpush1.bf16.msra.mxu0 %v2896
  %2976 = vmatprep.subr.bf16.mxu0 0
  %2977 = vmatpush1.bf16.msra.mxu0 %v2897
  %2978 = vmatprep.subr.bf16.mxu0 0
  %2979 = vmatpush1.bf16.msra.mxu0 %v2898
  %2980 = vmatprep.subr.bf16.mxu0 0
  %2981 = vmatpush1.bf16.msra.mxu0 %v2899
  %2982 = vmatprep.subr.bf16.mxu0 0
  %2983 = vmatpush1.bf16.msra.mxu0 %v2900
  %2984 = vmatprep.subr.bf16.mxu0 0
  %2985 = vmatpush1.bf16.msra.mxu0 %v2901
  %2986 = vmatprep.subr.bf16.mxu0 0
  %2987 = vmatpush1.bf16.msra.mxu0 %v2902
  %2988 = vmatprep.subr.bf16.mxu0 0
  %2989 = vmatpush1.bf16.msra.mxu0 %v2903
  %2990 = vmatprep.mubr.bf16.mxu0 %v2913
  %2991 = vmatmul.mubr.bf16.gmra.mrb[0].mxu0 %v2912
  %v2992 = vpop.f32.mrb[0].mxu0
  %v2993 = vadd.f32 %v2953, %v2992
  %v2994 = vpop.f32.mrb[0].mxu0
  %v2995 = vpop.f32.mrb[0].mxu0
  %v2996 = vpop.f32.mrb[0].mxu0
  %2997 = vdwg.mxu0
  %2998 = vst [vmem:[%s9] sm:$0xff] %v2993
  // Predicated region
  $region38: #{gin_graph_classifier.4} parent=0 // pred_check
    _
  $region39: #{gin_graph_classifier.4} parent=0 // pred_check_branch
    %3000 = sbr.rel (0) target = $region41
  $region40: #{gin_graph_classifier.4} parent=0 // pred_region
    _
  $region41: #{gin_graph_classifier.4} parent=0 // pred_fallthru
    _
  // Predicated region
  $region42: #{gin_graph_classifier.4} parent=0 // pred_check
    _
  $region43: #{gin_graph_classifier.4} parent=0 // pred_check_branch
    %3002 = sbr.rel (0) target = $region45
  $region44: #{gin_graph_classifier.4} parent=0 // pred_region
    _
  $region45: #{gin_graph_classifier.4} parent=0 // pred_fallthru
    _

// kernel: gin_graph_classifier.3
$region0: #{gin_graph_classifier.3}
  #allocation0 [shape = 'u32[]', space=smem, size = 0x4, offset = 0x4, fixed_abs, tag = 'smem constant byte address 0x4 - core index']
  #allocation1 [shape = 'u32[144,128]{1,0:T(1,128)}', space=vmem, size = 0x12000, scoped, tag = 'internal scratch']
  #allocation2 [shape = 'f32[1,1]{1,0:T(1,128)S(6)}', space=smem, size = 0x200, scoped, tag = 'scoped memory for gin_graph_classifier.3']
  %s0 = inlined_call_operand.<no memory space> [shape: f32[1,1], index: 0, kind: input, shape index: {}]
  %s1 = inlined_call_operand.vmem [shape: s8[512,512], index: 1, kind: input, shape index: {}]
  %s2 = inlined_call_operand.vmem [shape: bf16[512,128], index: 2, kind: input, shape index: {}, may-alias: {2,3}]
  %s3 = inlined_call_operand.vmem [shape: bf16[512,128], index: 3, kind: input, shape index: {}, may-alias: {2,3}]
  %s4 = inlined_call_operand.vmem [shape: bf16[128,128], index: 4, kind: input, shape index: {}]
  %s5 = inlined_call_operand.vmem [shape: f32[1,128], index: 5, kind: input, shape index: {}]
  %s6 = inlined_call_operand.vmem [shape: bf16[128,128], index: 6, kind: input, shape index: {}]
  %s7 = inlined_call_operand.vmem [shape: f32[1,128], index: 7, kind: input, shape index: {}]
  %s8 = inlined_call_operand.vmem [shape: bf16[512,128], index: 8, kind: output, shape index: {}]
  %s9 = sld [smem:[#allocation0]]
  $region42: #{gin_graph_classifier.3} parent=0
    _
  %s11 = ssub.s32 1, %s9
  %s12 = scalar_select 0, %s11, %s9
  %13 = sst [smem:[#allocation2]] %s0
  // Predicated region
  $region2: #{gin_graph_classifier.3} parent=0 // pred_check
    _
  $region3: #{gin_graph_classifier.3} parent=0 // pred_check_branch
    %15 = sbr.rel (0) target = $region5
  $region4: #{gin_graph_classifier.3} parent=0 // pred_region
    _
  $region5: #{gin_graph_classifier.3} parent=0 // pred_fallthru
    _
  // Predicated region
  $region6: #{gin_graph_classifier.3} parent=0 // pred_check
    _
  $region7: #{gin_graph_classifier.3} parent=0 // pred_check_branch
    %17 = sbr.rel (0) target = $region9
  $region8: #{gin_graph_classifier.3} parent=0 // pred_region
    _
  $region9: #{gin_graph_classifier.3} parent=0 // pred_fallthru
    _
  // Predicated region
  $region10: #{gin_graph_classifier.3} parent=0 // pred_check
    _
  $region11: #{gin_graph_classifier.3} parent=0 // pred_check_branch
    %19 = sbr.rel (0) target = $region13
  $region12: #{gin_graph_classifier.3} parent=0 // pred_region
    _
  $region13: #{gin_graph_classifier.3} parent=0 // pred_fallthru
    _
  // Predicated region
  $region14: #{gin_graph_classifier.3} parent=0 // pred_check
    _
  $region15: #{gin_graph_classifier.3} parent=0 // pred_check_branch
    %21 = sbr.rel (0) target = $region17
  $region16: #{gin_graph_classifier.3} parent=0 // pred_region
    _
  $region17: #{gin_graph_classifier.3} parent=0 // pred_fallthru
    _
  // Predicated region
  $region18: #{gin_graph_classifier.3} parent=0 // pred_check
    _
  $region19: #{gin_graph_classifier.3} parent=0 // pred_check_branch
    %23 = sbr.rel (0) target = $region21
  $region20: #{gin_graph_classifier.3} parent=0 // pred_region
    _
  $region21: #{gin_graph_classifier.3} parent=0 // pred_fallthru
    _
  // Predicated region
  $region22: #{gin_graph_classifier.3} parent=0 // pred_check
    _
  $region23: #{gin_graph_classifier.3} parent=0 // pred_check_branch
    %25 = sbr.rel (0) target = $region25
  $region24: #{gin_graph_classifier.3} parent=0 // pred_region
    _
  $region25: #{gin_graph_classifier.3} parent=0 // pred_fallthru
    _
  // Predicated region
  $region26: #{gin_graph_classifier.3} parent=0 // pred_check
    _
  $region27: #{gin_graph_classifier.3} parent=0 // pred_check_branch
    %27 = sbr.rel (0) target = $region29
  $region28: #{gin_graph_classifier.3} parent=0 // pred_region
    _
  $region29: #{gin_graph_classifier.3} parent=0 // pred_fallthru
    _
  // Predicated region
  $region30: #{gin_graph_classifier.3} parent=0 // pred_check
    _
  $region31: #{gin_graph_classifier.3} parent=0 // pred_check_branch
    %29 = sbr.rel (0) target = $region33
  $region32: #{gin_graph_classifier.3} parent=0 // pred_region
    _
  $region33: #{gin_graph_classifier.3} parent=0 // pred_fallthru
    _
  %v31 = vld [vmem:[%s1] sm:$0xff]
  %v32 = vld [vmem:[%s1 + $0x8] sm:$0xff]
  %v33 = vld [vmem:[%s1 + $0x10] sm:$0xff]
  %v34 = vld [vmem:[%s1 + $0x18] sm:$0xff]
  %v35 = vld [vmem:[%s1 + $0x20] sm:$0xff]
  %v36 = vld [vmem:[%s1 + $0x28] sm:$0xff]
  %v37 = vld [vmem:[%s1 + $0x30] sm:$0xff]
  %v38 = vld [vmem:[%s1 + $0x38] sm:$0xff]
  %v39 = vld [vmem:[%s1 + $0x40] sm:$0xff]
  %v40 = vld [vmem:[%s1 + $0x48] sm:$0xff]
  %v41 = vld [vmem:[%s1 + $0x50] sm:$0xff]
  %v42 = vld [vmem:[%s1 + $0x58] sm:$0xff]
  %v43 = vld [vmem:[%s1 + $0x60] sm:$0xff]
  %v44 = vld [vmem:[%s1 + $0x68] sm:$0xff]
  %v45 = vld [vmem:[%s1 + $0x70] sm:$0xff]
  %v46 = vld [vmem:[%s1 + $0x78] sm:$0xff]
  %v47 = vld [vmem:[%s1 + $0x80] sm:$0xff]
  %v48 = vld [vmem:[%s1 + $0x88] sm:$0xff]
  %v49 = vld [vmem:[%s1 + $0x90] sm:$0xff]
  %v50 = vld [vmem:[%s1 + $0x98] sm:$0xff]
  %v51 = vld [vmem:[%s1 + $0xa0] sm:$0xff]
  %v52 = vld [vmem:[%s1 + $0xa8] sm:$0xff]
  %v53 = vld [vmem:[%s1 + $0xb0] sm:$0xff]
  %v54 = vld [vmem:[%s1 + $0xb8] sm:$0xff]
  %v55 = vld [vmem:[%s1 + $0xc0] sm:$0xff]
  %v56 = vld [vmem:[%s1 + $0xc8] sm:$0xff]
  %v57 = vld [vmem:[%s1 + $0xd0] sm:$0xff]
  %v58 = vld [vmem:[%s1 + $0xd8] sm:$0xff]
  %v59 = vld [vmem:[%s1 + $0xe0] sm:$0xff]
  %v60 = vld [vmem:[%s1 + $0xe8] sm:$0xff]
  %v61 = vld [vmem:[%s1 + $0xf0] sm:$0xff]
  %v62 = vld [vmem:[%s1 + $0xf8] sm:$0xff]
  %v63 = vld [vmem:[%s1 + $0x100] sm:$0xff]
  %v64 = vld [vmem:[%s1 + $0x108] sm:$0xff]
  %v65 = vld [vmem:[%s1 + $0x110] sm:$0xff]
  %v66 = vld [vmem:[%s1 + $0x118] sm:$0xff]
  %v67 = vld [vmem:[%s1 + $0x120] sm:$0xff]
  %v68 = vld [vmem:[%s1 + $0x128] sm:$0xff]
  %v69 = vld [vmem:[%s1 + $0x130] sm:$0xff]
  %v70 = vld [vmem:[%s1 + $0x138] sm:$0xff]
  %v71 = vld [vmem:[%s1 + $0x140] sm:$0xff]
  %v72 = vld [vmem:[%s1 + $0x148] sm:$0xff]
  %v73 = vld [vmem:[%s1 + $0x150] sm:$0xff]
  %v74 = vld [vmem:[%s1 + $0x158] sm:$0xff]
  %v75 = vld [vmem:[%s1 + $0x160] sm:$0xff]
  %v76 = vld [vmem:[%s1 + $0x168] sm:$0xff]
  %v77 = vld [vmem:[%s1 + $0x170] sm:$0xff]
  %v78 = vld [vmem:[%s1 + $0x178] sm:$0xff]
  %v79 = vld [vmem:[%s1 + $0x180] sm:$0xff]
  %v80 = vld [vmem:[%s1 + $0x188] sm:$0xff]
  %v81 = vld [vmem:[%s1 + $0x190] sm:$0xff]
  %v82 = vld [vmem:[%s1 + $0x198] sm:$0xff]
  %v83 = vld [vmem:[%s1 + $0x1a0] sm:$0xff]
  %v84 = vld [vmem:[%s1 + $0x1a8] sm:$0xff]
  %v85 = vld [vmem:[%s1 + $0x1b0] sm:$0xff]
  %v86 = vld [vmem:[%s1 + $0x1b8] sm:$0xff]
  %v87 = vld [vmem:[%s1 + $0x1c0] sm:$0xff]
  %v88 = vld [vmem:[%s1 + $0x1c8] sm:$0xff]
  %v89 = vld [vmem:[%s1 + $0x1d0] sm:$0xff]
  %v90 = vld [vmem:[%s1 + $0x1d8] sm:$0xff]
  %v91 = vld [vmem:[%s1 + $0x1e0] sm:$0xff]
  %v92 = vld [vmem:[%s1 + $0x1e8] sm:$0xff]
  %v93 = vld [vmem:[%s1 + $0x1f0] sm:$0xff]
  %v94 = vld [vmem:[%s1 + $0x1f8] sm:$0xff]
  %v95 = vunpack.c.l.s8.bf16 %v31
  %v96 = vunpack.c.h.s8.bf16 %v31
  %v97 = vunpack.c.l.s8.bf16 %v32
  %v98 = vunpack.c.h.s8.bf16 %v32
  %v99 = vunpack.c.l.s8.bf16 %v33
  %v100 = vunpack.c.h.s8.bf16 %v33
  %v101 = vunpack.c.l.s8.bf16 %v34
  %v102 = vunpack.c.h.s8.bf16 %v34
  %v103 = vunpack.c.l.s8.bf16 %v35
  %v104 = vunpack.c.h.s8.bf16 %v35
  %v105 = vunpack.c.l.s8.bf16 %v36
  %v106 = vunpack.c.h.s8.bf16 %v36
  %v107 = vunpack.c.l.s8.bf16 %v37
  %v108 = vunpack.c.h.s8.bf16 %v37
  %v109 = vunpack.c.l.s8.bf16 %v38
  %v110 = vunpack.c.h.s8.bf16 %v38
  %v111 = vunpack.c.l.s8.bf16 %v39
  %v112 = vunpack.c.h.s8.bf16 %v39
  %v113 = vunpack.c.l.s8.bf16 %v40
  %v114 = vunpack.c.h.s8.bf16 %v40
  %v115 = vunpack.c.l.s8.bf16 %v41
  %v116 = vunpack.c.h.s8.bf16 %v41
  %v117 = vunpack.c.l.s8.bf16 %v42
  %v118 = vunpack.c.h.s8.bf16 %v42
  %v119 = vunpack.c.l.s8.bf16 %v43
  %v120 = vunpack.c.h.s8.bf16 %v43
  %v121 = vunpack.c.l.s8.bf16 %v44
  %v122 = vunpack.c.h.s8.bf16 %v44
  %v123 = vunpack.c.l.s8.bf16 %v45
  %v124 = vunpack.c.h.s8.bf16 %v45
  %v125 = vunpack.c.l.s8.bf16 %v46
  %v126 = vunpack.c.h.s8.bf16 %v46
  %v127 = vunpack.c.l.s8.bf16 %v47
  %v128 = vunpack.c.h.s8.bf16 %v47
  %v129 = vunpack.c.l.s8.bf16 %v48
  %v130 = vunpack.c.h.s8.bf16 %v48
  %v131 = vunpack.c.l.s8.bf16 %v49
  %v132 = vunpack.c.h.s8.bf16 %v49
  %v133 = vunpack.c.l.s8.bf16 %v50
  %v134 = vunpack.c.h.s8.bf16 %v50
  %v135 = vunpack.c.l.s8.bf16 %v51
  %v136 = vunpack.c.h.s8.bf16 %v51
  %v137 = vunpack.c.l.s8.bf16 %v52
  %v138 = vunpack.c.h.s8.bf16 %v52
  %v139 = vunpack.c.l.s8.bf16 %v53
  %v140 = vunpack.c.h.s8.bf16 %v53
  %v141 = vunpack.c.l.s8.bf16 %v54
  %v142 = vunpack.c.h.s8.bf16 %v54
  %v143 = vunpack.c.l.s8.bf16 %v55
  %v144 = vunpack.c.h.s8.bf16 %v55
  %v145 = vunpack.c.l.s8.bf16 %v56
  %v146 = vunpack.c.h.s8.bf16 %v56
  %v147 = vunpack.c.l.s8.bf16 %v57
  %v148 = vunpack.c.h.s8.bf16 %v57
  %v149 = vunpack.c.l.s8.bf16 %v58
  %v150 = vunpack.c.h.s8.bf16 %v58
  %v151 = vunpack.c.l.s8.bf16 %v59
  %v152 = vunpack.c.h.s8.bf16 %v59
  %v153 = vunpack.c.l.s8.bf16 %v60
  %v154 = vunpack.c.h.s8.bf16 %v60
  %v155 = vunpack.c.l.s8.bf16 %v61
  %v156 = vunpack.c.h.s8.bf16 %v61
  %v157 = vunpack.c.l.s8.bf16 %v62
  %v158 = vunpack.c.h.s8.bf16 %v62
  %v159 = vunpack.c.l.s8.bf16 %v63
  %v160 = vunpack.c.h.s8.bf16 %v63
  %v161 = vunpack.c.l.s8.bf16 %v64
  %v162 = vunpack.c.h.s8.bf16 %v64
  %v163 = vunpack.c.l.s8.bf16 %v65
  %v164 = vunpack.c.h.s8.bf16 %v65
  %v165 = vunpack.c.l.s8.bf16 %v66
  %v166 = vunpack.c.h.s8.bf16 %v66
  %v167 = vunpack.c.l.s8.bf16 %v67
  %v168 = vunpack.c.h.s8.bf16 %v67
  %v169 = vunpack.c.l.s8.bf16 %v68
  %v170 = vunpack.c.h.s8.bf16 %v68
  %v171 = vunpack.c.l.s8.bf16 %v69
  %v172 = vunpack.c.h.s8.bf16 %v69
  %v173 = vunpack.c.l.s8.bf16 %v70
  %v174 = vunpack.c.h.s8.bf16 %v70
  %v175 = vunpack.c.l.s8.bf16 %v71
  %v176 = vunpack.c.h.s8.bf16 %v71
  %v177 = vunpack.c.l.s8.bf16 %v72
  %v178 = vunpack.c.h.s8.bf16 %v72
  %v179 = vunpack.c.l.s8.bf16 %v73
  %v180 = vunpack.c.h.s8.bf16 %v73
  %v181 = vunpack.c.l.s8.bf16 %v74
  %v182 = vunpack.c.h.s8.bf16 %v74
  %v183 = vunpack.c.l.s8.bf16 %v75
  %v184 = vunpack.c.h.s8.bf16 %v75
  %v185 = vunpack.c.l.s8.bf16 %v76
  %v186 = vunpack.c.h.s8.bf16 %v76
  %v187 = vunpack.c.l.s8.bf16 %v77
  %v188 = vunpack.c.h.s8.bf16 %v77
  %v189 = vunpack.c.l.s8.bf16 %v78
  %v190 = vunpack.c.h.s8.bf16 %v78
  %v191 = vunpack.c.l.s8.bf16 %v79
  %v192 = vunpack.c.h.s8.bf16 %v79
  %v193 = vunpack.c.l.s8.bf16 %v80
  %v194 = vunpack.c.h.s8.bf16 %v80
  %v195 = vunpack.c.l.s8.bf16 %v81
  %v196 = vunpack.c.h.s8.bf16 %v81
  %v197 = vunpack.c.l.s8.bf16 %v82
  %v198 = vunpack.c.h.s8.bf16 %v82
  %v199 = vunpack.c.l.s8.bf16 %v83
  %v200 = vunpack.c.h.s8.bf16 %v83
  %v201 = vunpack.c.l.s8.bf16 %v84
  %v202 = vunpack.c.h.s8.bf16 %v84
  %v203 = vunpack.c.l.s8.bf16 %v85
  %v204 = vunpack.c.h.s8.bf16 %v85
  %v205 = vunpack.c.l.s8.bf16 %v86
  %v206 = vunpack.c.h.s8.bf16 %v86
  %v207 = vunpack.c.l.s8.bf16 %v87
  %v208 = vunpack.c.h.s8.bf16 %v87
  %v209 = vunpack.c.l.s8.bf16 %v88
  %v210 = vunpack.c.h.s8.bf16 %v88
  %v211 = vunpack.c.l.s8.bf16 %v89
  %v212 = vunpack.c.h.s8.bf16 %v89
  %v213 = vunpack.c.l.s8.bf16 %v90
  %v214 = vunpack.c.h.s8.bf16 %v90
  %v215 = vunpack.c.l.s8.bf16 %v91
  %v216 = vunpack.c.h.s8.bf16 %v91
  %v217 = vunpack.c.l.s8.bf16 %v92
  %v218 = vunpack.c.h.s8.bf16 %v92
  %v219 = vunpack.c.l.s8.bf16 %v93
  %v220 = vunpack.c.h.s8.bf16 %v93
  %v221 = vunpack.c.l.s8.bf16 %v94
  %v222 = vunpack.c.h.s8.bf16 %v94
  %v223 = vld [vmem:[%s2] sm:$0xf]
  %v224 = vld [vmem:[%s2 + $0x4] sm:$0xf]
  %v225 = vld [vmem:[%s2 + $0x8] sm:$0xf]
  %v226 = vld [vmem:[%s2 + $0xc] sm:$0xf]
  %v227 = vld [vmem:[%s2 + $0x10] sm:$0xf]
  %v228 = vld [vmem:[%s2 + $0x14] sm:$0xf]
  %v229 = vld [vmem:[%s2 + $0x18] sm:$0xf]
  %v230 = vld [vmem:[%s2 + $0x1c] sm:$0xf]
  %v231 = vld [vmem:[%s2 + $0x20] sm:$0xf]
  %v232 = vld [vmem:[%s2 + $0x24] sm:$0xf]
  %v233 = vld [vmem:[%s2 + $0x28] sm:$0xf]
  %v234 = vld [vmem:[%s2 + $0x2c] sm:$0xf]
  %v235 = vld [vmem:[%s2 + $0x30] sm:$0xf]
  %v236 = vld [vmem:[%s2 + $0x34] sm:$0xf]
  %v237 = vld [vmem:[%s2 + $0x38] sm:$0xf]
  %v238 = vld [vmem:[%s2 + $0x3c] sm:$0xf]
  %v239 = vld [vmem:[%s2 + $0x40] sm:$0xf]
  %v240 = vld [vmem:[%s2 + $0x44] sm:$0xf]
  %v241 = vld [vmem:[%s2 + $0x48] sm:$0xf]
  %v242 = vld [vmem:[%s2 + $0x4c] sm:$0xf]
  %v243 = vld [vmem:[%s2 + $0x50] sm:$0xf]
  %v244 = vld [vmem:[%s2 + $0x54] sm:$0xf]
  %v245 = vld [vmem:[%s2 + $0x58] sm:$0xf]
  %v246 = vld [vmem:[%s2 + $0x5c] sm:$0xf]
  %v247 = vld [vmem:[%s2 + $0x60] sm:$0xf]
  %v248 = vld [vmem:[%s2 + $0x64] sm:$0xf]
  %v249 = vld [vmem:[%s2 + $0x68] sm:$0xf]
  %v250 = vld [vmem:[%s2 + $0x6c] sm:$0xf]
  %v251 = vld [vmem:[%s2 + $0x70] sm:$0xf]
  %v252 = vld [vmem:[%s2 + $0x74] sm:$0xf]
  %v253 = vld [vmem:[%s2 + $0x78] sm:$0xf]
  %v254 = vld [vmem:[%s2 + $0x7c] sm:$0xf]
  %v255 = vld [vmem:[%s2 + $0x80] sm:$0xf]
  %v256 = vld [vmem:[%s2 + $0x84] sm:$0xf]
  %v257 = vld [vmem:[%s2 + $0x88] sm:$0xf]
  %v258 = vld [vmem:[%s2 + $0x8c] sm:$0xf]
  %v259 = vld [vmem:[%s2 + $0x90] sm:$0xf]
  %v260 = vld [vmem:[%s2 + $0x94] sm:$0xf]
  %v261 = vld [vmem:[%s2 + $0x98] sm:$0xf]
  %v262 = vld [vmem:[%s2 + $0x9c] sm:$0xf]
  %v263 = vld [vmem:[%s2 + $0xa0] sm:$0xf]
  %v264 = vld [vmem:[%s2 + $0xa4] sm:$0xf]
  %v265 = vld [vmem:[%s2 + $0xa8] sm:$0xf]
  %v266 = vld [vmem:[%s2 + $0xac] sm:$0xf]
  %v267 = vld [vmem:[%s2 + $0xb0] sm:$0xf]
  %v268 = vld [vmem:[%s2 + $0xb4] sm:$0xf]
  %v269 = vld [vmem:[%s2 + $0xb8] sm:$0xf]
  %v270 = vld [vmem:[%s2 + $0xbc] sm:$0xf]
  %v271 = vld [vmem:[%s2 + $0xc0] sm:$0xf]
  %v272 = vld [vmem:[%s2 + $0xc4] sm:$0xf]
  %v273 = vld [vmem:[%s2 + $0xc8] sm:$0xf]
  %v274 = vld [vmem:[%s2 + $0xcc] sm:$0xf]
  %v275 = vld [vmem:[%s2 + $0xd0] sm:$0xf]
  %v276 = vld [vmem:[%s2 + $0xd4] sm:$0xf]
  %v277 = vld [vmem:[%s2 + $0xd8] sm:$0xf]
  %v278 = vld [vmem:[%s2 + $0xdc] sm:$0xf]
  %v279 = vld [vmem:[%s2 + $0xe0] sm:$0xf]
  %v280 = vld [vmem:[%s2 + $0xe4] sm:$0xf]
  %v281 = vld [vmem:[%s2 + $0xe8] sm:$0xf]
  %v282 = vld [vmem:[%s2 + $0xec] sm:$0xf]
  %v283 = vld [vmem:[%s2 + $0xf0] sm:$0xf]
  %v284 = vld [vmem:[%s2 + $0xf4] sm:$0xf]
  %v285 = vld [vmem:[%s2 + $0xf8] sm:$0xf]
  %v286 = vld [vmem:[%s2 + $0xfc] sm:$0xf]
  %v415 = vunpack.c.l.b16 %v95
  %v416 = vunpack.c.h.b16 %v95
  %v417 = vunpack.c.l.b16 %v96
  %v418 = vunpack.c.h.b16 %v96
  %v419 = vunpack.c.l.b16 %v97
  %v420 = vunpack.c.h.b16 %v97
  %v421 = vunpack.c.l.b16 %v98
  %v422 = vunpack.c.h.b16 %v98
  %v423 = vunpack.c.l.b16 %v99
  %v424 = vunpack.c.h.b16 %v99
  %v425 = vunpack.c.l.b16 %v100
  %v426 = vunpack.c.h.b16 %v100
  %v427 = vunpack.c.l.b16 %v101
  %v428 = vunpack.c.h.b16 %v101
  %v429 = vunpack.c.l.b16 %v102
  %v430 = vunpack.c.h.b16 %v102
  %v431 = vunpack.c.l.b16 %v103
  %v432 = vunpack.c.h.b16 %v103
  %v433 = vunpack.c.l.b16 %v104
  %v434 = vunpack.c.h.b16 %v104
  %v435 = vunpack.c.l.b16 %v105
  %v436 = vunpack.c.h.b16 %v105
  %v437 = vunpack.c.l.b16 %v106
  %v438 = vunpack.c.h.b16 %v106
  %v439 = vunpack.c.l.b16 %v107
  %v440 = vunpack.c.h.b16 %v107
  %v441 = vunpack.c.l.b16 %v108
  %v442 = vunpack.c.h.b16 %v108
  %v443 = vunpack.c.l.b16 %v109
  %v444 = vunpack.c.h.b16 %v109
  %v445 = vunpack.c.l.b16 %v110
  %v446 = vunpack.c.h.b16 %v110
  %v447 = vunpack.c.l.b16 %v111
  %v448 = vunpack.c.h.b16 %v111
  %v449 = vunpack.c.l.b16 %v112
  %v450 = vunpack.c.h.b16 %v112
  %v451 = vunpack.c.l.b16 %v113
  %v452 = vunpack.c.h.b16 %v113
  %v453 = vunpack.c.l.b16 %v114
  %v454 = vunpack.c.h.b16 %v114
  %v455 = vunpack.c.l.b16 %v115
  %v456 = vunpack.c.h.b16 %v115
  %v457 = vunpack.c.l.b16 %v116
  %v458 = vunpack.c.h.b16 %v116
  %v459 = vunpack.c.l.b16 %v117
  %v460 = vunpack.c.h.b16 %v117
  %v461 = vunpack.c.l.b16 %v118
  %v462 = vunpack.c.h.b16 %v118
  %v463 = vunpack.c.l.b16 %v119
  %v464 = vunpack.c.h.b16 %v119
  %v465 = vunpack.c.l.b16 %v120
  %v466 = vunpack.c.h.b16 %v120
  %v467 = vunpack.c.l.b16 %v121
  %v468 = vunpack.c.h.b16 %v121
  %v469 = vunpack.c.l.b16 %v122
  %v470 = vunpack.c.h.b16 %v122
  %v471 = vunpack.c.l.b16 %v123
  %v472 = vunpack.c.h.b16 %v123
  %v473 = vunpack.c.l.b16 %v124
  %v474 = vunpack.c.h.b16 %v124
  %v475 = vunpack.c.l.b16 %v125
  %v476 = vunpack.c.h.b16 %v125
  %v477 = vunpack.c.l.b16 %v126
  %v478 = vunpack.c.h.b16 %v126
  %v479 = vunpack.c.l.b16 %v127
  %v480 = vunpack.c.h.b16 %v127
  %v481 = vunpack.c.l.b16 %v128
  %v482 = vunpack.c.h.b16 %v128
  %v483 = vunpack.c.l.b16 %v129
  %v484 = vunpack.c.h.b16 %v129
  %v485 = vunpack.c.l.b16 %v130
  %v486 = vunpack.c.h.b16 %v130
  %v487 = vunpack.c.l.b16 %v131
  %v488 = vunpack.c.h.b16 %v131
  %v489 = vunpack.c.l.b16 %v132
  %v490 = vunpack.c.h.b16 %v132
  %v491 = vunpack.c.l.b16 %v133
  %v492 = vunpack.c.h.b16 %v133
  %v493 = vunpack.c.l.b16 %v134
  %v494 = vunpack.c.h.b16 %v134
  %v495 = vunpack.c.l.b16 %v135
  %v496 = vunpack.c.h.b16 %v135
  %v497 = vunpack.c.l.b16 %v136
  %v498 = vunpack.c.h.b16 %v136
  %v499 = vunpack.c.l.b16 %v137
  %v500 = vunpack.c.h.b16 %v137
  %v501 = vunpack.c.l.b16 %v138
  %v502 = vunpack.c.h.b16 %v138
  %v503 = vunpack.c.l.b16 %v139
  %v504 = vunpack.c.h.b16 %v139
  %v505 = vunpack.c.l.b16 %v140
  %v506 = vunpack.c.h.b16 %v140
  %v507 = vunpack.c.l.b16 %v141
  %v508 = vunpack.c.h.b16 %v141
  %v509 = vunpack.c.l.b16 %v142
  %v510 = vunpack.c.h.b16 %v142
  %v511 = vunpack.c.l.b16 %v143
  %v512 = vunpack.c.h.b16 %v143
  %v513 = vunpack.c.l.b16 %v144
  %v514 = vunpack.c.h.b16 %v144
  %v515 = vunpack.c.l.b16 %v145
  %v516 = vunpack.c.h.b16 %v145
  %v517 = vunpack.c.l.b16 %v146
  %v518 = vunpack.c.h.b16 %v146
  %v519 = vunpack.c.l.b16 %v147
  %v520 = vunpack.c.h.b16 %v147
  %v521 = vunpack.c.l.b16 %v148
  %v522 = vunpack.c.h.b16 %v148
  %v523 = vunpack.c.l.b16 %v149
  %v524 = vunpack.c.h.b16 %v149
  %v525 = vunpack.c.l.b16 %v150
  %v526 = vunpack.c.h.b16 %v150
  %v527 = vunpack.c.l.b16 %v151
  %v528 = vunpack.c.h.b16 %v151
  %v529 = vunpack.c.l.b16 %v152
  %v530 = vunpack.c.h.b16 %v152
  %v531 = vunpack.c.l.b16 %v153
  %v532 = vunpack.c.h.b16 %v153
  %v533 = vunpack.c.l.b16 %v154
  %v534 = vunpack.c.h.b16 %v154
  %v535 = vunpack.c.l.b16 %v155
  %v536 = vunpack.c.h.b16 %v155
  %v537 = vunpack.c.l.b16 %v156
  %v538 = vunpack.c.h.b16 %v156
  %v539 = vunpack.c.l.b16 %v157
  %v540 = vunpack.c.h.b16 %v157
  %v541 = vunpack.c.l.b16 %v158
  %v542 = vunpack.c.h.b16 %v158
  %v543 = vunpack.c.l.b16 %v159
  %v544 = vunpack.c.h.b16 %v159
  %v545 = vunpack.c.l.b16 %v160
  %v546 = vunpack.c.h.b16 %v160
  %v547 = vunpack.c.l.b16 %v161
  %v548 = vunpack.c.h.b16 %v161
  %v549 = vunpack.c.l.b16 %v162
  %v550 = vunpack.c.h.b16 %v162
  %v551 = vunpack.c.l.b16 %v163
  %v552 = vunpack.c.h.b16 %v163
  %v553 = vunpack.c.l.b16 %v164
  %v554 = vunpack.c.h.b16 %v164
  %v555 = vunpack.c.l.b16 %v165
  %v556 = vunpack.c.h.b16 %v165
  %v557 = vunpack.c.l.b16 %v166
  %v558 = vunpack.c.h.b16 %v166
  %v559 = vunpack.c.l.b16 %v167
  %v560 = vunpack.c.h.b16 %v167
  %v561 = vunpack.c.l.b16 %v168
  %v562 = vunpack.c.h.b16 %v168
  %v563 = vunpack.c.l.b16 %v169
  %v564 = vunpack.c.h.b16 %v169
  %v565 = vunpack.c.l.b16 %v170
  %v566 = vunpack.c.h.b16 %v170
  %v567 = vunpack.c.l.b16 %v171
  %v568 = vunpack.c.h.b16 %v171
  %v569 = vunpack.c.l.b16 %v172
  %v570 = vunpack.c.h.b16 %v172
  %v571 = vunpack.c.l.b16 %v173
  %v572 = vunpack.c.h.b16 %v173
  %v573 = vunpack.c.l.b16 %v174
  %v574 = vunpack.c.h.b16 %v174
  %v575 = vunpack.c.l.b16 %v175
  %v576 = vunpack.c.h.b16 %v175
  %v577 = vunpack.c.l.b16 %v176
  %v578 = vunpack.c.h.b16 %v176
  %v579 = vunpack.c.l.b16 %v177
  %v580 = vunpack.c.h.b16 %v177
  %v581 = vunpack.c.l.b16 %v178
  %v582 = vunpack.c.h.b16 %v178
  %v583 = vunpack.c.l.b16 %v179
  %v584 = vunpack.c.h.b16 %v179
  %v585 = vunpack.c.l.b16 %v180
  %v586 = vunpack.c.h.b16 %v180
  %v587 = vunpack.c.l.b16 %v181
  %v588 = vunpack.c.h.b16 %v181
  %v589 = vunpack.c.l.b16 %v182
  %v590 = vunpack.c.h.b16 %v182
  %v591 = vunpack.c.l.b16 %v183
  %v592 = vunpack.c.h.b16 %v183
  %v593 = vunpack.c.l.b16 %v184
  %v594 = vunpack.c.h.b16 %v184
  %v595 = vunpack.c.l.b16 %v185
  %v596 = vunpack.c.h.b16 %v185
  %v597 = vunpack.c.l.b16 %v186
  %v598 = vunpack.c.h.b16 %v186
  %v599 = vunpack.c.l.b16 %v187
  %v600 = vunpack.c.h.b16 %v187
  %v601 = vunpack.c.l.b16 %v188
  %v602 = vunpack.c.h.b16 %v188
  %v603 = vunpack.c.l.b16 %v189
  %v604 = vunpack.c.h.b16 %v189
  %v605 = vunpack.c.l.b16 %v190
  %v606 = vunpack.c.h.b16 %v190
  %v607 = vunpack.c.l.b16 %v191
  %v608 = vunpack.c.h.b16 %v191
  %v609 = vunpack.c.l.b16 %v192
  %v610 = vunpack.c.h.b16 %v192
  %v611 = vunpack.c.l.b16 %v193
  %v612 = vunpack.c.h.b16 %v193
  %v613 = vunpack.c.l.b16 %v194
  %v614 = vunpack.c.h.b16 %v194
  %v615 = vunpack.c.l.b16 %v195
  %v616 = vunpack.c.h.b16 %v195
  %v617 = vunpack.c.l.b16 %v196
  %v618 = vunpack.c.h.b16 %v196
  %v619 = vunpack.c.l.b16 %v197
  %v620 = vunpack.c.h.b16 %v197
  %v621 = vunpack.c.l.b16 %v198
  %v622 = vunpack.c.h.b16 %v198
  %v623 = vunpack.c.l.b16 %v199
  %v624 = vunpack.c.h.b16 %v199
  %v625 = vunpack.c.l.b16 %v200
  %v626 = vunpack.c.h.b16 %v200
  %v627 = vunpack.c.l.b16 %v201
  %v628 = vunpack.c.h.b16 %v201
  %v629 = vunpack.c.l.b16 %v202
  %v630 = vunpack.c.h.b16 %v202
  %v631 = vunpack.c.l.b16 %v203
  %v632 = vunpack.c.h.b16 %v203
  %v633 = vunpack.c.l.b16 %v204
  %v634 = vunpack.c.h.b16 %v204
  %v635 = vunpack.c.l.b16 %v205
  %v636 = vunpack.c.h.b16 %v205
  %v637 = vunpack.c.l.b16 %v206
  %v638 = vunpack.c.h.b16 %v206
  %v639 = vunpack.c.l.b16 %v207
  %v640 = vunpack.c.h.b16 %v207
  %v641 = vunpack.c.l.b16 %v208
  %v642 = vunpack.c.h.b16 %v208
  %v643 = vunpack.c.l.b16 %v209
  %v644 = vunpack.c.h.b16 %v209
  %v645 = vunpack.c.l.b16 %v210
  %v646 = vunpack.c.h.b16 %v210
  %v647 = vunpack.c.l.b16 %v211
  %v648 = vunpack.c.h.b16 %v211
  %v649 = vunpack.c.l.b16 %v212
  %v650 = vunpack.c.h.b16 %v212
  %v651 = vunpack.c.l.b16 %v213
  %v652 = vunpack.c.h.b16 %v213
  %v653 = vunpack.c.l.b16 %v214
  %v654 = vunpack.c.h.b16 %v214
  %v655 = vunpack.c.l.b16 %v215
  %v656 = vunpack.c.h.b16 %v215
  %v657 = vunpack.c.l.b16 %v216
  %v658 = vunpack.c.h.b16 %v216
  %v659 = vunpack.c.l.b16 %v217
  %v660 = vunpack.c.h.b16 %v217
  %v661 = vunpack.c.l.b16 %v218
  %v662 = vunpack.c.h.b16 %v218
  %v663 = vunpack.c.l.b16 %v219
  %v664 = vunpack.c.h.b16 %v219
  %v665 = vunpack.c.l.b16 %v220
  %v666 = vunpack.c.h.b16 %v220
  %v667 = vunpack.c.l.b16 %v221
  %v668 = vunpack.c.h.b16 %v221
  %v669 = vunpack.c.l.b16 %v222
  %v670 = vunpack.c.h.b16 %v222
  %v671 = vpack.c.b16 %v419, %v415
  %v672 = vpack.c.b16 %v420, %v416
  %v673 = vpack.c.b16 %v421, %v417
  %v674 = vpack.c.b16 %v422, %v418
  %v675 = vpack.c.b16 %v427, %v423
  %v676 = vpack.c.b16 %v428, %v424
  %v677 = vpack.c.b16 %v429, %v425
  %v678 = vpack.c.b16 %v430, %v426
  %v679 = vpack.c.b16 %v435, %v431
  %v680 = vpack.c.b16 %v436, %v432
  %v681 = vpack.c.b16 %v437, %v433
  %v682 = vpack.c.b16 %v438, %v434
  %v683 = vpack.c.b16 %v443, %v439
  %v684 = vpack.c.b16 %v444, %v440
  %v685 = vpack.c.b16 %v445, %v441
  %v686 = vpack.c.b16 %v446, %v442
  %v687 = vpack.c.b16 %v451, %v447
  %v688 = vpack.c.b16 %v452, %v448
  %v689 = vpack.c.b16 %v453, %v449
  %v690 = vpack.c.b16 %v454, %v450
  %v691 = vpack.c.b16 %v459, %v455
  %v692 = vpack.c.b16 %v460, %v456
  %v693 = vpack.c.b16 %v461, %v457
  %v694 = vpack.c.b16 %v462, %v458
  %v695 = vpack.c.b16 %v467, %v463
  %v696 = vpack.c.b16 %v468, %v464
  %v697 = vpack.c.b16 %v469, %v465
  %v698 = vpack.c.b16 %v470, %v466
  %v699 = vpack.c.b16 %v475, %v471
  %v700 = vpack.c.b16 %v476, %v472
  %v701 = vpack.c.b16 %v477, %v473
  %v702 = vpack.c.b16 %v478, %v474
  %v703 = vpack.c.b16 %v483, %v479
  %v704 = vpack.c.b16 %v484, %v480
  %v705 = vpack.c.b16 %v485, %v481
  %v706 = vpack.c.b16 %v486, %v482
  %v707 = vpack.c.b16 %v491, %v487
  %v708 = vpack.c.b16 %v492, %v488
  %v709 = vpack.c.b16 %v493, %v489
  %v710 = vpack.c.b16 %v494, %v490
  %v711 = vpack.c.b16 %v499, %v495
  %v712 = vpack.c.b16 %v500, %v496
  %v713 = vpack.c.b16 %v501, %v497
  %v714 = vpack.c.b16 %v502, %v498
  %v715 = vpack.c.b16 %v507, %v503
  %v716 = vpack.c.b16 %v508, %v504
  %v717 = vpack.c.b16 %v509, %v505
  %v718 = vpack.c.b16 %v510, %v506
  %v719 = vpack.c.b16 %v515, %v511
  %v720 = vpack.c.b16 %v516, %v512
  %v721 = vpack.c.b16 %v517, %v513
  %v722 = vpack.c.b16 %v518, %v514
  %v723 = vpack.c.b16 %v523, %v519
  %v724 = vpack.c.b16 %v524, %v520
  %v725 = vpack.c.b16 %v525, %v521
  %v726 = vpack.c.b16 %v526, %v522
  %v727 = vpack.c.b16 %v531, %v527
  %v728 = vpack.c.b16 %v532, %v528
  %v729 = vpack.c.b16 %v533, %v529
  %v730 = vpack.c.b16 %v534, %v530
  %v731 = vpack.c.b16 %v539, %v535
  %v732 = vpack.c.b16 %v540, %v536
  %v733 = vpack.c.b16 %v541, %v537
  %v734 = vpack.c.b16 %v542, %v538
  %v735 = vpack.c.b16 %v547, %v543
  %v736 = vpack.c.b16 %v548, %v544
  %v737 = vpack.c.b16 %v549, %v545
  %v738 = vpack.c.b16 %v550, %v546
  %v739 = vpack.c.b16 %v555, %v551
  %v740 = vpack.c.b16 %v556, %v552
  %v741 = vpack.c.b16 %v557, %v553
  %v742 = vpack.c.b16 %v558, %v554
  %v743 = vpack.c.b16 %v563, %v559
  %v744 = vpack.c.b16 %v564, %v560
  %v745 = vpack.c.b16 %v565, %v561
  %v746 = vpack.c.b16 %v566, %v562
  %v747 = vpack.c.b16 %v571, %v567
  %v748 = vpack.c.b16 %v572, %v568
  %v749 = vpack.c.b16 %v573, %v569
  %v750 = vpack.c.b16 %v574, %v570
  %v751 = vpack.c.b16 %v579, %v575
  %v752 = vpack.c.b16 %v580, %v576
  %v753 = vpack.c.b16 %v581, %v577
  %v754 = vpack.c.b16 %v582, %v578
  %v755 = vpack.c.b16 %v587, %v583
  %v756 = vpack.c.b16 %v588, %v584
  %v757 = vpack.c.b16 %v589, %v585
  %v758 = vpack.c.b16 %v590, %v586
  %v759 = vpack.c.b16 %v595, %v591
  %v760 = vpack.c.b16 %v596, %v592
  %v761 = vpack.c.b16 %v597, %v593
  %v762 = vpack.c.b16 %v598, %v594
  %v763 = vpack.c.b16 %v603, %v599
  %v764 = vpack.c.b16 %v604, %v600
  %v765 = vpack.c.b16 %v605, %v601
  %v766 = vpack.c.b16 %v606, %v602
  %v767 = vpack.c.b16 %v611, %v607
  %v768 = vpack.c.b16 %v612, %v608
  %v769 = vpack.c.b16 %v613, %v609
  %v770 = vpack.c.b16 %v614, %v610
  %v771 = vpack.c.b16 %v619, %v615
  %v772 = vpack.c.b16 %v620, %v616
  %v773 = vpack.c.b16 %v621, %v617
  %v774 = vpack.c.b16 %v622, %v618
  %v775 = vpack.c.b16 %v627, %v623
  %v776 = vpack.c.b16 %v628, %v624
  %v777 = vpack.c.b16 %v629, %v625
  %v778 = vpack.c.b16 %v630, %v626
  %v779 = vpack.c.b16 %v635, %v631
  %v780 = vpack.c.b16 %v636, %v632
  %v781 = vpack.c.b16 %v637, %v633
  %v782 = vpack.c.b16 %v638, %v634
  %v783 = vpack.c.b16 %v643, %v639
  %v784 = vpack.c.b16 %v644, %v640
  %v785 = vpack.c.b16 %v645, %v641
  %v786 = vpack.c.b16 %v646, %v642
  %v787 = vpack.c.b16 %v651, %v647
  %v788 = vpack.c.b16 %v652, %v648
  %v789 = vpack.c.b16 %v653, %v649
  %v790 = vpack.c.b16 %v654, %v650
  %v791 = vpack.c.b16 %v659, %v655
  %v792 = vpack.c.b16 %v660, %v656
  %v793 = vpack.c.b16 %v661, %v657
  %v794 = vpack.c.b16 %v662, %v658
  %v795 = vpack.c.b16 %v667, %v663
  %v796 = vpack.c.b16 %v668, %v664
  %v797 = vpack.c.b16 %v669, %v665
  %v798 = vpack.c.b16 %v670, %v666
  %v991 = vunpack.c.l.b16 %v223
  %v992 = vunpack.c.l.b16 %v224
  %v993 = vunpack.c.l.b16 %v225
  %v994 = vunpack.c.l.b16 %v226
  %v995 = vunpack.c.l.b16 %v227
  %v996 = vunpack.c.l.b16 %v228
  %v997 = vunpack.c.l.b16 %v229
  %v998 = vunpack.c.l.b16 %v230
  %v999 = vunpack.c.l.b16 %v231
  %v1000 = vunpack.c.l.b16 %v232
  %v1001 = vunpack.c.l.b16 %v233
  %v1002 = vunpack.c.l.b16 %v234
  %v1003 = vunpack.c.l.b16 %v235
  %v1004 = vunpack.c.l.b16 %v236
  %v1005 = vunpack.c.l.b16 %v237
  %v1006 = vunpack.c.l.b16 %v238
  %v1007 = vunpack.c.l.b16 %v239
  %v1008 = vunpack.c.l.b16 %v240
  %v1009 = vunpack.c.l.b16 %v241
  %v1010 = vunpack.c.l.b16 %v242
  %v1011 = vunpack.c.l.b16 %v243
  %v1012 = vunpack.c.l.b16 %v244
  %v1013 = vunpack.c.l.b16 %v245
  %v1014 = vunpack.c.l.b16 %v246
  %v1015 = vunpack.c.l.b16 %v247
  %v1016 = vunpack.c.l.b16 %v248
  %v1017 = vunpack.c.l.b16 %v249
  %v1018 = vunpack.c.l.b16 %v250
  %v1019 = vunpack.c.l.b16 %v251
  %v1020 = vunpack.c.l.b16 %v252
  %v1021 = vunpack.c.l.b16 %v253
  %v1022 = vunpack.c.l.b16 %v254
  %v1023 = vunpack.c.l.b16 %v255
  %v1024 = vunpack.c.l.b16 %v256
  %v1025 = vunpack.c.l.b16 %v257
  %v1026 = vunpack.c.l.b16 %v258
  %v1027 = vunpack.c.l.b16 %v259
  %v1028 = vunpack.c.l.b16 %v260
  %v1029 = vunpack.c.l.b16 %v261
  %v1030 = vunpack.c.l.b16 %v262
  %v1031 = vunpack.c.l.b16 %v263
  %v1032 = vunpack.c.l.b16 %v264
  %v1033 = vunpack.c.l.b16 %v265
  %v1034 = vunpack.c.l.b16 %v266
  %v1035 = vunpack.c.l.b16 %v267
  %v1036 = vunpack.c.l.b16 %v268
  %v1037 = vunpack.c.l.b16 %v269
  %v1038 = vunpack.c.l.b16 %v270
  %v1039 = vunpack.c.l.b16 %v271
  %v1040 = vunpack.c.l.b16 %v272
  %v1041 = vunpack.c.l.b16 %v273
  %v1042 = vunpack.c.l.b16 %v274
  %v1043 = vunpack.c.l.b16 %v275
  %v1044 = vunpack.c.l.b16 %v276
  %v1045 = vunpack.c.l.b16 %v277
  %v1046 = vunpack.c.l.b16 %v278
  %v1047 = vunpack.c.l.b16 %v279
  %v1048 = vunpack.c.l.b16 %v280
  %v1049 = vunpack.c.l.b16 %v281
  %v1050 = vunpack.c.l.b16 %v282
  %v1051 = vunpack.c.l.b16 %v283
  %v1052 = vunpack.c.l.b16 %v284
  %v1053 = vunpack.c.l.b16 %v285
  %v1054 = vunpack.c.l.b16 %v286
  %v1055 = vpack.c.b16 %v992, %v991
  %v1056 = vpack.c.b16 %v994, %v993
  %v1057 = vpack.c.b16 %v996, %v995
  %v1058 = vpack.c.b16 %v998, %v997
  %v1059 = vpack.c.b16 %v1000, %v999
  %v1060 = vpack.c.b16 %v1002, %v1001
  %v1061 = vpack.c.b16 %v1004, %v1003
  %v1062 = vpack.c.b16 %v1006, %v1005
  %v1063 = vpack.c.b16 %v1008, %v1007
  %v1064 = vpack.c.b16 %v1010, %v1009
  %v1065 = vpack.c.b16 %v1012, %v1011
  %v1066 = vpack.c.b16 %v1014, %v1013
  %v1067 = vpack.c.b16 %v1016, %v1015
  %v1068 = vpack.c.b16 %v1018, %v1017
  %v1069 = vpack.c.b16 %v1020, %v1019
  %v1070 = vpack.c.b16 %v1022, %v1021
  %v1071 = vpack.c.b16 %v1024, %v1023
  %v1072 = vpack.c.b16 %v1026, %v1025
  %v1073 = vpack.c.b16 %v1028, %v1027
  %v1074 = vpack.c.b16 %v1030, %v1029
  %v1075 = vpack.c.b16 %v1032, %v1031
  %v1076 = vpack.c.b16 %v1034, %v1033
  %v1077 = vpack.c.b16 %v1036, %v1035
  %v1078 = vpack.c.b16 %v1038, %v1037
  %v1079 = vpack.c.b16 %v1040, %v1039
  %v1080 = vpack.c.b16 %v1042, %v1041
  %v1081 = vpack.c.b16 %v1044, %v1043
  %v1082 = vpack.c.b16 %v1046, %v1045
  %v1083 = vpack.c.b16 %v1048, %v1047
  %v1084 = vpack.c.b16 %v1050, %v1049
  %v1085 = vpack.c.b16 %v1052, %v1051
  %v1086 = vpack.c.b16 %v1054, %v1053
  %1119 = vmatprep.subr.bf16.mxu0 0
  %1120 = vmatpush1.bf16.msra.mxu0 %v1055
  %1121 = vmatprep.subr.bf16.mxu0 0
  %1122 = vmatpush1.bf16.msra.mxu0 %v1056
  %1123 = vmatprep.subr.bf16.mxu0 0
  %1124 = vmatpush1.bf16.msra.mxu0 %v1057
  %1125 = vmatprep.subr.bf16.mxu0 0
  %1126 = vmatpush1.bf16.msra.mxu0 %v1058
  %1127 = vmatprep.subr.bf16.mxu0 0
  %1128 = vmatpush1.bf16.msra.mxu0 %v1059
  %1129 = vmatprep.subr.bf16.mxu0 0
  %1130 = vmatpush1.bf16.msra.mxu0 %v1060
  %1131 = vmatprep.subr.bf16.mxu0 0
  %1132 = vmatpush1.bf16.msra.mxu0 %v1061
  %1133 = vmatprep.subr.bf16.mxu0 0
  %1134 = vmatpush1.bf16.msra.mxu0 %v1062
  %1135 = vmatprep.subr.bf16.mxu0 0
  %1136 = vmatpush1.bf16.msra.mxu0 %v1063
  %1137 = vmatprep.subr.bf16.mxu0 0
  %1138 = vmatpush1.bf16.msra.mxu0 %v1064
  %1139 = vmatprep.subr.bf16.mxu0 0
  %1140 = vmatpush1.bf16.msra.mxu0 %v1065
  %1141 = vmatprep.subr.bf16.mxu0 0
  %1142 = vmatpush1.bf16.msra.mxu0 %v1066
  %1143 = vmatprep.subr.bf16.mxu0 0
  %1144 = vmatpush1.bf16.msra.mxu0 %v1067
  %1145 = vmatprep.subr.bf16.mxu0 0
  %1146 = vmatpush1.bf16.msra.mxu0 %v1068
  %1147 = vmatprep.subr.bf16.mxu0 0
  %1148 = vmatpush1.bf16.msra.mxu0 %v1069
  %1149 = vmatprep.subr.bf16.mxu0 0
  %1150 = vmatpush1.bf16.msra.mxu0 %v1070
  %1151 = vmatprep.mubr.bf16.mxu0 %v672
  %1152 = vmatmul.mubr.bf16.gmra.mrb[0].mxu0 %v671
  %v1153 = vpop.f32.mrb[0].mxu0
  %v1154 = vadd.f32 0.0, %v1153
  %v1155 = vpop.f32.mrb[0].mxu0
  %v1156 = vpop.f32.mrb[0].mxu0
  %v1157 = vadd.f32 0.0, %v1156
  %v1158 = vpop.f32.mrb[0].mxu0
  %1159 = vmatprep.mubr.bf16.mxu0 %v676
  %1160 = vmatmul.mubr.bf16.gmra.mrb[0].mxu0 %v675
  %v1161 = vpop.f32.mrb[0].mxu0
  %v1162 = vadd.f32 0.0, %v1161
  %v1163 = vpop.f32.mrb[0].mxu0
  %v1164 = vpop.f32.mrb[0].mxu0
  %v1165 = vadd.f32 0.0, %v1164
  %v1166 = vpop.f32.mrb[0].mxu0
  %1167 = vmatprep.mubr.bf16.mxu0 %v680
  %1168 = vmatmul.mubr.bf16.gmra.mrb[0].mxu0 %v679
  %v1169 = vpop.f32.mrb[0].mxu0
  %v1170 = vadd.f32 0.0, %v1169
  %v1171 = vpop.f32.mrb[0].mxu0
  %v1172 = vpop.f32.mrb[0].mxu0
  %v1173 = vadd.f32 0.0, %v1172
  %v1174 = vpop.f32.mrb[0].mxu0
  %1175 = vmatprep.mubr.bf16.mxu0 %v684
  %1176 = vmatmul.mubr.bf16.gmra.mrb[0].mxu0 %v683
  %v1177 = vpop.f32.mrb[0].mxu0
  %v1178 = vadd.f32 0.0, %v1177
  %v1179 = vpop.f32.mrb[0].mxu0
  %v1180 = vpop.f32.mrb[0].mxu0
  %v1181 = vadd.f32 0.0, %v1180
  %v1182 = vpop.f32.mrb[0].mxu0
  %1183 = vmatprep.mubr.bf16.mxu0 %v688
  %1184 = vmatmul.mubr.bf16.gmra.mrb[0].mxu0 %v687
  %v1185 = vpop.f32.mrb[0].mxu0
  %v1186 = vadd.f32 0.0, %v1185
  %v1187 = vpop.f32.mrb[0].mxu0
  %v1188 = vpop.f32.mrb[0].mxu0
  %v1189 = vadd.f32 0.0, %v1188
  %v1190 = vpop.f32.mrb[0].mxu0
  %1191 = vmatprep.mubr.bf16.mxu0 %v692
  %1192 = vmatmul.mubr.bf16.gmra.mrb[0].mxu0 %v691
  %v1193 = vpop.f32.mrb[0].mxu0
  %v1194 = vadd.f32 0.0, %v1193
  %v1195 = vpop.f32.mrb[0].mxu0
  %v1196 = vpop.f32.mrb[0].mxu0
  %v1197 = vadd.f32 0.0, %v1196
  %v1198 = vpop.f32.mrb[0].mxu0
  %1199 = vmatprep.mubr.bf16.mxu0 %v696
  %1200 = vmatmul.mubr.bf16.gmra.mrb[0].mxu0 %v695
  %v1201 = vpop.f32.mrb[0].mxu0
  %v1202 = vadd.f32 0.0, %v1201
  %v1203 = vpop.f32.mrb[0].mxu0
  %v1204 = vpop.f32.mrb[0].mxu0
  %v1205 = vadd.f32 0.0, %v1204
  %v1206 = vpop.f32.mrb[0].mxu0
  %1207 = vmatprep.mubr.bf16.mxu0 %v700
  %1208 = vmatmul.mubr.bf16.gmra.mrb[0].mxu0 %v699
  %v1209 = vpop.f32.mrb[0].mxu0
  %v1210 = vadd.f32 0.0, %v1209
  %v1211 = vpop.f32.mrb[0].mxu0
  %v1212 = vpop.f32.mrb[0].mxu0
  %v1213 = vadd.f32 0.0, %v1212
  %v1214 = vpop.f32.mrb[0].mxu0
  %1215 = vmatprep.mubr.bf16.mxu0 %v704
  %1216 = vmatmul.mubr.bf16.gmra.mrb[0].mxu0 %v703
  %v1217 = vpop.f32.mrb[0].mxu0
  %v1218 = vadd.f32 0.0, %v1217
  %v1219 = vpop.f32.mrb[0].mxu0
  %v1220 = vpop.f32.mrb[0].mxu0
  %v1221 = vadd.f32 0.0, %v1220
  %v1222 = vpop.f32.mrb[0].mxu0
  %1223 = vmatprep.mubr.bf16.mxu0 %v708
  %1224 = vmatmul.mubr.bf16.gmra.mrb[0].mxu0 %v707
  %v1225 = vpop.f32.mrb[0].mxu0
  %v1226 = vadd.f32 0.0, %v1225
  %v1227 = vpop.f32.mrb[0].mxu0
  %v1228 = vpop.f32.mrb[0].mxu0
  %v1229 = vadd.f32 0.0, %v1228
  %v1230 = vpop.f32.mrb[0].mxu0
  %1231 = vmatprep.mubr.bf16.mxu0 %v712
  %1232 = vmatmul.mubr.bf16.gmra.mrb[0].mxu0 %v711
  %v1233 = vpop.f32.mrb[0].mxu0
  %v1234 = vadd.f32 0.0, %v1233
  %v1235 = vpop.f32.mrb[0].mxu0
  %v1236 = vpop.f32.mrb[0].mxu0
  %v1237 = vadd.f32 0.0, %v1236
  %v1238 = vpop.f32.mrb[0].mxu0
  %1239 = vmatprep.mubr.bf16.mxu0 %v716
  %1240 = vmatmul.mubr.bf16.gmra.mrb[0].mxu0 %v715
  %v1241 = vpop.f32.mrb[0].mxu0
  %v1242 = vadd.f32 0.0, %v1241
  %v1243 = vpop.f32.mrb[0].mxu0
  %v1244 = vpop.f32.mrb[0].mxu0
  %v1245 = vadd.f32 0.0, %v1244
  %v1246 = vpop.f32.mrb[0].mxu0
  %1247 = vmatprep.mubr.bf16.mxu0 %v720
  %1248 = vmatmul.mubr.bf16.gmra.mrb[0].mxu0 %v719
  %v1249 = vpop.f32.mrb[0].mxu0
  %v1250 = vadd.f32 0.0, %v1249
  %v1251 = vpop.f32.mrb[0].mxu0
  %v1252 = vpop.f32.mrb[0].mxu0
  %v1253 = vadd.f32 0.0, %v1252
  %v1254 = vpop.f32.mrb[0].mxu0
  %1255 = vmatprep.mubr.bf16.mxu0 %v724
  %1256 = vmatmul.mubr.bf16.gmra.mrb[0].mxu0 %v723
  %v1257 = vpop.f32.mrb[0].mxu0
  %v1258 = vadd.f32 0.0, %v1257
  %v1259 = vpop.f32.mrb[0].mxu0
  %v1260 = vpop.f32.mrb[0].mxu0
  %v1261 = vadd.f32 0.0, %v1260
  %v1262 = vpop.f32.mrb[0].mxu0
  %1263 = vmatprep.mubr.bf16.mxu0 %v728
  %1264 = vmatmul.mubr.bf16.gmra.mrb[0].mxu0 %v727
  %v1265 = vpop.f32.mrb[0].mxu0
  %v1266 = vadd.f32 0.0, %v1265
  %v1267 = vpop.f32.mrb[0].mxu0
  %v1268 = vpop.f32.mrb[0].mxu0
  %v1269 = vadd.f32 0.0, %v1268
  %v1270 = vpop.f32.mrb[0].mxu0
  %1271 = vmatprep.mubr.bf16.mxu0 %v732
  %1272 = vmatmul.mubr.bf16.gmra.mrb[0].mxu0 %v731
  %v1273 = vpop.f32.mrb[0].mxu0
  %v1274 = vadd.f32 0.0, %v1273
  %v1275 = vpop.f32.mrb[0].mxu0
  %v1276 = vpop.f32.mrb[0].mxu0
  %v1277 = vadd.f32 0.0, %v1276
  %v1278 = vpop.f32.mrb[0].mxu0
  %1279 = vmatprep.mubr.bf16.mxu0 %v736
  %1280 = vmatmul.mubr.bf16.gmra.mrb[0].mxu0 %v735
  %v1281 = vpop.f32.mrb[0].mxu0
  %v1282 = vadd.f32 0.0, %v1281
  %v1283 = vpop.f32.mrb[0].mxu0
  %v1284 = vpop.f32.mrb[0].mxu0
  %v1285 = vadd.f32 0.0, %v1284
  %v1286 = vpop.f32.mrb[0].mxu0
  %1287 = vmatprep.mubr.bf16.mxu0 %v740
  %1288 = vmatmul.mubr.bf16.gmra.mrb[0].mxu0 %v739
  %v1289 = vpop.f32.mrb[0].mxu0
  %v1290 = vadd.f32 0.0, %v1289
  %v1291 = vpop.f32.mrb[0].mxu0
  %v1292 = vpop.f32.mrb[0].mxu0
  %v1293 = vadd.f32 0.0, %v1292
  %v1294 = vpop.f32.mrb[0].mxu0
  %1295 = vmatprep.mubr.bf16.mxu0 %v744
  %1296 = vmatmul.mubr.bf16.gmra.mrb[0].mxu0 %v743
  %v1297 = vpop.f32.mrb[0].mxu0
  %v1298 = vadd.f32 0.0, %v1297
  %v1299 = vpop.f32.mrb[0].mxu0
  %v1300 = vpop.f32.mrb[0].mxu0
  %v1301 = vadd.f32 0.0, %v1300
  %v1302 = vpop.f32.mrb[0].mxu0
  %1303 = vmatprep.mubr.bf16.mxu0 %v748
  %1304 = vmatmul.mubr.bf16.gmra.mrb[0].mxu0 %v747
  %v1305 = vpop.f32.mrb[0].mxu0
  %v1306 = vadd.f32 0.0, %v1305
  %v1307 = vpop.f32.mrb[0].mxu0
  %v1308 = vpop.f32.mrb[0].mxu0
  %v1309 = vadd.f32 0.0, %v1308
  %v1310 = vpop.f32.mrb[0].mxu0
  %1311 = vmatprep.mubr.bf16.mxu0 %v752
  %1312 = vmatmul.mubr.bf16.gmra.mrb[0].mxu0 %v751
  %v1313 = vpop.f32.mrb[0].mxu0
  %v1314 = vadd.f32 0.0, %v1313
  %v1315 = vpop.f32.mrb[0].mxu0
  %v1316 = vpop.f32.mrb[0].mxu0
  %v1317 = vadd.f32 0.0, %v1316
  %v1318 = vpop.f32.mrb[0].mxu0
  %1319 = vmatprep.mubr.bf16.mxu0 %v756
  %1320 = vmatmul.mubr.bf16.gmra.mrb[0].mxu0 %v755
  %v1321 = vpop.f32.mrb[0].mxu0
  %v1322 = vadd.f32 0.0, %v1321
  %v1323 = vpop.f32.mrb[0].mxu0
  %v1324 = vpop.f32.mrb[0].mxu0
  %v1325 = vadd.f32 0.0, %v1324
  %v1326 = vpop.f32.mrb[0].mxu0
  %1327 = vmatprep.mubr.bf16.mxu0 %v760
  %1328 = vmatmul.mubr.bf16.gmra.mrb[0].mxu0 %v759
  %v1329 = vpop.f32.mrb[0].mxu0
  %v1330 = vadd.f32 0.0, %v1329
  %v1331 = vpop.f32.mrb[0].mxu0
  %v1332 = vpop.f32.mrb[0].mxu0
  %v1333 = vadd.f32 0.0, %v1332
  %v1334 = vpop.f32.mrb[0].mxu0
  %1335 = vmatprep.mubr.bf16.mxu0 %v764
  %1336 = vmatmul.mubr.bf16.gmra.mrb[0].mxu0 %v763
  %v1337 = vpop.f32.mrb[0].mxu0
  %v1338 = vadd.f32 0.0, %v1337
  %v1339 = vpop.f32.mrb[0].mxu0
  %v1340 = vpop.f32.mrb[0].mxu0
  %v1341 = vadd.f32 0.0, %v1340
  %v1342 = vpop.f32.mrb[0].mxu0
  %1343 = vmatprep.mubr.bf16.mxu0 %v768
  %1344 = vmatmul.mubr.bf16.gmra.mrb[0].mxu0 %v767
  %v1345 = vpop.f32.mrb[0].mxu0
  %v1346 = vadd.f32 0.0, %v1345
  %v1347 = vpop.f32.mrb[0].mxu0
  %v1348 = vpop.f32.mrb[0].mxu0
  %v1349 = vadd.f32 0.0, %v1348
  %v1350 = vpop.f32.mrb[0].mxu0
  %1351 = vmatprep.mubr.bf16.mxu0 %v772
  %1352 = vmatmul.mubr.bf16.gmra.mrb[0].mxu0 %v771
  %v1353 = vpop.f32.mrb[0].mxu0
  %v1354 = vadd.f32 0.0, %v1353
  %v1355 = vpop.f32.mrb[0].mxu0
  %v1356 = vpop.f32.mrb[0].mxu0
  %v1357 = vadd.f32 0.0, %v1356
  %v1358 = vpop.f32.mrb[0].mxu0
  %1359 = vmatprep.mubr.bf16.mxu0 %v776
  %1360 = vmatmul.mubr.bf16.gmra.mrb[0].mxu0 %v775
  %v1361 = vpop.f32.mrb[0].mxu0
  %v1362 = vadd.f32 0.0, %v1361
  %v1363 = vpop.f32.mrb[0].mxu0
  %v1364 = vpop.f32.mrb[0].mxu0
  %v1365 = vadd.f32 0.0, %v1364
  %v1366 = vpop.f32.mrb[0].mxu0
  %1367 = vmatprep.mubr.bf16.mxu0 %v780
  %1368 = vmatmul.mubr.bf16.gmra.mrb[0].mxu0 %v779
  %v1369 = vpop.f32.mrb[0].mxu0
  %v1370 = vadd.f32 0.0, %v1369
  %v1371 = vpop.f32.mrb[0].mxu0
  %v1372 = vpop.f32.mrb[0].mxu0
  %v1373 = vadd.f32 0.0, %v1372
  %v1374 = vpop.f32.mrb[0].mxu0
  %1375 = vmatprep.mubr.bf16.mxu0 %v784
  %1376 = vmatmul.mubr.bf16.gmra.mrb[0].mxu0 %v783
  %v1377 = vpop.f32.mrb[0].mxu0
  %v1378 = vadd.f32 0.0, %v1377
  %v1379 = vpop.f32.mrb[0].mxu0
  %v1380 = vpop.f32.mrb[0].mxu0
  %v1381 = vadd.f32 0.0, %v1380
  %v1382 = vpop.f32.mrb[0].mxu0
  %1383 = vmatprep.mubr.bf16.mxu0 %v788
  %1384 = vmatmul.mubr.bf16.gmra.mrb[0].mxu0 %v787
  %v1385 = vpop.f32.mrb[0].mxu0
  %v1386 = vadd.f32 0.0, %v1385
  %v1387 = vpop.f32.mrb[0].mxu0
  %v1388 = vpop.f32.mrb[0].mxu0
  %v1389 = vadd.f32 0.0, %v1388
  %v1390 = vpop.f32.mrb[0].mxu0
  %1391 = vmatprep.mubr.bf16.mxu0 %v792
  %1392 = vmatmul.mubr.bf16.gmra.mrb[0].mxu0 %v791
  %v1393 = vpop.f32.mrb[0].mxu0
  %v1394 = vadd.f32 0.0, %v1393
  %v1395 = vpop.f32.mrb[0].mxu0
  %v1396 = vpop.f32.mrb[0].mxu0
  %v1397 = vadd.f32 0.0, %v1396
  %v1398 = vpop.f32.mrb[0].mxu0
  %1399 = vmatprep.mubr.bf16.mxu0 %v796
  %1400 = vmatmul.mubr.bf16.gmra.mrb[0].mxu0 %v795
  %v1401 = vpop.f32.mrb[0].mxu0
  %v1402 = vadd.f32 0.0, %v1401
  %v1403 = vpop.f32.mrb[0].mxu0
  %v1404 = vpop.f32.mrb[0].mxu0
  %v1405 = vadd.f32 0.0, %v1404
  %v1406 = vpop.f32.mrb[0].mxu0
  %1407 = vdwg.mxu0
  %1408 = vmatprep.subr.bf16.mxu0 0
  %1409 = vmatpush1.bf16.msra.mxu0 %v1071
  %1410 = vmatprep.subr.bf16.mxu0 0
  %1411 = vmatpush1.bf16.msra.mxu0 %v1072
  %1412 = vmatprep.subr.bf16.mxu0 0
  %1413 = vmatpush1.bf16.msra.mxu0 %v1073
  %1414 = vmatprep.subr.bf16.mxu0 0
  %1415 = vmatpush1.bf16.msra.mxu0 %v1074
  %1416 = vmatprep.subr.bf16.mxu0 0
  %1417 = vmatpush1.bf16.msra.mxu0 %v1075
  %1418 = vmatprep.subr.bf16.mxu0 0
  %1419 = vmatpush1.bf16.msra.mxu0 %v1076
  %1420 = vmatprep.subr.bf16.mxu0 0
  %1421 = vmatpush1.bf16.msra.mxu0 %v1077
  %1422 = vmatprep.subr.bf16.mxu0 0
  %1423 = vmatpush1.bf16.msra.mxu0 %v1078
  %1424 = vmatprep.subr.bf16.mxu0 0
  %1425 = vmatpush1.bf16.msra.mxu0 %v1079
  %1426 = vmatprep.subr.bf16.mxu0 0
  %1427 = vmatpush1.bf16.msra.mxu0 %v1080
  %1428 = vmatprep.subr.bf16.mxu0 0
  %1429 = vmatpush1.bf16.msra.mxu0 %v1081
  %1430 = vmatprep.subr.bf16.mxu0 0
  %1431 = vmatpush1.bf16.msra.mxu0 %v1082
  %1432 = vmatprep.subr.bf16.mxu0 0
  %1433 = vmatpush1.bf16.msra.mxu0 %v1083
  %1434 = vmatprep.subr.bf16.mxu0 0
  %1435 = vmatpush1.bf16.msra.mxu0 %v1084
  %1436 = vmatprep.subr.bf16.mxu0 0
  %1437 = vmatpush1.bf16.msra.mxu0 %v1085
  %1438 = vmatprep.subr.bf16.mxu0 0
  %1439 = vmatpush1.bf16.msra.mxu0 %v1086
  %1440 = vmatprep.mubr.bf16.mxu0 %v674
  %1441 = vmatmul.mubr.bf16.gmra.mrb[0].mxu0 %v673
  %v1442 = vpop.f32.mrb[0].mxu0
  %v1443 = vadd.f32 %v1154, %v1442
  %v1444 = vpop.f32.mrb[0].mxu0
  %v1445 = vpop.f32.mrb[0].mxu0
  %v1446 = vadd.f32 %v1157, %v1445
  %v1447 = vpop.f32.mrb[0].mxu0
  %1448 = vmatprep.mubr.bf16.mxu0 %v678
  %1449 = vmatmul.mubr.bf16.gmra.mrb[0].mxu0 %v677
  %v1450 = vpop.f32.mrb[0].mxu0
  %v1451 = vadd.f32 %v1162, %v1450
  %v1452 = vpop.f32.mrb[0].mxu0
  %v1453 = vpop.f32.mrb[0].mxu0
  %v1454 = vadd.f32 %v1165, %v1453
  %v1455 = vpop.f32.mrb[0].mxu0
  %1456 = vmatprep.mubr.bf16.mxu0 %v682
  %1457 = vmatmul.mubr.bf16.gmra.mrb[0].mxu0 %v681
  %v1458 = vpop.f32.mrb[0].mxu0
  %v1459 = vadd.f32 %v1170, %v1458
  %v1460 = vpop.f32.mrb[0].mxu0
  %v1461 = vpop.f32.mrb[0].mxu0
  %v1462 = vadd.f32 %v1173, %v1461
  %v1463 = vpop.f32.mrb[0].mxu0
  %1464 = vmatprep.mubr.bf16.mxu0 %v686
  %1465 = vmatmul.mubr.bf16.gmra.mrb[0].mxu0 %v685
  %v1466 = vpop.f32.mrb[0].mxu0
  %v1467 = vadd.f32 %v1178, %v1466
  %v1468 = vpop.f32.mrb[0].mxu0
  %v1469 = vpop.f32.mrb[0].mxu0
  %v1470 = vadd.f32 %v1181, %v1469
  %v1471 = vpop.f32.mrb[0].mxu0
  %1472 = vmatprep.mubr.bf16.mxu0 %v690
  %1473 = vmatmul.mubr.bf16.gmra.mrb[0].mxu0 %v689
  %v1474 = vpop.f32.mrb[0].mxu0
  %v1475 = vadd.f32 %v1186, %v1474
  %v1476 = vpop.f32.mrb[0].mxu0
  %v1477 = vpop.f32.mrb[0].mxu0
  %v1478 = vadd.f32 %v1189, %v1477
  %v1479 = vpop.f32.mrb[0].mxu0
  %1480 = vmatprep.mubr.bf16.mxu0 %v694
  %1481 = vmatmul.mubr.bf16.gmra.mrb[0].mxu0 %v693
  %v1482 = vpop.f32.mrb[0].mxu0
  %v1483 = vadd.f32 %v1194, %v1482
  %v1484 = vpop.f32.mrb[0].mxu0
  %v1485 = vpop.f32.mrb[0].mxu0
  %v1486 = vadd.f32 %v1197, %v1485
  %v1487 = vpop.f32.mrb[0].mxu0
  %1488 = vmatprep.mubr.bf16.mxu0 %v698
  %1489 = vmatmul.mubr.bf16.gmra.mrb[0].mxu0 %v697
  %v1490 = vpop.f32.mrb[0].mxu0
  %v1491 = vadd.f32 %v1202, %v1490
  %v1492 = vpop.f32.mrb[0].mxu0
  %v1493 = vpop.f32.mrb[0].mxu0
  %v1494 = vadd.f32 %v1205, %v1493
  %v1495 = vpop.f32.mrb[0].mxu0
  %1496 = vmatprep.mubr.bf16.mxu0 %v702
  %1497 = vmatmul.mubr.bf16.gmra.mrb[0].mxu0 %v701
  %v1498 = vpop.f32.mrb[0].mxu0
  %v1499 = vadd.f32 %v1210, %v1498
  %v1500 = vpop.f32.mrb[0].mxu0
  %v1501 = vpop.f32.mrb[0].mxu0
  %v1502 = vadd.f32 %v1213, %v1501
  %v1503 = vpop.f32.mrb[0].mxu0
  %1504 = vmatprep.mubr.bf16.mxu0 %v706
  %1505 = vmatmul.mubr.bf16.gmra.mrb[0].mxu0 %v705
  %v1506 = vpop.f32.mrb[0].mxu0
  %v1507 = vadd.f32 %v1218, %v1506
  %v1508 = vpop.f32.mrb[0].mxu0
  %v1509 = vpop.f32.mrb[0].mxu0
  %v1510 = vadd.f32 %v1221, %v1509
  %v1511 = vpop.f32.mrb[0].mxu0
  %1512 = vmatprep.mubr.bf16.mxu0 %v710
  %1513 = vmatmul.mubr.bf16.gmra.mrb[0].mxu0 %v709
  %v1514 = vpop.f32.mrb[0].mxu0
  %v1515 = vadd.f32 %v1226, %v1514
  %v1516 = vpop.f32.mrb[0].mxu0
  %v1517 = vpop.f32.mrb[0].mxu0
  %v1518 = vadd.f32 %v1229, %v1517
  %v1519 = vpop.f32.mrb[0].mxu0
  %1520 = vmatprep.mubr.bf16.mxu0 %v714
  %1521 = vmatmul.mubr.bf16.gmra.mrb[0].mxu0 %v713
  %v1522 = vpop.f32.mrb[0].mxu0
  %v1523 = vadd.f32 %v1234, %v1522
  %v1524 = vpop.f32.mrb[0].mxu0
  %v1525 = vpop.f32.mrb[0].mxu0
  %v1526 = vadd.f32 %v1237, %v1525
  %v1527 = vpop.f32.mrb[0].mxu0
  %1528 = vmatprep.mubr.bf16.mxu0 %v718
  %1529 = vmatmul.mubr.bf16.gmra.mrb[0].mxu0 %v717
  %v1530 = vpop.f32.mrb[0].mxu0
  %v1531 = vadd.f32 %v1242, %v1530
  %v1532 = vpop.f32.mrb[0].mxu0
  %v1533 = vpop.f32.mrb[0].mxu0
  %v1534 = vadd.f32 %v1245, %v1533
  %v1535 = vpop.f32.mrb[0].mxu0
  %1536 = vmatprep.mubr.bf16.mxu0 %v722
  %1537 = vmatmul.mubr.bf16.gmra.mrb[0].mxu0 %v721
  %v1538 = vpop.f32.mrb[0].mxu0
  %v1539 = vadd.f32 %v1250, %v1538
  %v1540 = vpop.f32.mrb[0].mxu0
  %v1541 = vpop.f32.mrb[0].mxu0
  %v1542 = vadd.f32 %v1253, %v1541
  %v1543 = vpop.f32.mrb[0].mxu0
  %1544 = vmatprep.mubr.bf16.mxu0 %v726
  %1545 = vmatmul.mubr.bf16.gmra.mrb[0].mxu0 %v725
  %v1546 = vpop.f32.mrb[0].mxu0
  %v1547 = vadd.f32 %v1258, %v1546
  %v1548 = vpop.f32.mrb[0].mxu0
  %v1549 = vpop.f32.mrb[0].mxu0
  %v1550 = vadd.f32 %v1261, %v1549
  %v1551 = vpop.f32.mrb[0].mxu0
  %1552 = vmatprep.mubr.bf16.mxu0 %v730
  %1553 = vmatmul.mubr.bf16.gmra.mrb[0].mxu0 %v729
  %v1554 = vpop.f32.mrb[0].mxu0
  %v1555 = vadd.f32 %v1266, %v1554
  %v1556 = vpop.f32.mrb[0].mxu0
  %v1557 = vpop.f32.mrb[0].mxu0
  %v1558 = vadd.f32 %v1269, %v1557
  %v1559 = vpop.f32.mrb[0].mxu0
  %1560 = vmatprep.mubr.bf16.mxu0 %v734
  %1561 = vmatmul.mubr.bf16.gmra.mrb[0].mxu0 %v733
  %v1562 = vpop.f32.mrb[0].mxu0
  %v1563 = vadd.f32 %v1274, %v1562
  %v1564 = vpop.f32.mrb[0].mxu0
  %v1565 = vpop.f32.mrb[0].mxu0
  %v1566 = vadd.f32 %v1277, %v1565
  %v1567 = vpop.f32.mrb[0].mxu0
  %1568 = vmatprep.mubr.bf16.mxu0 %v738
  %1569 = vmatmul.mubr.bf16.gmra.mrb[0].mxu0 %v737
  %v1570 = vpop.f32.mrb[0].mxu0
  %v1571 = vadd.f32 %v1282, %v1570
  %v1572 = vpop.f32.mrb[0].mxu0
  %v1573 = vpop.f32.mrb[0].mxu0
  %v1574 = vadd.f32 %v1285, %v1573
  %v1575 = vpop.f32.mrb[0].mxu0
  %1576 = vmatprep.mubr.bf16.mxu0 %v742
  %1577 = vmatmul.mubr.bf16.gmra.mrb[0].mxu0 %v741
  %v1578 = vpop.f32.mrb[0].mxu0
  %v1579 = vadd.f32 %v1290, %v1578
  %v1580 = vpop.f32.mrb[0].mxu0
  %v1581 = vpop.f32.mrb[0].mxu0
  %v1582 = vadd.f32 %v1293, %v1581
  %v1583 = vpop.f32.mrb[0].mxu0
  %1584 = vmatprep.mubr.bf16.mxu0 %v746
  %1585 = vmatmul.mubr.bf16.gmra.mrb[0].mxu0 %v745
  %v1586 = vpop.f32.mrb[0].mxu0
  %v1587 = vadd.f32 %v1298, %v1586
  %v1588 = vpop.f32.mrb[0].mxu0
  %v1589 = vpop.f32.mrb[0].mxu0
  %v1590 = vadd.f32 %v1301, %v1589
  %v1591 = vpop.f32.mrb[0].mxu0
  %1592 = vmatprep.mubr.bf16.mxu0 %v750
  %1593 = vmatmul.mubr.bf16.gmra.mrb[0].mxu0 %v749
  %v1594 = vpop.f32.mrb[0].mxu0
  %v1595 = vadd.f32 %v1306, %v1594
  %v1596 = vpop.f32.mrb[0].mxu0
  %v1597 = vpop.f32.mrb[0].mxu0
  %v1598 = vadd.f32 %v1309, %v1597
  %v1599 = vpop.f32.mrb[0].mxu0
  %1600 = vmatprep.mubr.bf16.mxu0 %v754
  %1601 = vmatmul.mubr.bf16.gmra.mrb[0].mxu0 %v753
  %v1602 = vpop.f32.mrb[0].mxu0
  %v1603 = vadd.f32 %v1314, %v1602
  %v1604 = vpop.f32.mrb[0].mxu0
  %v1605 = vpop.f32.mrb[0].mxu0
  %v1606 = vadd.f32 %v1317, %v1605
  %v1607 = vpop.f32.mrb[0].mxu0
  %1608 = vmatprep.mubr.bf16.mxu0 %v758
  %1609 = vmatmul.mubr.bf16.gmra.mrb[0].mxu0 %v757
  %v1610 = vpop.f32.mrb[0].mxu0
  %v1611 = vadd.f32 %v1322, %v1610
  %v1612 = vpop.f32.mrb[0].mxu0
  %v1613 = vpop.f32.mrb[0].mxu0
  %v1614 = vadd.f32 %v1325, %v1613
  %v1615 = vpop.f32.mrb[0].mxu0
  %1616 = vmatprep.mubr.bf16.mxu0 %v762
  %1617 = vmatmul.mubr.bf16.gmra.mrb[0].mxu0 %v761
  %v1618 = vpop.f32.mrb[0].mxu0
  %v1619 = vadd.f32 %v1330, %v1618
  %v1620 = vpop.f32.mrb[0].mxu0
  %v1621 = vpop.f32.mrb[0].mxu0
  %v1622 = vadd.f32 %v1333, %v1621
  %v1623 = vpop.f32.mrb[0].mxu0
  %1624 = vmatprep.mubr.bf16.mxu0 %v766
  %1625 = vmatmul.mubr.bf16.gmra.mrb[0].mxu0 %v765
  %v1626 = vpop.f32.mrb[0].mxu0
  %v1627 = vadd.f32 %v1338, %v1626
  %v1628 = vpop.f32.mrb[0].mxu0
  %v1629 = vpop.f32.mrb[0].mxu0
  %v1630 = vadd.f32 %v1341, %v1629
  %v1631 = vpop.f32.mrb[0].mxu0
  %1632 = vmatprep.mubr.bf16.mxu0 %v770
  %1633 = vmatmul.mubr.bf16.gmra.mrb[0].mxu0 %v769
  %v1634 = vpop.f32.mrb[0].mxu0
  %v1635 = vadd.f32 %v1346, %v1634
  %v1636 = vpop.f32.mrb[0].mxu0
  %v1637 = vpop.f32.mrb[0].mxu0
  %v1638 = vadd.f32 %v1349, %v1637
  %v1639 = vpop.f32.mrb[0].mxu0
  %1640 = vmatprep.mubr.bf16.mxu0 %v774
  %1641 = vmatmul.mubr.bf16.gmra.mrb[0].mxu0 %v773
  %v1642 = vpop.f32.mrb[0].mxu0
  %v1643 = vadd.f32 %v1354, %v1642
  %v1644 = vpop.f32.mrb[0].mxu0
  %v1645 = vpop.f32.mrb[0].mxu0
  %v1646 = vadd.f32 %v1357, %v1645
  %v1647 = vpop.f32.mrb[0].mxu0
  %1648 = vmatprep.mubr.bf16.mxu0 %v778
  %1649 = vmatmul.mubr.bf16.gmra.mrb[0].mxu0 %v777
  %v1650 = vpop.f32.mrb[0].mxu0
  %v1651 = vadd.f32 %v1362, %v1650
  %v1652 = vpop.f32.mrb[0].mxu0
  %v1653 = vpop.f32.mrb[0].mxu0
  %v1654 = vadd.f32 %v1365, %v1653
  %v1655 = vpop.f32.mrb[0].mxu0
  %1656 = vmatprep.mubr.bf16.mxu0 %v782
  %1657 = vmatmul.mubr.bf16.gmra.mrb[0].mxu0 %v781
  %v1658 = vpop.f32.mrb[0].mxu0
  %v1659 = vadd.f32 %v1370, %v1658
  %v1660 = vpop.f32.mrb[0].mxu0
  %v1661 = vpop.f32.mrb[0].mxu0
  %v1662 = vadd.f32 %v1373, %v1661
  %v1663 = vpop.f32.mrb[0].mxu0
  %1664 = vmatprep.mubr.bf16.mxu0 %v786
  %1665 = vmatmul.mubr.bf16.gmra.mrb[0].mxu0 %v785
  %v1666 = vpop.f32.mrb[0].mxu0
  %v1667 = vadd.f32 %v1378, %v1666
  %v1668 = vpop.f32.mrb[0].mxu0
  %v1669 = vpop.f32.mrb[0].mxu0
  %v1670 = vadd.f32 %v1381, %v1669
  %v1671 = vpop.f32.mrb[0].mxu0
  %1672 = vmatprep.mubr.bf16.mxu0 %v790
  %1673 = vmatmul.mubr.bf16.gmra.mrb[0].mxu0 %v789
  %v1674 = vpop.f32.mrb[0].mxu0
  %v1675 = vadd.f32 %v1386, %v1674
  %v1676 = vpop.f32.mrb[0].mxu0
  %v1677 = vpop.f32.mrb[0].mxu0
  %v1678 = vadd.f32 %v1389, %v1677
  %v1679 = vpop.f32.mrb[0].mxu0
  %1680 = vmatprep.mubr.bf16.mxu0 %v794
  %1681 = vmatmul.mubr.bf16.gmra.mrb[0].mxu0 %v793
  %v1682 = vpop.f32.mrb[0].mxu0
  %v1683 = vadd.f32 %v1394, %v1682
  %v1684 = vpop.f32.mrb[0].mxu0
  %v1685 = vpop.f32.mrb[0].mxu0
  %v1686 = vadd.f32 %v1397, %v1685
  %v1687 = vpop.f32.mrb[0].mxu0
  %1688 = vmatprep.mubr.bf16.mxu0 %v798
  %1689 = vmatmul.mubr.bf16.gmra.mrb[0].mxu0 %v797
  %v1690 = vpop.f32.mrb[0].mxu0
  %v1691 = vadd.f32 %v1402, %v1690
  %v1692 = vpop.f32.mrb[0].mxu0
  %v1693 = vpop.f32.mrb[0].mxu0
  %v1694 = vadd.f32 %v1405, %v1693
  %v1695 = vpop.f32.mrb[0].mxu0
  %1696 = vdwg.mxu0
  %v1697 = vld [vmem:[%s3] sm:$0xf]
  %v1698 = vld [vmem:[%s3 + $0x4] sm:$0xf]
  %v1699 = vld [vmem:[%s3 + $0x8] sm:$0xf]
  %v1700 = vld [vmem:[%s3 + $0xc] sm:$0xf]
  %v1701 = vld [vmem:[%s3 + $0x10] sm:$0xf]
  %v1702 = vld [vmem:[%s3 + $0x14] sm:$0xf]
  %v1703 = vld [vmem:[%s3 + $0x18] sm:$0xf]
  %v1704 = vld [vmem:[%s3 + $0x1c] sm:$0xf]
  %v1705 = vld [vmem:[%s3 + $0x20] sm:$0xf]
  %v1706 = vld [vmem:[%s3 + $0x24] sm:$0xf]
  %v1707 = vld [vmem:[%s3 + $0x28] sm:$0xf]
  %v1708 = vld [vmem:[%s3 + $0x2c] sm:$0xf]
  %v1709 = vld [vmem:[%s3 + $0x30] sm:$0xf]
  %v1710 = vld [vmem:[%s3 + $0x34] sm:$0xf]
  %v1711 = vld [vmem:[%s3 + $0x38] sm:$0xf]
  %v1712 = vld [vmem:[%s3 + $0x3c] sm:$0xf]
  %v1713 = vld [vmem:[%s3 + $0x40] sm:$0xf]
  %v1714 = vld [vmem:[%s3 + $0x44] sm:$0xf]
  %v1715 = vld [vmem:[%s3 + $0x48] sm:$0xf]
  %v1716 = vld [vmem:[%s3 + $0x4c] sm:$0xf]
  %v1717 = vld [vmem:[%s3 + $0x50] sm:$0xf]
  %v1718 = vld [vmem:[%s3 + $0x54] sm:$0xf]
  %v1719 = vld [vmem:[%s3 + $0x58] sm:$0xf]
  %v1720 = vld [vmem:[%s3 + $0x5c] sm:$0xf]
  %v1721 = vld [vmem:[%s3 + $0x60] sm:$0xf]
  %v1722 = vld [vmem:[%s3 + $0x64] sm:$0xf]
  %v1723 = vld [vmem:[%s3 + $0x68] sm:$0xf]
  %v1724 = vld [vmem:[%s3 + $0x6c] sm:$0xf]
  %v1725 = vld [vmem:[%s3 + $0x70] sm:$0xf]
  %v1726 = vld [vmem:[%s3 + $0x74] sm:$0xf]
  %v1727 = vld [vmem:[%s3 + $0x78] sm:$0xf]
  %v1728 = vld [vmem:[%s3 + $0x7c] sm:$0xf]
  %v1729 = vld [vmem:[%s3 + $0x80] sm:$0xf]
  %v1730 = vld [vmem:[%s3 + $0x84] sm:$0xf]
  %v1731 = vld [vmem:[%s3 + $0x88] sm:$0xf]
  %v1732 = vld [vmem:[%s3 + $0x8c] sm:$0xf]
  %v1733 = vld [vmem:[%s3 + $0x90] sm:$0xf]
  %v1734 = vld [vmem:[%s3 + $0x94] sm:$0xf]
  %v1735 = vld [vmem:[%s3 + $0x98] sm:$0xf]
  %v1736 = vld [vmem:[%s3 + $0x9c] sm:$0xf]
  %v1737 = vld [vmem:[%s3 + $0xa0] sm:$0xf]
  %v1738 = vld [vmem:[%s3 + $0xa4] sm:$0xf]
  %v1739 = vld [vmem:[%s3 + $0xa8] sm:$0xf]
  %v1740 = vld [vmem:[%s3 + $0xac] sm:$0xf]
  %v1741 = vld [vmem:[%s3 + $0xb0] sm:$0xf]
  %v1742 = vld [vmem:[%s3 + $0xb4] sm:$0xf]
  %v1743 = vld [vmem:[%s3 + $0xb8] sm:$0xf]
  %v1744 = vld [vmem:[%s3 + $0xbc] sm:$0xf]
  %v1745 = vld [vmem:[%s3 + $0xc0] sm:$0xf]
  %v1746 = vld [vmem:[%s3 + $0xc4] sm:$0xf]
  %v1747 = vld [vmem:[%s3 + $0xc8] sm:$0xf]
  %v1748 = vld [vmem:[%s3 + $0xcc] sm:$0xf]
  %v1749 = vld [vmem:[%s3 + $0xd0] sm:$0xf]
  %v1750 = vld [vmem:[%s3 + $0xd4] sm:$0xf]
  %v1751 = vld [vmem:[%s3 + $0xd8] sm:$0xf]
  %v1752 = vld [vmem:[%s3 + $0xdc] sm:$0xf]
  %v1753 = vld [vmem:[%s3 + $0xe0] sm:$0xf]
  %v1754 = vld [vmem:[%s3 + $0xe4] sm:$0xf]
  %v1755 = vld [vmem:[%s3 + $0xe8] sm:$0xf]
  %v1756 = vld [vmem:[%s3 + $0xec] sm:$0xf]
  %v1757 = vld [vmem:[%s3 + $0xf0] sm:$0xf]
  %v1758 = vld [vmem:[%s3 + $0xf4] sm:$0xf]
  %v1759 = vld [vmem:[%s3 + $0xf8] sm:$0xf]
  %v1760 = vld [vmem:[%s3 + $0xfc] sm:$0xf]
  %v1761 = vunpack.c.l.bf16 %v1697
  %v1762 = vunpack.c.l.bf16 %v1698
  %v1763 = vunpack.c.l.bf16 %v1699
  %v1764 = vunpack.c.l.bf16 %v1700
  %v1765 = vunpack.c.l.bf16 %v1701
  %v1766 = vunpack.c.l.bf16 %v1702
  %v1767 = vunpack.c.l.bf16 %v1703
  %v1768 = vunpack.c.l.bf16 %v1704
  %v1769 = vunpack.c.l.bf16 %v1705
  %v1770 = vunpack.c.l.bf16 %v1706
  %v1771 = vunpack.c.l.bf16 %v1707
  %v1772 = vunpack.c.l.bf16 %v1708
  %v1773 = vunpack.c.l.bf16 %v1709
  %v1774 = vunpack.c.l.bf16 %v1710
  %v1775 = vunpack.c.l.bf16 %v1711
  %v1776 = vunpack.c.l.bf16 %v1712
  %v1777 = vunpack.c.l.bf16 %v1713
  %v1778 = vunpack.c.l.bf16 %v1714
  %v1779 = vunpack.c.l.bf16 %v1715
  %v1780 = vunpack.c.l.bf16 %v1716
  %v1781 = vunpack.c.l.bf16 %v1717
  %v1782 = vunpack.c.l.bf16 %v1718
  %v1783 = vunpack.c.l.bf16 %v1719
  %v1784 = vunpack.c.l.bf16 %v1720
  %v1785 = vunpack.c.l.bf16 %v1721
  %v1786 = vunpack.c.l.bf16 %v1722
  %v1787 = vunpack.c.l.bf16 %v1723
  %v1788 = vunpack.c.l.bf16 %v1724
  %v1789 = vunpack.c.l.bf16 %v1725
  %v1790 = vunpack.c.l.bf16 %v1726
  %v1791 = vunpack.c.l.bf16 %v1727
  %v1792 = vunpack.c.l.bf16 %v1728
  %v1793 = vunpack.c.l.bf16 %v1729
  %v1794 = vunpack.c.l.bf16 %v1730
  %v1795 = vunpack.c.l.bf16 %v1731
  %v1796 = vunpack.c.l.bf16 %v1732
  %v1797 = vunpack.c.l.bf16 %v1733
  %v1798 = vunpack.c.l.bf16 %v1734
  %v1799 = vunpack.c.l.bf16 %v1735
  %v1800 = vunpack.c.l.bf16 %v1736
  %v1801 = vunpack.c.l.bf16 %v1737
  %v1802 = vunpack.c.l.bf16 %v1738
  %v1803 = vunpack.c.l.bf16 %v1739
  %v1804 = vunpack.c.l.bf16 %v1740
  %v1805 = vunpack.c.l.bf16 %v1741
  %v1806 = vunpack.c.l.bf16 %v1742
  %v1807 = vunpack.c.l.bf16 %v1743
  %v1808 = vunpack.c.l.bf16 %v1744
  %v1809 = vunpack.c.l.bf16 %v1745
  %v1810 = vunpack.c.l.bf16 %v1746
  %v1811 = vunpack.c.l.bf16 %v1747
  %v1812 = vunpack.c.l.bf16 %v1748
  %v1813 = vunpack.c.l.bf16 %v1749
  %v1814 = vunpack.c.l.bf16 %v1750
  %v1815 = vunpack.c.l.bf16 %v1751
  %v1816 = vunpack.c.l.bf16 %v1752
  %v1817 = vunpack.c.l.bf16 %v1753
  %v1818 = vunpack.c.l.bf16 %v1754
  %v1819 = vunpack.c.l.bf16 %v1755
  %v1820 = vunpack.c.l.bf16 %v1756
  %v1821 = vunpack.c.l.bf16 %v1757
  %v1822 = vunpack.c.l.bf16 %v1758
  %v1823 = vunpack.c.l.bf16 %v1759
  %v1824 = vunpack.c.l.bf16 %v1760
  %s1825 = sld [smem:[#allocation2]]
  %v1826 = vstv %s1825
  %v1827 = vmul.f32 %v1761, %v1826
  %v1828 = vmul.f32 %v1762, %v1826
  %v1829 = vmul.f32 %v1763, %v1826
  %v1830 = vmul.f32 %v1764, %v1826
  %v1831 = vmul.f32 %v1765, %v1826
  %v1832 = vmul.f32 %v1766, %v1826
  %v1833 = vmul.f32 %v1767, %v1826
  %v1834 = vmul.f32 %v1768, %v1826
  %v1835 = vmul.f32 %v1769, %v1826
  %v1836 = vmul.f32 %v1770, %v1826
  %v1837 = vmul.f32 %v1771, %v1826
  %v1838 = vmul.f32 %v1772, %v1826
  %v1839 = vmul.f32 %v1773, %v1826
  %v1840 = vmul.f32 %v1774, %v1826
  %v1841 = vmul.f32 %v1775, %v1826
  %v1842 = vmul.f32 %v1776, %v1826
  %v1843 = vmul.f32 %v1777, %v1826
  %v1844 = vmul.f32 %v1778, %v1826
  %v1845 = vmul.f32 %v1779, %v1826
  %v1846 = vmul.f32 %v1780, %v1826
  %v1847 = vmul.f32 %v1781, %v1826
  %v1848 = vmul.f32 %v1782, %v1826
  %v1849 = vmul.f32 %v1783, %v1826
  %v1850 = vmul.f32 %v1784, %v1826
  %v1851 = vmul.f32 %v1785, %v1826
  %v1852 = vmul.f32 %v1786, %v1826
  %v1853 = vmul.f32 %v1787, %v1826
  %v1854 = vmul.f32 %v1788, %v1826
  %v1855 = vmul.f32 %v1789, %v1826
  %v1856 = vmul.f32 %v1790, %v1826
  %v1857 = vmul.f32 %v1791, %v1826
  %v1858 = vmul.f32 %v1792, %v1826
  %v1859 = vmul.f32 %v1793, %v1826
  %v1860 = vmul.f32 %v1794, %v1826
  %v1861 = vmul.f32 %v1795, %v1826
  %v1862 = vmul.f32 %v1796, %v1826
  %v1863 = vmul.f32 %v1797, %v1826
  %v1864 = vmul.f32 %v1798, %v1826
  %v1865 = vmul.f32 %v1799, %v1826
  %v1866 = vmul.f32 %v1800, %v1826
  %v1867 = vmul.f32 %v1801, %v1826
  %v1868 = vmul.f32 %v1802, %v1826
  %v1869 = vmul.f32 %v1803, %v1826
  %v1870 = vmul.f32 %v1804, %v1826
  %v1871 = vmul.f32 %v1805, %v1826
  %v1872 = vmul.f32 %v1806, %v1826
  %v1873 = vmul.f32 %v1807, %v1826
  %v1874 = vmul.f32 %v1808, %v1826
  %v1875 = vmul.f32 %v1809, %v1826
  %v1876 = vmul.f32 %v1810, %v1826
  %v1877 = vmul.f32 %v1811, %v1826
  %v1878 = vmul.f32 %v1812, %v1826
  %v1879 = vmul.f32 %v1813, %v1826
  %v1880 = vmul.f32 %v1814, %v1826
  %v1881 = vmul.f32 %v1815, %v1826
  %v1882 = vmul.f32 %v1816, %v1826
  %v1883 = vmul.f32 %v1817, %v1826
  %v1884 = vmul.f32 %v1818, %v1826
  %v1885 = vmul.f32 %v1819, %v1826
  %v1886 = vmul.f32 %v1820, %v1826
  %v1887 = vmul.f32 %v1821, %v1826
  %v1888 = vmul.f32 %v1822, %v1826
  %v1889 = vmul.f32 %v1823, %v1826
  %v1890 = vmul.f32 %v1824, %v1826
  %v1891 = vadd.f32 %v1827, %v1443
  %v1892 = vadd.f32 %v1828, %v1446
  %v1893 = vadd.f32 %v1829, %v1451
  %v1894 = vadd.f32 %v1830, %v1454
  %v1895 = vadd.f32 %v1831, %v1459
  %v1896 = vadd.f32 %v1832, %v1462
  %v1897 = vadd.f32 %v1833, %v1467
  %v1898 = vadd.f32 %v1834, %v1470
  %v1899 = vadd.f32 %v1835, %v1475
  %v1900 = vadd.f32 %v1836, %v1478
  %v1901 = vadd.f32 %v1837, %v1483
  %v1902 = vadd.f32 %v1838, %v1486
  %v1903 = vadd.f32 %v1839, %v1491
  %v1904 = vadd.f32 %v1840, %v1494
  %v1905 = vadd.f32 %v1841, %v1499
  %v1906 = vadd.f32 %v1842, %v1502
  %v1907 = vadd.f32 %v1843, %v1507
  %v1908 = vadd.f32 %v1844, %v1510
  %v1909 = vadd.f32 %v1845, %v1515
  %v1910 = vadd.f32 %v1846, %v1518
  %v1911 = vadd.f32 %v1847, %v1523
  %v1912 = vadd.f32 %v1848, %v1526
  %v1913 = vadd.f32 %v1849, %v1531
  %v1914 = vadd.f32 %v1850, %v1534
  %v1915 = vadd.f32 %v1851, %v1539
  %v1916 = vadd.f32 %v1852, %v1542
  %v1917 = vadd.f32 %v1853, %v1547
  %v1918 = vadd.f32 %v1854, %v1550
  %v1919 = vadd.f32 %v1855, %v1555
  %v1920 = vadd.f32 %v1856, %v1558
  %v1921 = vadd.f32 %v1857, %v1563
  %v1922 = vadd.f32 %v1858, %v1566
  %v1923 = vadd.f32 %v1859, %v1571
  %v1924 = vadd.f32 %v1860, %v1574
  %v1925 = vadd.f32 %v1861, %v1579
  %v1926 = vadd.f32 %v1862, %v1582
  %v1927 = vadd.f32 %v1863, %v1587
  %v1928 = vadd.f32 %v1864, %v1590
  %v1929 = vadd.f32 %v1865, %v1595
  %v1930 = vadd.f32 %v1866, %v1598
  %v1931 = vadd.f32 %v1867, %v1603
  %v1932 = vadd.f32 %v1868, %v1606
  %v1933 = vadd.f32 %v1869, %v1611
  %v1934 = vadd.f32 %v1870, %v1614
  %v1935 = vadd.f32 %v1871, %v1619
  %v1936 = vadd.f32 %v1872, %v1622
  %v1937 = vadd.f32 %v1873, %v1627
  %v1938 = vadd.f32 %v1874, %v1630
  %v1939 = vadd.f32 %v1875, %v1635
  %v1940 = vadd.f32 %v1876, %v1638
  %v1941 = vadd.f32 %v1877, %v1643
  %v1942 = vadd.f32 %v1878, %v1646
  %v1943 = vadd.f32 %v1879, %v1651
  %v1944 = vadd.f32 %v1880, %v1654
  %v1945 = vadd.f32 %v1881, %v1659
  %v1946 = vadd.f32 %v1882, %v1662
  %v1947 = vadd.f32 %v1883, %v1667
  %v1948 = vadd.f32 %v1884, %v1670
  %v1949 = vadd.f32 %v1885, %v1675
  %v1950 = vadd.f32 %v1886, %v1678
  %v1951 = vadd.f32 %v1887, %v1683
  %v1952 = vadd.f32 %v1888, %v1686
  %v1953 = vadd.f32 %v1889, %v1691
  %v1954 = vadd.f32 %v1890, %v1694
  %v1955 = vpack.c.bf16 %v1892, %v1891
  %v1956 = vpack.c.bf16 %v1894, %v1893
  %v1957 = vpack.c.bf16 %v1896, %v1895
  %v1958 = vpack.c.bf16 %v1898, %v1897
  %v1959 = vpack.c.bf16 %v1900, %v1899
  %v1960 = vpack.c.bf16 %v1902, %v1901
  %v1961 = vpack.c.bf16 %v1904, %v1903
  %v1962 = vpack.c.bf16 %v1906, %v1905
  %v1963 = vpack.c.bf16 %v1908, %v1907
  %v1964 = vpack.c.bf16 %v1910, %v1909
  %v1965 = vpack.c.bf16 %v1912, %v1911
  %v1966 = vpack.c.bf16 %v1914, %v1913
  %v1967 = vpack.c.bf16 %v1916, %v1915
  %v1968 = vpack.c.bf16 %v1918, %v1917
  %v1969 = vpack.c.bf16 %v1920, %v1919
  %v1970 = vpack.c.bf16 %v1922, %v1921
  %v1971 = vpack.c.bf16 %v1924, %v1923
  %v1972 = vpack.c.bf16 %v1926, %v1925
  %v1973 = vpack.c.bf16 %v1928, %v1927
  %v1974 = vpack.c.bf16 %v1930, %v1929
  %v1975 = vpack.c.bf16 %v1932, %v1931
  %v1976 = vpack.c.bf16 %v1934, %v1933
  %v1977 = vpack.c.bf16 %v1936, %v1935
  %v1978 = vpack.c.bf16 %v1938, %v1937
  %v1979 = vpack.c.bf16 %v1940, %v1939
  %v1980 = vpack.c.bf16 %v1942, %v1941
  %v1981 = vpack.c.bf16 %v1944, %v1943
  %v1982 = vpack.c.bf16 %v1946, %v1945
  %v1983 = vpack.c.bf16 %v1948, %v1947
  %v1984 = vpack.c.bf16 %v1950, %v1949
  %v1985 = vpack.c.bf16 %v1952, %v1951
  %v1986 = vpack.c.bf16 %v1954, %v1953
  %v1987 = vld [vmem:[%s4] sm:$0xf]
  %v1988 = vld [vmem:[%s4 + $0x4] sm:$0xf]
  %v1989 = vld [vmem:[%s4 + $0x8] sm:$0xf]
  %v1990 = vld [vmem:[%s4 + $0xc] sm:$0xf]
  %v1991 = vld [vmem:[%s4 + $0x10] sm:$0xf]
  %v1992 = vld [vmem:[%s4 + $0x14] sm:$0xf]
  %v1993 = vld [vmem:[%s4 + $0x18] sm:$0xf]
  %v1994 = vld [vmem:[%s4 + $0x1c] sm:$0xf]
  %v1995 = vld [vmem:[%s4 + $0x20] sm:$0xf]
  %v1996 = vld [vmem:[%s4 + $0x24] sm:$0xf]
  %v1997 = vld [vmem:[%s4 + $0x28] sm:$0xf]
  %v1998 = vld [vmem:[%s4 + $0x2c] sm:$0xf]
  %v1999 = vld [vmem:[%s4 + $0x30] sm:$0xf]
  %v2000 = vld [vmem:[%s4 + $0x34] sm:$0xf]
  %v2001 = vld [vmem:[%s4 + $0x38] sm:$0xf]
  %v2002 = vld [vmem:[%s4 + $0x3c] sm:$0xf]
  %v2003 = vld [vmem:[%s5] sm:$0x1]
  %v2005 = vlaneseq
  %v2006 = vshrl.u32 %v2005, 7
  %v2007 = vsub.s32 0, %v2006
  %v2008 = vrot.slane %v2003, %v2007
  %v2026 = vunpack.c.l.b16 %v1987
  %v2027 = vunpack.c.l.b16 %v1988
  %v2028 = vunpack.c.l.b16 %v1989
  %v2029 = vunpack.c.l.b16 %v1990
  %v2030 = vunpack.c.l.b16 %v1991
  %v2031 = vunpack.c.l.b16 %v1992
  %v2032 = vunpack.c.l.b16 %v1993
  %v2033 = vunpack.c.l.b16 %v1994
  %v2034 = vunpack.c.l.b16 %v1995
  %v2035 = vunpack.c.l.b16 %v1996
  %v2036 = vunpack.c.l.b16 %v1997
  %v2037 = vunpack.c.l.b16 %v1998
  %v2038 = vunpack.c.l.b16 %v1999
  %v2039 = vunpack.c.l.b16 %v2000
  %v2040 = vunpack.c.l.b16 %v2001
  %v2041 = vunpack.c.l.b16 %v2002
  %v2042 = vpack.c.b16 %v2027, %v2026
  %v2043 = vpack.c.b16 %v2029, %v2028
  %v2044 = vpack.c.b16 %v2031, %v2030
  %v2045 = vpack.c.b16 %v2033, %v2032
  %v2046 = vpack.c.b16 %v2035, %v2034
  %v2047 = vpack.c.b16 %v2037, %v2036
  %v2048 = vpack.c.b16 %v2039, %v2038
  %v2049 = vpack.c.b16 %v2041, %v2040
  %2058 = vmatprep.subr.bf16.mxu0 0
  %2059 = vmatpush1.bf16.msra.mxu0 %v2042
  %2060 = vmatprep.subr.bf16.mxu0 0
  %2061 = vmatpush1.bf16.msra.mxu0 %v2043
  %2062 = vmatprep.subr.bf16.mxu0 0
  %2063 = vmatpush1.bf16.msra.mxu0 %v2044
  %2064 = vmatprep.subr.bf16.mxu0 0
  %2065 = vmatpush1.bf16.msra.mxu0 %v2045
  %2066 = vmatprep.subr.bf16.mxu0 0
  %2067 = vmatpush1.bf16.msra.mxu0 %v2046
  %2068 = vmatprep.subr.bf16.mxu0 0
  %2069 = vmatpush1.bf16.msra.mxu0 %v2047
  %2070 = vmatprep.subr.bf16.mxu0 0
  %2071 = vmatpush1.bf16.msra.mxu0 %v2048
  %2072 = vmatprep.subr.bf16.mxu0 0
  %2073 = vmatpush1.bf16.msra.mxu0 %v2049
  %2074 = vmatprep.subr.bf16.mxu0 0
  %2075 = vmatpush1.bf16.msra.mxu0 0
  %2076 = vmatprep.subr.bf16.mxu0 0
  %2077 = vmatpush1.bf16.msra.mxu0 0
  %2078 = vmatprep.subr.bf16.mxu0 0
  %2079 = vmatpush1.bf16.msra.mxu0 0
  %2080 = vmatprep.subr.bf16.mxu0 0
  %2081 = vmatpush1.bf16.msra.mxu0 0
  %2082 = vmatprep.subr.bf16.mxu0 0
  %2083 = vmatpush1.bf16.msra.mxu0 0
  %2084 = vmatprep.subr.bf16.mxu0 0
  %2085 = vmatpush1.bf16.msra.mxu0 0
  %2086 = vmatprep.subr.bf16.mxu0 0
  %2087 = vmatpush1.bf16.msra.mxu0 0
  %2088 = vmatprep.subr.bf16.mxu0 0
  %2089 = vmatpush1.bf16.msra.mxu0 0
  %2090 = vmatprep.mubr.bf16.mxu0 0
  %2091 = vmatmul.mubr.bf16.gmra.mrb[0].mxu0 %v1955
  %v2092 = vpop.f32.mrb[0].mxu0
  %v2093 = vadd.f32 %v2008, %v2092
  %v2094 = vpop.f32.mrb[0].mxu0
  %v2095 = vpop.f32.mrb[0].mxu0
  %v2096 = vadd.f32 %v2008, %v2095
  %v2097 = vpop.f32.mrb[0].mxu0
  %2098 = vmatprep.mubr.bf16.mxu0 0
  %2099 = vmatmul.mubr.bf16.gmra.mrb[0].mxu0 %v1956
  %v2100 = vpop.f32.mrb[0].mxu0
  %v2101 = vadd.f32 %v2008, %v2100
  %v2102 = vpop.f32.mrb[0].mxu0
  %v2103 = vpop.f32.mrb[0].mxu0
  %v2104 = vadd.f32 %v2008, %v2103
  %v2105 = vpop.f32.mrb[0].mxu0
  %2106 = vmatprep.mubr.bf16.mxu0 0
  %2107 = vmatmul.mubr.bf16.gmra.mrb[0].mxu0 %v1957
  %v2108 = vpop.f32.mrb[0].mxu0
  %v2109 = vadd.f32 %v2008, %v2108
  %v2110 = vpop.f32.mrb[0].mxu0
  %v2111 = vpop.f32.mrb[0].mxu0
  %v2112 = vadd.f32 %v2008, %v2111
  %v2113 = vpop.f32.mrb[0].mxu0
  %2114 = vmatprep.mubr.bf16.mxu0 0
  %2115 = vmatmul.mubr.bf16.gmra.mrb[0].mxu0 %v1958
  %v2116 = vpop.f32.mrb[0].mxu0
  %v2117 = vadd.f32 %v2008, %v2116
  %v2118 = vpop.f32.mrb[0].mxu0
  %v2119 = vpop.f32.mrb[0].mxu0
  %v2120 = vadd.f32 %v2008, %v2119
  %v2121 = vpop.f32.mrb[0].mxu0
  %2122 = vmatprep.mubr.bf16.mxu0 0
  %2123 = vmatmul.mubr.bf16.gmra.mrb[0].mxu0 %v1959
  %v2124 = vpop.f32.mrb[0].mxu0
  %v2125 = vadd.f32 %v2008, %v2124
  %v2126 = vpop.f32.mrb[0].mxu0
  %v2127 = vpop.f32.mrb[0].mxu0
  %v2128 = vadd.f32 %v2008, %v2127
  %v2129 = vpop.f32.mrb[0].mxu0
  %2130 = vmatprep.mubr.bf16.mxu0 0
  %2131 = vmatmul.mubr.bf16.gmra.mrb[0].mxu0 %v1960
  %v2132 = vpop.f32.mrb[0].mxu0
  %v2133 = vadd.f32 %v2008, %v2132
  %v2134 = vpop.f32.mrb[0].mxu0
  %v2135 = vpop.f32.mrb[0].mxu0
  %v2136 = vadd.f32 %v2008, %v2135
  %v2137 = vpop.f32.mrb[0].mxu0
  %2138 = vmatprep.mubr.bf16.mxu0 0
  %2139 = vmatmul.mubr.bf16.gmra.mrb[0].mxu0 %v1961
  %v2140 = vpop.f32.mrb[0].mxu0
  %v2141 = vadd.f32 %v2008, %v2140
  %v2142 = vpop.f32.mrb[0].mxu0
  %v2143 = vpop.f32.mrb[0].mxu0
  %v2144 = vadd.f32 %v2008, %v2143
  %v2145 = vpop.f32.mrb[0].mxu0
  %2146 = vmatprep.mubr.bf16.mxu0 0
  %2147 = vmatmul.mubr.bf16.gmra.mrb[0].mxu0 %v1962
  %v2148 = vpop.f32.mrb[0].mxu0
  %v2149 = vadd.f32 %v2008, %v2148
  %v2150 = vpop.f32.mrb[0].mxu0
  %v2151 = vpop.f32.mrb[0].mxu0
  %v2152 = vadd.f32 %v2008, %v2151
  %v2153 = vpop.f32.mrb[0].mxu0
  %2154 = vmatprep.mubr.bf16.mxu0 0
  %2155 = vmatmul.mubr.bf16.gmra.mrb[0].mxu0 %v1963
  %v2156 = vpop.f32.mrb[0].mxu0
  %v2157 = vadd.f32 %v2008, %v2156
  %v2158 = vpop.f32.mrb[0].mxu0
  %v2159 = vpop.f32.mrb[0].mxu0
  %v2160 = vadd.f32 %v2008, %v2159
  %v2161 = vpop.f32.mrb[0].mxu0
  %2162 = vmatprep.mubr.bf16.mxu0 0
  %2163 = vmatmul.mubr.bf16.gmra.mrb[0].mxu0 %v1964
  %v2164 = vpop.f32.mrb[0].mxu0
  %v2165 = vadd.f32 %v2008, %v2164
  %v2166 = vpop.f32.mrb[0].mxu0
  %v2167 = vpop.f32.mrb[0].mxu0
  %v2168 = vadd.f32 %v2008, %v2167
  %v2169 = vpop.f32.mrb[0].mxu0
  %2170 = vmatprep.mubr.bf16.mxu0 0
  %2171 = vmatmul.mubr.bf16.gmra.mrb[0].mxu0 %v1965
  %v2172 = vpop.f32.mrb[0].mxu0
  %v2173 = vadd.f32 %v2008, %v2172
  %v2174 = vpop.f32.mrb[0].mxu0
  %v2175 = vpop.f32.mrb[0].mxu0
  %v2176 = vadd.f32 %v2008, %v2175
  %v2177 = vpop.f32.mrb[0].mxu0
  %2178 = vmatprep.mubr.bf16.mxu0 0
  %2179 = vmatmul.mubr.bf16.gmra.mrb[0].mxu0 %v1966
  %v2180 = vpop.f32.mrb[0].mxu0
  %v2181 = vadd.f32 %v2008, %v2180
  %v2182 = vpop.f32.mrb[0].mxu0
  %v2183 = vpop.f32.mrb[0].mxu0
  %v2184 = vadd.f32 %v2008, %v2183
  %v2185 = vpop.f32.mrb[0].mxu0
  %2186 = vmatprep.mubr.bf16.mxu0 0
  %2187 = vmatmul.mubr.bf16.gmra.mrb[0].mxu0 %v1967
  %v2188 = vpop.f32.mrb[0].mxu0
  %v2189 = vadd.f32 %v2008, %v2188
  %v2190 = vpop.f32.mrb[0].mxu0
  %v2191 = vpop.f32.mrb[0].mxu0
  %v2192 = vadd.f32 %v2008, %v2191
  %v2193 = vpop.f32.mrb[0].mxu0
  %2194 = vmatprep.mubr.bf16.mxu0 0
  %2195 = vmatmul.mubr.bf16.gmra.mrb[0].mxu0 %v1968
  %v2196 = vpop.f32.mrb[0].mxu0
  %v2197 = vadd.f32 %v2008, %v2196
  %v2198 = vpop.f32.mrb[0].mxu0
  %v2199 = vpop.f32.mrb[0].mxu0
  %v2200 = vadd.f32 %v2008, %v2199
  %v2201 = vpop.f32.mrb[0].mxu0
  %2202 = vmatprep.mubr.bf16.mxu0 0
  %2203 = vmatmul.mubr.bf16.gmra.mrb[0].mxu0 %v1969
  %v2204 = vpop.f32.mrb[0].mxu0
  %v2205 = vadd.f32 %v2008, %v2204
  %v2206 = vpop.f32.mrb[0].mxu0
  %v2207 = vpop.f32.mrb[0].mxu0
  %v2208 = vadd.f32 %v2008, %v2207
  %v2209 = vpop.f32.mrb[0].mxu0
  %2210 = vmatprep.mubr.bf16.mxu0 0
  %2211 = vmatmul.mubr.bf16.gmra.mrb[0].mxu0 %v1970
  %v2212 = vpop.f32.mrb[0].mxu0
  %v2213 = vadd.f32 %v2008, %v2212
  %v2214 = vpop.f32.mrb[0].mxu0
  %v2215 = vpop.f32.mrb[0].mxu0
  %v2216 = vadd.f32 %v2008, %v2215
  %v2217 = vpop.f32.mrb[0].mxu0
  %2218 = vmatprep.mubr.bf16.mxu0 0
  %2219 = vmatmul.mubr.bf16.gmra.mrb[0].mxu0 %v1971
  %v2220 = vpop.f32.mrb[0].mxu0
  %v2221 = vadd.f32 %v2008, %v2220
  %v2222 = vpop.f32.mrb[0].mxu0
  %v2223 = vpop.f32.mrb[0].mxu0
  %v2224 = vadd.f32 %v2008, %v2223
  %v2225 = vpop.f32.mrb[0].mxu0
  %2226 = vmatprep.mubr.bf16.mxu0 0
  %2227 = vmatmul.mubr.bf16.gmra.mrb[0].mxu0 %v1972
  %v2228 = vpop.f32.mrb[0].mxu0
  %v2229 = vadd.f32 %v2008, %v2228
  %v2230 = vpop.f32.mrb[0].mxu0
  %v2231 = vpop.f32.mrb[0].mxu0
  %v2232 = vadd.f32 %v2008, %v2231
  %v2233 = vpop.f32.mrb[0].mxu0
  %2234 = vmatprep.mubr.bf16.mxu0 0
  %2235 = vmatmul.mubr.bf16.gmra.mrb[0].mxu0 %v1973
  %v2236 = vpop.f32.mrb[0].mxu0
  %v2237 = vadd.f32 %v2008, %v2236
  %v2238 = vpop.f32.mrb[0].mxu0
  %v2239 = vpop.f32.mrb[0].mxu0
  %v2240 = vadd.f32 %v2008, %v2239
  %v2241 = vpop.f32.mrb[0].mxu0
  %2242 = vmatprep.mubr.bf16.mxu0 0
  %2243 = vmatmul.mubr.bf16.gmra.mrb[0].mxu0 %v1974
  %v2244 = vpop.f32.mrb[0].mxu0
  %v2245 = vadd.f32 %v2008, %v2244
  %v2246 = vpop.f32.mrb[0].mxu0
  %v2247 = vpop.f32.mrb[0].mxu0
  %v2248 = vadd.f32 %v2008, %v2247
  %v2249 = vpop.f32.mrb[0].mxu0
  %2250 = vmatprep.mubr.bf16.mxu0 0
  %2251 = vmatmul.mubr.bf16.gmra.mrb[0].mxu0 %v1975
  %v2252 = vpop.f32.mrb[0].mxu0
  %v2253 = vadd.f32 %v2008, %v2252
  %v2254 = vpop.f32.mrb[0].mxu0
  %v2255 = vpop.f32.mrb[0].mxu0
  %v2256 = vadd.f32 %v2008, %v2255
  %v2257 = vpop.f32.mrb[0].mxu0
  %2258 = vmatprep.mubr.bf16.mxu0 0
  %2259 = vmatmul.mubr.bf16.gmra.mrb[0].mxu0 %v1976
  %v2260 = vpop.f32.mrb[0].mxu0
  %v2261 = vadd.f32 %v2008, %v2260
  %v2262 = vpop.f32.mrb[0].mxu0
  %v2263 = vpop.f32.mrb[0].mxu0
  %v2264 = vadd.f32 %v2008, %v2263
  %v2265 = vpop.f32.mrb[0].mxu0
  %2266 = vmatprep.mubr.bf16.mxu0 0
  %2267 = vmatmul.mubr.bf16.gmra.mrb[0].mxu0 %v1977
  %v2268 = vpop.f32.mrb[0].mxu0
  %v2269 = vadd.f32 %v2008, %v2268
  %v2270 = vpop.f32.mrb[0].mxu0
  %v2271 = vpop.f32.mrb[0].mxu0
  %v2272 = vadd.f32 %v2008, %v2271
  %v2273 = vpop.f32.mrb[0].mxu0
  %2274 = vmatprep.mubr.bf16.mxu0 0
  %2275 = vmatmul.mubr.bf16.gmra.mrb[0].mxu0 %v1978
  %v2276 = vpop.f32.mrb[0].mxu0
  %v2277 = vadd.f32 %v2008, %v2276
  %v2278 = vpop.f32.mrb[0].mxu0
  %v2279 = vpop.f32.mrb[0].mxu0
  %v2280 = vadd.f32 %v2008, %v2279
  %v2281 = vpop.f32.mrb[0].mxu0
  %2282 = vmatprep.mubr.bf16.mxu0 0
  %2283 = vmatmul.mubr.bf16.gmra.mrb[0].mxu0 %v1979
  %v2284 = vpop.f32.mrb[0].mxu0
  %v2285 = vadd.f32 %v2008, %v2284
  %v2286 = vpop.f32.mrb[0].mxu0
  %v2287 = vpop.f32.mrb[0].mxu0
  %v2288 = vadd.f32 %v2008, %v2287
  %v2289 = vpop.f32.mrb[0].mxu0
  %2290 = vmatprep.mubr.bf16.mxu0 0
  %2291 = vmatmul.mubr.bf16.gmra.mrb[0].mxu0 %v1980
  %v2292 = vpop.f32.mrb[0].mxu0
  %v2293 = vadd.f32 %v2008, %v2292
  %v2294 = vpop.f32.mrb[0].mxu0
  %v2295 = vpop.f32.mrb[0].mxu0
  %v2296 = vadd.f32 %v2008, %v2295
  %v2297 = vpop.f32.mrb[0].mxu0
  %2298 = vmatprep.mubr.bf16.mxu0 0
  %2299 = vmatmul.mubr.bf16.gmra.mrb[0].mxu0 %v1981
  %v2300 = vpop.f32.mrb[0].mxu0
  %v2301 = vadd.f32 %v2008, %v2300
  %v2302 = vpop.f32.mrb[0].mxu0
  %v2303 = vpop.f32.mrb[0].mxu0
  %v2304 = vadd.f32 %v2008, %v2303
  %v2305 = vpop.f32.mrb[0].mxu0
  %2306 = vmatprep.mubr.bf16.mxu0 0
  %2307 = vmatmul.mubr.bf16.gmra.mrb[0].mxu0 %v1982
  %v2308 = vpop.f32.mrb[0].mxu0
  %v2309 = vadd.f32 %v2008, %v2308
  %v2310 = vpop.f32.mrb[0].mxu0
  %v2311 = vpop.f32.mrb[0].mxu0
  %v2312 = vadd.f32 %v2008, %v2311
  %v2313 = vpop.f32.mrb[0].mxu0
  %2314 = vmatprep.mubr.bf16.mxu0 0
  %2315 = vmatmul.mubr.bf16.gmra.mrb[0].mxu0 %v1983
  %v2316 = vpop.f32.mrb[0].mxu0
  %v2317 = vadd.f32 %v2008, %v2316
  %v2318 = vpop.f32.mrb[0].mxu0
  %v2319 = vpop.f32.mrb[0].mxu0
  %v2320 = vadd.f32 %v2008, %v2319
  %v2321 = vpop.f32.mrb[0].mxu0
  %2322 = vmatprep.mubr.bf16.mxu0 0
  %2323 = vmatmul.mubr.bf16.gmra.mrb[0].mxu0 %v1984
  %v2324 = vpop.f32.mrb[0].mxu0
  %v2325 = vadd.f32 %v2008, %v2324
  %v2326 = vpop.f32.mrb[0].mxu0
  %v2327 = vpop.f32.mrb[0].mxu0
  %v2328 = vadd.f32 %v2008, %v2327
  %v2329 = vpop.f32.mrb[0].mxu0
  %2330 = vmatprep.mubr.bf16.mxu0 0
  %2331 = vmatmul.mubr.bf16.gmra.mrb[0].mxu0 %v1985
  %v2332 = vpop.f32.mrb[0].mxu0
  %v2333 = vadd.f32 %v2008, %v2332
  %v2334 = vpop.f32.mrb[0].mxu0
  %v2335 = vpop.f32.mrb[0].mxu0
  %v2336 = vadd.f32 %v2008, %v2335
  %v2337 = vpop.f32.mrb[0].mxu0
  %2338 = vmatprep.mubr.bf16.mxu0 0
  %2339 = vmatmul.mubr.bf16.gmra.mrb[0].mxu0 %v1986
  %v2340 = vpop.f32.mrb[0].mxu0
  %v2341 = vadd.f32 %v2008, %v2340
  %v2342 = vpop.f32.mrb[0].mxu0
  %v2343 = vpop.f32.mrb[0].mxu0
  %v2344 = vadd.f32 %v2008, %v2343
  %v2345 = vpop.f32.mrb[0].mxu0
  %2346 = vdwg.mxu0
  %v2347 = vmax.f32 %v2093, 0.0
  %v2348 = vmax.f32 %v2096, 0.0
  %v2349 = vmax.f32 %v2101, 0.0
  %v2350 = vmax.f32 %v2104, 0.0
  %v2351 = vmax.f32 %v2109, 0.0
  %v2352 = vmax.f32 %v2112, 0.0
  %v2353 = vmax.f32 %v2117, 0.0
  %v2354 = vmax.f32 %v2120, 0.0
  %v2355 = vmax.f32 %v2125, 0.0
  %v2356 = vmax.f32 %v2128, 0.0
  %v2357 = vmax.f32 %v2133, 0.0
  %v2358 = vmax.f32 %v2136, 0.0
  %v2359 = vmax.f32 %v2141, 0.0
  %v2360 = vmax.f32 %v2144, 0.0
  %v2361 = vmax.f32 %v2149, 0.0
  %v2362 = vmax.f32 %v2152, 0.0
  %v2363 = vmax.f32 %v2157, 0.0
  %v2364 = vmax.f32 %v2160, 0.0
  %v2365 = vmax.f32 %v2165, 0.0
  %v2366 = vmax.f32 %v2168, 0.0
  %v2367 = vmax.f32 %v2173, 0.0
  %v2368 = vmax.f32 %v2176, 0.0
  %v2369 = vmax.f32 %v2181, 0.0
  %v2370 = vmax.f32 %v2184, 0.0
  %v2371 = vmax.f32 %v2189, 0.0
  %v2372 = vmax.f32 %v2192, 0.0
  %v2373 = vmax.f32 %v2197, 0.0
  %v2374 = vmax.f32 %v2200, 0.0
  %v2375 = vmax.f32 %v2205, 0.0
  %v2376 = vmax.f32 %v2208, 0.0
  %v2377 = vmax.f32 %v2213, 0.0
  %v2378 = vmax.f32 %v2216, 0.0
  %v2379 = vmax.f32 %v2221, 0.0
  %v2380 = vmax.f32 %v2224, 0.0
  %v2381 = vmax.f32 %v2229, 0.0
  %v2382 = vmax.f32 %v2232, 0.0
  %v2383 = vmax.f32 %v2237, 0.0
  %v2384 = vmax.f32 %v2240, 0.0
  %v2385 = vmax.f32 %v2245, 0.0
  %v2386 = vmax.f32 %v2248, 0.0
  %v2387 = vmax.f32 %v2253, 0.0
  %v2388 = vmax.f32 %v2256, 0.0
  %v2389 = vmax.f32 %v2261, 0.0
  %v2390 = vmax.f32 %v2264, 0.0
  %v2391 = vmax.f32 %v2269, 0.0
  %v2392 = vmax.f32 %v2272, 0.0
  %v2393 = vmax.f32 %v2277, 0.0
  %v2394 = vmax.f32 %v2280, 0.0
  %v2395 = vmax.f32 %v2285, 0.0
  %v2396 = vmax.f32 %v2288, 0.0
  %v2397 = vmax.f32 %v2293, 0.0
  %v2398 = vmax.f32 %v2296, 0.0
  %v2399 = vmax.f32 %v2301, 0.0
  %v2400 = vmax.f32 %v2304, 0.0
  %v2401 = vmax.f32 %v2309, 0.0
  %v2402 = vmax.f32 %v2312, 0.0
  %v2403 = vmax.f32 %v2317, 0.0
  %v2404 = vmax.f32 %v2320, 0.0
  %v2405 = vmax.f32 %v2325, 0.0
  %v2406 = vmax.f32 %v2328, 0.0
  %v2407 = vmax.f32 %v2333, 0.0
  %v2408 = vmax.f32 %v2336, 0.0
  %v2409 = vmax.f32 %v2341, 0.0
  %v2410 = vmax.f32 %v2344, 0.0
  %v2411 = vpack.c.bf16 %v2348, %v2347
  %v2412 = vpack.c.bf16 %v2350, %v2349
  %v2413 = vpack.c.bf16 %v2352, %v2351
  %v2414 = vpack.c.bf16 %v2354, %v2353
  %v2415 = vpack.c.bf16 %v2356, %v2355
  %v2416 = vpack.c.bf16 %v2358, %v2357
  %v2417 = vpack.c.bf16 %v2360, %v2359
  %v2418 = vpack.c.bf16 %v2362, %v2361
  %v2419 = vpack.c.bf16 %v2364, %v2363
  %v2420 = vpack.c.bf16 %v2366, %v2365
  %v2421 = vpack.c.bf16 %v2368, %v2367
  %v2422 = vpack.c.bf16 %v2370, %v2369
  %v2423 = vpack.c.bf16 %v2372, %v2371
  %v2424 = vpack.c.bf16 %v2374, %v2373
  %v2425 = vpack.c.bf16 %v2376, %v2375
  %v2426 = vpack.c.bf16 %v2378, %v2377
  %v2427 = vpack.c.bf16 %v2380, %v2379
  %v2428 = vpack.c.bf16 %v2382, %v2381
  %v2429 = vpack.c.bf16 %v2384, %v2383
  %v2430 = vpack.c.bf16 %v2386, %v2385
  %v2431 = vpack.c.bf16 %v2388, %v2387
  %v2432 = vpack.c.bf16 %v2390, %v2389
  %v2433 = vpack.c.bf16 %v2392, %v2391
  %v2434 = vpack.c.bf16 %v2394, %v2393
  %v2435 = vpack.c.bf16 %v2396, %v2395
  %v2436 = vpack.c.bf16 %v2398, %v2397
  %v2437 = vpack.c.bf16 %v2400, %v2399
  %v2438 = vpack.c.bf16 %v2402, %v2401
  %v2439 = vpack.c.bf16 %v2404, %v2403
  %v2440 = vpack.c.bf16 %v2406, %v2405
  %v2441 = vpack.c.bf16 %v2408, %v2407
  %v2442 = vpack.c.bf16 %v2410, %v2409
  %v2443 = vld [vmem:[%s6] sm:$0xf]
  %v2444 = vld [vmem:[%s6 + $0x4] sm:$0xf]
  %v2445 = vld [vmem:[%s6 + $0x8] sm:$0xf]
  %v2446 = vld [vmem:[%s6 + $0xc] sm:$0xf]
  %v2447 = vld [vmem:[%s6 + $0x10] sm:$0xf]
  %v2448 = vld [vmem:[%s6 + $0x14] sm:$0xf]
  %v2449 = vld [vmem:[%s6 + $0x18] sm:$0xf]
  %v2450 = vld [vmem:[%s6 + $0x1c] sm:$0xf]
  %v2451 = vld [vmem:[%s6 + $0x20] sm:$0xf]
  %v2452 = vld [vmem:[%s6 + $0x24] sm:$0xf]
  %v2453 = vld [vmem:[%s6 + $0x28] sm:$0xf]
  %v2454 = vld [vmem:[%s6 + $0x2c] sm:$0xf]
  %v2455 = vld [vmem:[%s6 + $0x30] sm:$0xf]
  %v2456 = vld [vmem:[%s6 + $0x34] sm:$0xf]
  %v2457 = vld [vmem:[%s6 + $0x38] sm:$0xf]
  %v2458 = vld [vmem:[%s6 + $0x3c] sm:$0xf]
  %v2459 = vld [vmem:[%s7] sm:$0x1]
  %v2461 = vlaneseq
  %v2462 = vshrl.u32 %v2461, 7
  %v2463 = vsub.s32 0, %v2462
  %v2464 = vrot.slane %v2459, %v2463
  %v2482 = vunpack.c.l.b16 %v2443
  %v2483 = vunpack.c.l.b16 %v2444
  %v2484 = vunpack.c.l.b16 %v2445
  %v2485 = vunpack.c.l.b16 %v2446
  %v2486 = vunpack.c.l.b16 %v2447
  %v2487 = vunpack.c.l.b16 %v2448
  %v2488 = vunpack.c.l.b16 %v2449
  %v2489 = vunpack.c.l.b16 %v2450
  %v2490 = vunpack.c.l.b16 %v2451
  %v2491 = vunpack.c.l.b16 %v2452
  %v2492 = vunpack.c.l.b16 %v2453
  %v2493 = vunpack.c.l.b16 %v2454
  %v2494 = vunpack.c.l.b16 %v2455
  %v2495 = vunpack.c.l.b16 %v2456
  %v2496 = vunpack.c.l.b16 %v2457
  %v2497 = vunpack.c.l.b16 %v2458
  %v2498 = vpack.c.b16 %v2483, %v2482
  %v2499 = vpack.c.b16 %v2485, %v2484
  %v2500 = vpack.c.b16 %v2487, %v2486
  %v2501 = vpack.c.b16 %v2489, %v2488
  %v2502 = vpack.c.b16 %v2491, %v2490
  %v2503 = vpack.c.b16 %v2493, %v2492
  %v2504 = vpack.c.b16 %v2495, %v2494
  %v2505 = vpack.c.b16 %v2497, %v2496
  %2514 = vmatprep.subr.bf16.mxu0 0
  %2515 = vmatpush1.bf16.msra.mxu0 %v2498
  %2516 = vmatprep.subr.bf16.mxu0 0
  %2517 = vmatpush1.bf16.msra.mxu0 %v2499
  %2518 = vmatprep.subr.bf16.mxu0 0
  %2519 = vmatpush1.bf16.msra.mxu0 %v2500
  %2520 = vmatprep.subr.bf16.mxu0 0
  %2521 = vmatpush1.bf16.msra.mxu0 %v2501
  %2522 = vmatprep.subr.bf16.mxu0 0
  %2523 = vmatpush1.bf16.msra.mxu0 %v2502
  %2524 = vmatprep.subr.bf16.mxu0 0
  %2525 = vmatpush1.bf16.msra.mxu0 %v2503
  %2526 = vmatprep.subr.bf16.mxu0 0
  %2527 = vmatpush1.bf16.msra.mxu0 %v2504
  %2528 = vmatprep.subr.bf16.mxu0 0
  %2529 = vmatpush1.bf16.msra.mxu0 %v2505
  %2530 = vmatprep.subr.bf16.mxu0 0
  %2531 = vmatpush1.bf16.msra.mxu0 0
  %2532 = vmatprep.subr.bf16.mxu0 0
  %2533 = vmatpush1.bf16.msra.mxu0 0
  %2534 = vmatprep.subr.bf16.mxu0 0
  %2535 = vmatpush1.bf16.msra.mxu0 0
  %2536 = vmatprep.subr.bf16.mxu0 0
  %2537 = vmatpush1.bf16.msra.mxu0 0
  %2538 = vmatprep.subr.bf16.mxu0 0
  %2539 = vmatpush1.bf16.msra.mxu0 0
  %2540 = vmatprep.subr.bf16.mxu0 0
  %2541 = vmatpush1.bf16.msra.mxu0 0
  %2542 = vmatprep.subr.bf16.mxu0 0
  %2543 = vmatpush1.bf16.msra.mxu0 0
  %2544 = vmatprep.subr.bf16.mxu0 0
  %2545 = vmatpush1.bf16.msra.mxu0 0
  %2546 = vmatprep.mubr.bf16.mxu0 0
  %2547 = vmatmul.mubr.bf16.gmra.mrb[0].mxu0 %v2411
  %v2548 = vpop.f32.mrb[0].mxu0
  %v2549 = vadd.f32 %v2464, %v2548
  %v2550 = vpop.f32.mrb[0].mxu0
  %v2551 = vpop.f32.mrb[0].mxu0
  %v2552 = vadd.f32 %v2464, %v2551
  %v2553 = vpop.f32.mrb[0].mxu0
  %2554 = vmatprep.mubr.bf16.mxu0 0
  %2555 = vmatmul.mubr.bf16.gmra.mrb[0].mxu0 %v2412
  %v2556 = vpop.f32.mrb[0].mxu0
  %v2557 = vadd.f32 %v2464, %v2556
  %v2558 = vpop.f32.mrb[0].mxu0
  %v2559 = vpop.f32.mrb[0].mxu0
  %v2560 = vadd.f32 %v2464, %v2559
  %v2561 = vpop.f32.mrb[0].mxu0
  %2562 = vmatprep.mubr.bf16.mxu0 0
  %2563 = vmatmul.mubr.bf16.gmra.mrb[0].mxu0 %v2413
  %v2564 = vpop.f32.mrb[0].mxu0
  %v2565 = vadd.f32 %v2464, %v2564
  %v2566 = vpop.f32.mrb[0].mxu0
  %v2567 = vpop.f32.mrb[0].mxu0
  %v2568 = vadd.f32 %v2464, %v2567
  %v2569 = vpop.f32.mrb[0].mxu0
  %2570 = vmatprep.mubr.bf16.mxu0 0
  %2571 = vmatmul.mubr.bf16.gmra.mrb[0].mxu0 %v2414
  %v2572 = vpop.f32.mrb[0].mxu0
  %v2573 = vadd.f32 %v2464, %v2572
  %v2574 = vpop.f32.mrb[0].mxu0
  %v2575 = vpop.f32.mrb[0].mxu0
  %v2576 = vadd.f32 %v2464, %v2575
  %v2577 = vpop.f32.mrb[0].mxu0
  %2578 = vmatprep.mubr.bf16.mxu0 0
  %2579 = vmatmul.mubr.bf16.gmra.mrb[0].mxu0 %v2415
  %v2580 = vpop.f32.mrb[0].mxu0
  %v2581 = vadd.f32 %v2464, %v2580
  %v2582 = vpop.f32.mrb[0].mxu0
  %v2583 = vpop.f32.mrb[0].mxu0
  %v2584 = vadd.f32 %v2464, %v2583
  %v2585 = vpop.f32.mrb[0].mxu0
  %2586 = vmatprep.mubr.bf16.mxu0 0
  %2587 = vmatmul.mubr.bf16.gmra.mrb[0].mxu0 %v2416
  %v2588 = vpop.f32.mrb[0].mxu0
  %v2589 = vadd.f32 %v2464, %v2588
  %v2590 = vpop.f32.mrb[0].mxu0
  %v2591 = vpop.f32.mrb[0].mxu0
  %v2592 = vadd.f32 %v2464, %v2591
  %v2593 = vpop.f32.mrb[0].mxu0
  %2594 = vmatprep.mubr.bf16.mxu0 0
  %2595 = vmatmul.mubr.bf16.gmra.mrb[0].mxu0 %v2417
  %v2596 = vpop.f32.mrb[0].mxu0
  %v2597 = vadd.f32 %v2464, %v2596
  %v2598 = vpop.f32.mrb[0].mxu0
  %v2599 = vpop.f32.mrb[0].mxu0
  %v2600 = vadd.f32 %v2464, %v2599
  %v2601 = vpop.f32.mrb[0].mxu0
  %2602 = vmatprep.mubr.bf16.mxu0 0
  %2603 = vmatmul.mubr.bf16.gmra.mrb[0].mxu0 %v2418
  %v2604 = vpop.f32.mrb[0].mxu0
  %v2605 = vadd.f32 %v2464, %v2604
  %v2606 = vpop.f32.mrb[0].mxu0
  %v2607 = vpop.f32.mrb[0].mxu0
  %v2608 = vadd.f32 %v2464, %v2607
  %v2609 = vpop.f32.mrb[0].mxu0
  %2610 = vmatprep.mubr.bf16.mxu0 0
  %2611 = vmatmul.mubr.bf16.gmra.mrb[0].mxu0 %v2419
  %v2612 = vpop.f32.mrb[0].mxu0
  %v2613 = vadd.f32 %v2464, %v2612
  %v2614 = vpop.f32.mrb[0].mxu0
  %v2615 = vpop.f32.mrb[0].mxu0
  %v2616 = vadd.f32 %v2464, %v2615
  %v2617 = vpop.f32.mrb[0].mxu0
  %2618 = vmatprep.mubr.bf16.mxu0 0
  %2619 = vmatmul.mubr.bf16.gmra.mrb[0].mxu0 %v2420
  %v2620 = vpop.f32.mrb[0].mxu0
  %v2621 = vadd.f32 %v2464, %v2620
  %v2622 = vpop.f32.mrb[0].mxu0
  %v2623 = vpop.f32.mrb[0].mxu0
  %v2624 = vadd.f32 %v2464, %v2623
  %v2625 = vpop.f32.mrb[0].mxu0
  %2626 = vmatprep.mubr.bf16.mxu0 0
  %2627 = vmatmul.mubr.bf16.gmra.mrb[0].mxu0 %v2421
  %v2628 = vpop.f32.mrb[0].mxu0
  %v2629 = vadd.f32 %v2464, %v2628
  %v2630 = vpop.f32.mrb[0].mxu0
  %v2631 = vpop.f32.mrb[0].mxu0
  %v2632 = vadd.f32 %v2464, %v2631
  %v2633 = vpop.f32.mrb[0].mxu0
  %2634 = vmatprep.mubr.bf16.mxu0 0
  %2635 = vmatmul.mubr.bf16.gmra.mrb[0].mxu0 %v2422
  %v2636 = vpop.f32.mrb[0].mxu0
  %v2637 = vadd.f32 %v2464, %v2636
  %v2638 = vpop.f32.mrb[0].mxu0
  %v2639 = vpop.f32.mrb[0].mxu0
  %v2640 = vadd.f32 %v2464, %v2639
  %v2641 = vpop.f32.mrb[0].mxu0
  %2642 = vmatprep.mubr.bf16.mxu0 0
  %2643 = vmatmul.mubr.bf16.gmra.mrb[0].mxu0 %v2423
  %v2644 = vpop.f32.mrb[0].mxu0
  %v2645 = vadd.f32 %v2464, %v2644
  %v2646 = vpop.f32.mrb[0].mxu0
  %v2647 = vpop.f32.mrb[0].mxu0
  %v2648 = vadd.f32 %v2464, %v2647
  %v2649 = vpop.f32.mrb[0].mxu0
  %2650 = vmatprep.mubr.bf16.mxu0 0
  %2651 = vmatmul.mubr.bf16.gmra.mrb[0].mxu0 %v2424
  %v2652 = vpop.f32.mrb[0].mxu0
  %v2653 = vadd.f32 %v2464, %v2652
  %v2654 = vpop.f32.mrb[0].mxu0
  %v2655 = vpop.f32.mrb[0].mxu0
  %v2656 = vadd.f32 %v2464, %v2655
  %v2657 = vpop.f32.mrb[0].mxu0
  %2658 = vmatprep.mubr.bf16.mxu0 0
  %2659 = vmatmul.mubr.bf16.gmra.mrb[0].mxu0 %v2425
  %v2660 = vpop.f32.mrb[0].mxu0
  %v2661 = vadd.f32 %v2464, %v2660
  %v2662 = vpop.f32.mrb[0].mxu0
  %v2663 = vpop.f32.mrb[0].mxu0
  %v2664 = vadd.f32 %v2464, %v2663
  %v2665 = vpop.f32.mrb[0].mxu0
  %2666 = vmatprep.mubr.bf16.mxu0 0
  %2667 = vmatmul.mubr.bf16.gmra.mrb[0].mxu0 %v2426
  %v2668 = vpop.f32.mrb[0].mxu0
  %v2669 = vadd.f32 %v2464, %v2668
  %v2670 = vpop.f32.mrb[0].mxu0
  %v2671 = vpop.f32.mrb[0].mxu0
  %v2672 = vadd.f32 %v2464, %v2671
  %v2673 = vpop.f32.mrb[0].mxu0
  %2674 = vmatprep.mubr.bf16.mxu0 0
  %2675 = vmatmul.mubr.bf16.gmra.mrb[0].mxu0 %v2427
  %v2676 = vpop.f32.mrb[0].mxu0
  %v2677 = vadd.f32 %v2464, %v2676
  %v2678 = vpop.f32.mrb[0].mxu0
  %v2679 = vpop.f32.mrb[0].mxu0
  %v2680 = vadd.f32 %v2464, %v2679
  %v2681 = vpop.f32.mrb[0].mxu0
  %2682 = vmatprep.mubr.bf16.mxu0 0
  %2683 = vmatmul.mubr.bf16.gmra.mrb[0].mxu0 %v2428
  %v2684 = vpop.f32.mrb[0].mxu0
  %v2685 = vadd.f32 %v2464, %v2684
  %v2686 = vpop.f32.mrb[0].mxu0
  %v2687 = vpop.f32.mrb[0].mxu0
  %v2688 = vadd.f32 %v2464, %v2687
  %v2689 = vpop.f32.mrb[0].mxu0
  %2690 = vmatprep.mubr.bf16.mxu0 0
  %2691 = vmatmul.mubr.bf16.gmra.mrb[0].mxu0 %v2429
  %v2692 = vpop.f32.mrb[0].mxu0
  %v2693 = vadd.f32 %v2464, %v2692
  %v2694 = vpop.f32.mrb[0].mxu0
  %v2695 = vpop.f32.mrb[0].mxu0
  %v2696 = vadd.f32 %v2464, %v2695
  %v2697 = vpop.f32.mrb[0].mxu0
  %2698 = vmatprep.mubr.bf16.mxu0 0
  %2699 = vmatmul.mubr.bf16.gmra.mrb[0].mxu0 %v2430
  %v2700 = vpop.f32.mrb[0].mxu0
  %v2701 = vadd.f32 %v2464, %v2700
  %v2702 = vpop.f32.mrb[0].mxu0
  %v2703 = vpop.f32.mrb[0].mxu0
  %v2704 = vadd.f32 %v2464, %v2703
  %v2705 = vpop.f32.mrb[0].mxu0
  %2706 = vmatprep.mubr.bf16.mxu0 0
  %2707 = vmatmul.mubr.bf16.gmra.mrb[0].mxu0 %v2431
  %v2708 = vpop.f32.mrb[0].mxu0
  %v2709 = vadd.f32 %v2464, %v2708
  %v2710 = vpop.f32.mrb[0].mxu0
  %v2711 = vpop.f32.mrb[0].mxu0
  %v2712 = vadd.f32 %v2464, %v2711
  %v2713 = vpop.f32.mrb[0].mxu0
  %2714 = vmatprep.mubr.bf16.mxu0 0
  %2715 = vmatmul.mubr.bf16.gmra.mrb[0].mxu0 %v2432
  %v2716 = vpop.f32.mrb[0].mxu0
  %v2717 = vadd.f32 %v2464, %v2716
  %v2718 = vpop.f32.mrb[0].mxu0
  %v2719 = vpop.f32.mrb[0].mxu0
  %v2720 = vadd.f32 %v2464, %v2719
  %v2721 = vpop.f32.mrb[0].mxu0
  %2722 = vmatprep.mubr.bf16.mxu0 0
  %2723 = vmatmul.mubr.bf16.gmra.mrb[0].mxu0 %v2433
  %v2724 = vpop.f32.mrb[0].mxu0
  %v2725 = vadd.f32 %v2464, %v2724
  %v2726 = vpop.f32.mrb[0].mxu0
  %v2727 = vpop.f32.mrb[0].mxu0
  %v2728 = vadd.f32 %v2464, %v2727
  %v2729 = vpop.f32.mrb[0].mxu0
  %2730 = vmatprep.mubr.bf16.mxu0 0
  %2731 = vmatmul.mubr.bf16.gmra.mrb[0].mxu0 %v2434
  %v2732 = vpop.f32.mrb[0].mxu0
  %v2733 = vadd.f32 %v2464, %v2732
  %v2734 = vpop.f32.mrb[0].mxu0
  %v2735 = vpop.f32.mrb[0].mxu0
  %v2736 = vadd.f32 %v2464, %v2735
  %v2737 = vpop.f32.mrb[0].mxu0
  %2738 = vmatprep.mubr.bf16.mxu0 0
  %2739 = vmatmul.mubr.bf16.gmra.mrb[0].mxu0 %v2435
  %v2740 = vpop.f32.mrb[0].mxu0
  %v2741 = vadd.f32 %v2464, %v2740
  %v2742 = vpop.f32.mrb[0].mxu0
  %v2743 = vpop.f32.mrb[0].mxu0
  %v2744 = vadd.f32 %v2464, %v2743
  %v2745 = vpop.f32.mrb[0].mxu0
  %2746 = vmatprep.mubr.bf16.mxu0 0
  %2747 = vmatmul.mubr.bf16.gmra.mrb[0].mxu0 %v2436
  %v2748 = vpop.f32.mrb[0].mxu0
  %v2749 = vadd.f32 %v2464, %v2748
  %v2750 = vpop.f32.mrb[0].mxu0
  %v2751 = vpop.f32.mrb[0].mxu0
  %v2752 = vadd.f32 %v2464, %v2751
  %v2753 = vpop.f32.mrb[0].mxu0
  %2754 = vmatprep.mubr.bf16.mxu0 0
  %2755 = vmatmul.mubr.bf16.gmra.mrb[0].mxu0 %v2437
  %v2756 = vpop.f32.mrb[0].mxu0
  %v2757 = vadd.f32 %v2464, %v2756
  %v2758 = vpop.f32.mrb[0].mxu0
  %v2759 = vpop.f32.mrb[0].mxu0
  %v2760 = vadd.f32 %v2464, %v2759
  %v2761 = vpop.f32.mrb[0].mxu0
  %2762 = vmatprep.mubr.bf16.mxu0 0
  %2763 = vmatmul.mubr.bf16.gmra.mrb[0].mxu0 %v2438
  %v2764 = vpop.f32.mrb[0].mxu0
  %v2765 = vadd.f32 %v2464, %v2764
  %v2766 = vpop.f32.mrb[0].mxu0
  %v2767 = vpop.f32.mrb[0].mxu0
  %v2768 = vadd.f32 %v2464, %v2767
  %v2769 = vpop.f32.mrb[0].mxu0
  %2770 = vmatprep.mubr.bf16.mxu0 0
  %2771 = vmatmul.mubr.bf16.gmra.mrb[0].mxu0 %v2439
  %v2772 = vpop.f32.mrb[0].mxu0
  %v2773 = vadd.f32 %v2464, %v2772
  %v2774 = vpop.f32.mrb[0].mxu0
  %v2775 = vpop.f32.mrb[0].mxu0
  %v2776 = vadd.f32 %v2464, %v2775
  %v2777 = vpop.f32.mrb[0].mxu0
  %2778 = vmatprep.mubr.bf16.mxu0 0
  %2779 = vmatmul.mubr.bf16.gmra.mrb[0].mxu0 %v2440
  %v2780 = vpop.f32.mrb[0].mxu0
  %v2781 = vadd.f32 %v2464, %v2780
  %v2782 = vpop.f32.mrb[0].mxu0
  %v2783 = vpop.f32.mrb[0].mxu0
  %v2784 = vadd.f32 %v2464, %v2783
  %v2785 = vpop.f32.mrb[0].mxu0
  %2786 = vmatprep.mubr.bf16.mxu0 0
  %2787 = vmatmul.mubr.bf16.gmra.mrb[0].mxu0 %v2441
  %v2788 = vpop.f32.mrb[0].mxu0
  %v2789 = vadd.f32 %v2464, %v2788
  %v2790 = vpop.f32.mrb[0].mxu0
  %v2791 = vpop.f32.mrb[0].mxu0
  %v2792 = vadd.f32 %v2464, %v2791
  %v2793 = vpop.f32.mrb[0].mxu0
  %2794 = vmatprep.mubr.bf16.mxu0 0
  %2795 = vmatmul.mubr.bf16.gmra.mrb[0].mxu0 %v2442
  %v2796 = vpop.f32.mrb[0].mxu0
  %v2797 = vadd.f32 %v2464, %v2796
  %v2798 = vpop.f32.mrb[0].mxu0
  %v2799 = vpop.f32.mrb[0].mxu0
  %v2800 = vadd.f32 %v2464, %v2799
  %v2801 = vpop.f32.mrb[0].mxu0
  %2802 = vdwg.mxu0
  %v2803 = vmax.f32 %v2549, 0.0
  %v2804 = vmax.f32 %v2552, 0.0
  %v2805 = vmax.f32 %v2557, 0.0
  %v2806 = vmax.f32 %v2560, 0.0
  %v2807 = vmax.f32 %v2565, 0.0
  %v2808 = vmax.f32 %v2568, 0.0
  %v2809 = vmax.f32 %v2573, 0.0
  %v2810 = vmax.f32 %v2576, 0.0
  %v2811 = vmax.f32 %v2581, 0.0
  %v2812 = vmax.f32 %v2584, 0.0
  %v2813 = vmax.f32 %v2589, 0.0
  %v2814 = vmax.f32 %v2592, 0.0
  %v2815 = vmax.f32 %v2597, 0.0
  %v2816 = vmax.f32 %v2600, 0.0
  %v2817 = vmax.f32 %v2605, 0.0
  %v2818 = vmax.f32 %v2608, 0.0
  %v2819 = vmax.f32 %v2613, 0.0
  %v2820 = vmax.f32 %v2616, 0.0
  %v2821 = vmax.f32 %v2621, 0.0
  %v2822 = vmax.f32 %v2624, 0.0
  %v2823 = vmax.f32 %v2629, 0.0
  %v2824 = vmax.f32 %v2632, 0.0
  %v2825 = vmax.f32 %v2637, 0.0
  %v2826 = vmax.f32 %v2640, 0.0
  %v2827 = vmax.f32 %v2645, 0.0
  %v2828 = vmax.f32 %v2648, 0.0
  %v2829 = vmax.f32 %v2653, 0.0
  %v2830 = vmax.f32 %v2656, 0.0
  %v2831 = vmax.f32 %v2661, 0.0
  %v2832 = vmax.f32 %v2664, 0.0
  %v2833 = vmax.f32 %v2669, 0.0
  %v2834 = vmax.f32 %v2672, 0.0
  %v2835 = vmax.f32 %v2677, 0.0
  %v2836 = vmax.f32 %v2680, 0.0
  %v2837 = vmax.f32 %v2685, 0.0
  %v2838 = vmax.f32 %v2688, 0.0
  %v2839 = vmax.f32 %v2693, 0.0
  %v2840 = vmax.f32 %v2696, 0.0
  %v2841 = vmax.f32 %v2701, 0.0
  %v2842 = vmax.f32 %v2704, 0.0
  %v2843 = vmax.f32 %v2709, 0.0
  %v2844 = vmax.f32 %v2712, 0.0
  %v2845 = vmax.f32 %v2717, 0.0
  %v2846 = vmax.f32 %v2720, 0.0
  %v2847 = vmax.f32 %v2725, 0.0
  %v2848 = vmax.f32 %v2728, 0.0
  %v2849 = vmax.f32 %v2733, 0.0
  %v2850 = vmax.f32 %v2736, 0.0
  %v2851 = vmax.f32 %v2741, 0.0
  %v2852 = vmax.f32 %v2744, 0.0
  %v2853 = vmax.f32 %v2749, 0.0
  %v2854 = vmax.f32 %v2752, 0.0
  %v2855 = vmax.f32 %v2757, 0.0
  %v2856 = vmax.f32 %v2760, 0.0
  %v2857 = vmax.f32 %v2765, 0.0
  %v2858 = vmax.f32 %v2768, 0.0
  %v2859 = vmax.f32 %v2773, 0.0
  %v2860 = vmax.f32 %v2776, 0.0
  %v2861 = vmax.f32 %v2781, 0.0
  %v2862 = vmax.f32 %v2784, 0.0
  %v2863 = vmax.f32 %v2789, 0.0
  %v2864 = vmax.f32 %v2792, 0.0
  %v2865 = vmax.f32 %v2797, 0.0
  %v2866 = vmax.f32 %v2800, 0.0
  %v2867 = vpack.c.bf16 %v2804, %v2803
  %v2868 = vpack.c.bf16 %v2806, %v2805
  %v2869 = vpack.c.bf16 %v2808, %v2807
  %v2870 = vpack.c.bf16 %v2810, %v2809
  %v2871 = vpack.c.bf16 %v2812, %v2811
  %v2872 = vpack.c.bf16 %v2814, %v2813
  %v2873 = vpack.c.bf16 %v2816, %v2815
  %v2874 = vpack.c.bf16 %v2818, %v2817
  %v2875 = vpack.c.bf16 %v2820, %v2819
  %v2876 = vpack.c.bf16 %v2822, %v2821
  %v2877 = vpack.c.bf16 %v2824, %v2823
  %v2878 = vpack.c.bf16 %v2826, %v2825
  %v2879 = vpack.c.bf16 %v2828, %v2827
  %v2880 = vpack.c.bf16 %v2830, %v2829
  %v2881 = vpack.c.bf16 %v2832, %v2831
  %v2882 = vpack.c.bf16 %v2834, %v2833
  %v2883 = vpack.c.bf16 %v2836, %v2835
  %v2884 = vpack.c.bf16 %v2838, %v2837
  %v2885 = vpack.c.bf16 %v2840, %v2839
  %v2886 = vpack.c.bf16 %v2842, %v2841
  %v2887 = vpack.c.bf16 %v2844, %v2843
  %v2888 = vpack.c.bf16 %v2846, %v2845
  %v2889 = vpack.c.bf16 %v2848, %v2847
  %v2890 = vpack.c.bf16 %v2850, %v2849
  %v2891 = vpack.c.bf16 %v2852, %v2851
  %v2892 = vpack.c.bf16 %v2854, %v2853
  %v2893 = vpack.c.bf16 %v2856, %v2855
  %v2894 = vpack.c.bf16 %v2858, %v2857
  %v2895 = vpack.c.bf16 %v2860, %v2859
  %v2896 = vpack.c.bf16 %v2862, %v2861
  %v2897 = vpack.c.bf16 %v2864, %v2863
  %v2898 = vpack.c.bf16 %v2866, %v2865
  %v2931 = vunpack.c.l.b16 %v2867
  %v2932 = vunpack.c.h.b16 %v2867
  %v2933 = vunpack.c.l.b16 %v2868
  %v2934 = vunpack.c.h.b16 %v2868
  %v2935 = vunpack.c.l.b16 %v2869
  %v2936 = vunpack.c.h.b16 %v2869
  %v2937 = vunpack.c.l.b16 %v2870
  %v2938 = vunpack.c.h.b16 %v2870
  %v2939 = vunpack.c.l.b16 %v2871
  %v2940 = vunpack.c.h.b16 %v2871
  %v2941 = vunpack.c.l.b16 %v2872
  %v2942 = vunpack.c.h.b16 %v2872
  %v2943 = vunpack.c.l.b16 %v2873
  %v2944 = vunpack.c.h.b16 %v2873
  %v2945 = vunpack.c.l.b16 %v2874
  %v2946 = vunpack.c.h.b16 %v2874
  %v2947 = vunpack.c.l.b16 %v2875
  %v2948 = vunpack.c.h.b16 %v2875
  %v2949 = vunpack.c.l.b16 %v2876
  %v2950 = vunpack.c.h.b16 %v2876
  %v2951 = vunpack.c.l.b16 %v2877
  %v2952 = vunpack.c.h.b16 %v2877
  %v2953 = vunpack.c.l.b16 %v2878
  %v2954 = vunpack.c.h.b16 %v2878
  %v2955 = vunpack.c.l.b16 %v2879
  %v2956 = vunpack.c.h.b16 %v2879
  %v2957 = vunpack.c.l.b16 %v2880
  %v2958 = vunpack.c.h.b16 %v2880
  %v2959 = vunpack.c.l.b16 %v2881
  %v2960 = vunpack.c.h.b16 %v2881
  %v2961 = vunpack.c.l.b16 %v2882
  %v2962 = vunpack.c.h.b16 %v2882
  %v2963 = vunpack.c.l.b16 %v2883
  %v2964 = vunpack.c.h.b16 %v2883
  %v2965 = vunpack.c.l.b16 %v2884
  %v2966 = vunpack.c.h.b16 %v2884
  %v2967 = vunpack.c.l.b16 %v2885
  %v2968 = vunpack.c.h.b16 %v2885
  %v2969 = vunpack.c.l.b16 %v2886
  %v2970 = vunpack.c.h.b16 %v2886
  %v2971 = vunpack.c.l.b16 %v2887
  %v2972 = vunpack.c.h.b16 %v2887
  %v2973 = vunpack.c.l.b16 %v2888
  %v2974 = vunpack.c.h.b16 %v2888
  %v2975 = vunpack.c.l.b16 %v2889
  %v2976 = vunpack.c.h.b16 %v2889
  %v2977 = vunpack.c.l.b16 %v2890
  %v2978 = vunpack.c.h.b16 %v2890
  %v2979 = vunpack.c.l.b16 %v2891
  %v2980 = vunpack.c.h.b16 %v2891
  %v2981 = vunpack.c.l.b16 %v2892
  %v2982 = vunpack.c.h.b16 %v2892
  %v2983 = vunpack.c.l.b16 %v2893
  %v2984 = vunpack.c.h.b16 %v2893
  %v2985 = vunpack.c.l.b16 %v2894
  %v2986 = vunpack.c.h.b16 %v2894
  %v2987 = vunpack.c.l.b16 %v2895
  %v2988 = vunpack.c.h.b16 %v2895
  %v2989 = vunpack.c.l.b16 %v2896
  %v2990 = vunpack.c.h.b16 %v2896
  %v2991 = vunpack.c.l.b16 %v2897
  %v2992 = vunpack.c.h.b16 %v2897
  %v2993 = vunpack.c.l.b16 %v2898
  %v2994 = vunpack.c.h.b16 %v2898
  %v2995 = vpack.c.b16 %v2931, %v2931
  %v2996 = vpack.c.b16 %v2932, %v2932
  %v2997 = vpack.c.b16 %v2933, %v2933
  %v2998 = vpack.c.b16 %v2934, %v2934
  %v2999 = vpack.c.b16 %v2935, %v2935
  %v3000 = vpack.c.b16 %v2936, %v2936
  %v3001 = vpack.c.b16 %v2937, %v2937
  %v3002 = vpack.c.b16 %v2938, %v2938
  %v3003 = vpack.c.b16 %v2939, %v2939
  %v3004 = vpack.c.b16 %v2940, %v2940
  %v3005 = vpack.c.b16 %v2941, %v2941
  %v3006 = vpack.c.b16 %v2942, %v2942
  %v3007 = vpack.c.b16 %v2943, %v2943
  %v3008 = vpack.c.b16 %v2944, %v2944
  %v3009 = vpack.c.b16 %v2945, %v2945
  %v3010 = vpack.c.b16 %v2946, %v2946
  %v3011 = vpack.c.b16 %v2947, %v2947
  %v3012 = vpack.c.b16 %v2948, %v2948
  %v3013 = vpack.c.b16 %v2949, %v2949
  %v3014 = vpack.c.b16 %v2950, %v2950
  %v3015 = vpack.c.b16 %v2951, %v2951
  %v3016 = vpack.c.b16 %v2952, %v2952
  %v3017 = vpack.c.b16 %v2953, %v2953
  %v3018 = vpack.c.b16 %v2954, %v2954
  %v3019 = vpack.c.b16 %v2955, %v2955
  %v3020 = vpack.c.b16 %v2956, %v2956
  %v3021 = vpack.c.b16 %v2957, %v2957
  %v3022 = vpack.c.b16 %v2958, %v2958
  %v3023 = vpack.c.b16 %v2959, %v2959
  %v3024 = vpack.c.b16 %v2960, %v2960
  %v3025 = vpack.c.b16 %v2961, %v2961
  %v3026 = vpack.c.b16 %v2962, %v2962
  %v3027 = vpack.c.b16 %v2963, %v2963
  %v3028 = vpack.c.b16 %v2964, %v2964
  %v3029 = vpack.c.b16 %v2965, %v2965
  %v3030 = vpack.c.b16 %v2966, %v2966
  %v3031 = vpack.c.b16 %v2967, %v2967
  %v3032 = vpack.c.b16 %v2968, %v2968
  %v3033 = vpack.c.b16 %v2969, %v2969
  %v3034 = vpack.c.b16 %v2970, %v2970
  %v3035 = vpack.c.b16 %v2971, %v2971
  %v3036 = vpack.c.b16 %v2972, %v2972
  %v3037 = vpack.c.b16 %v2973, %v2973
  %v3038 = vpack.c.b16 %v2974, %v2974
  %v3039 = vpack.c.b16 %v2975, %v2975
  %v3040 = vpack.c.b16 %v2976, %v2976
  %v3041 = vpack.c.b16 %v2977, %v2977
  %v3042 = vpack.c.b16 %v2978, %v2978
  %v3043 = vpack.c.b16 %v2979, %v2979
  %v3044 = vpack.c.b16 %v2980, %v2980
  %v3045 = vpack.c.b16 %v2981, %v2981
  %v3046 = vpack.c.b16 %v2982, %v2982
  %v3047 = vpack.c.b16 %v2983, %v2983
  %v3048 = vpack.c.b16 %v2984, %v2984
  %v3049 = vpack.c.b16 %v2985, %v2985
  %v3050 = vpack.c.b16 %v2986, %v2986
  %v3051 = vpack.c.b16 %v2987, %v2987
  %v3052 = vpack.c.b16 %v2988, %v2988
  %v3053 = vpack.c.b16 %v2989, %v2989
  %v3054 = vpack.c.b16 %v2990, %v2990
  %v3055 = vpack.c.b16 %v2991, %v2991
  %v3056 = vpack.c.b16 %v2992, %v2992
  %v3057 = vpack.c.b16 %v2993, %v2993
  %v3058 = vpack.c.b16 %v2994, %v2994
  %3123 = vst [vmem:[%s8] sm:$0xf] %v2995
  %3124 = vst [vmem:[%s8 + $0x4] sm:$0xf] %v2996
  %3125 = vst [vmem:[%s8 + $0x8] sm:$0xf] %v2997
  %3126 = vst [vmem:[%s8 + $0xc] sm:$0xf] %v2998
  %3127 = vst [vmem:[%s8 + $0x10] sm:$0xf] %v2999
  %3128 = vst [vmem:[%s8 + $0x14] sm:$0xf] %v3000
  %3129 = vst [vmem:[%s8 + $0x18] sm:$0xf] %v3001
  %3130 = vst [vmem:[%s8 + $0x1c] sm:$0xf] %v3002
  %3131 = vst [vmem:[%s8 + $0x20] sm:$0xf] %v3003
  %3132 = vst [vmem:[%s8 + $0x24] sm:$0xf] %v3004
  %3133 = vst [vmem:[%s8 + $0x28] sm:$0xf] %v3005
  %3134 = vst [vmem:[%s8 + $0x2c] sm:$0xf] %v3006
  %3135 = vst [vmem:[%s8 + $0x30] sm:$0xf] %v3007
  %3136 = vst [vmem:[%s8 + $0x34] sm:$0xf] %v3008
  %3137 = vst [vmem:[%s8 + $0x38] sm:$0xf] %v3009
  %3138 = vst [vmem:[%s8 + $0x3c] sm:$0xf] %v3010
  %3139 = vst [vmem:[%s8 + $0x40] sm:$0xf] %v3011
  %3140 = vst [vmem:[%s8 + $0x44] sm:$0xf] %v3012
  %3141 = vst [vmem:[%s8 + $0x48] sm:$0xf] %v3013
  %3142 = vst [vmem:[%s8 + $0x4c] sm:$0xf] %v3014
  %3143 = vst [vmem:[%s8 + $0x50] sm:$0xf] %v3015
  %3144 = vst [vmem:[%s8 + $0x54] sm:$0xf] %v3016
  %3145 = vst [vmem:[%s8 + $0x58] sm:$0xf] %v3017
  %3146 = vst [vmem:[%s8 + $0x5c] sm:$0xf] %v3018
  %3147 = vst [vmem:[%s8 + $0x60] sm:$0xf] %v3019
  %3148 = vst [vmem:[%s8 + $0x64] sm:$0xf] %v3020
  %3149 = vst [vmem:[%s8 + $0x68] sm:$0xf] %v3021
  %3150 = vst [vmem:[%s8 + $0x6c] sm:$0xf] %v3022
  %3151 = vst [vmem:[%s8 + $0x70] sm:$0xf] %v3023
  %3152 = vst [vmem:[%s8 + $0x74] sm:$0xf] %v3024
  %3153 = vst [vmem:[%s8 + $0x78] sm:$0xf] %v3025
  %3154 = vst [vmem:[%s8 + $0x7c] sm:$0xf] %v3026
  %3155 = vst [vmem:[%s8 + $0x80] sm:$0xf] %v3027
  %3156 = vst [vmem:[%s8 + $0x84] sm:$0xf] %v3028
  %3157 = vst [vmem:[%s8 + $0x88] sm:$0xf] %v3029
  %3158 = vst [vmem:[%s8 + $0x8c] sm:$0xf] %v3030
  %3159 = vst [vmem:[%s8 + $0x90] sm:$0xf] %v3031
  %3160 = vst [vmem:[%s8 + $0x94] sm:$0xf] %v3032
  %3161 = vst [vmem:[%s8 + $0x98] sm:$0xf] %v3033
  %3162 = vst [vmem:[%s8 + $0x9c] sm:$0xf] %v3034
  %3163 = vst [vmem:[%s8 + $0xa0] sm:$0xf] %v3035
  %3164 = vst [vmem:[%s8 + $0xa4] sm:$0xf] %v3036
  %3165 = vst [vmem:[%s8 + $0xa8] sm:$0xf] %v3037
  %3166 = vst [vmem:[%s8 + $0xac] sm:$0xf] %v3038
  %3167 = vst [vmem:[%s8 + $0xb0] sm:$0xf] %v3039
  %3168 = vst [vmem:[%s8 + $0xb4] sm:$0xf] %v3040
  %3169 = vst [vmem:[%s8 + $0xb8] sm:$0xf] %v3041
  %3170 = vst [vmem:[%s8 + $0xbc] sm:$0xf] %v3042
  %3171 = vst [vmem:[%s8 + $0xc0] sm:$0xf] %v3043
  %3172 = vst [vmem:[%s8 + $0xc4] sm:$0xf] %v3044
  %3173 = vst [vmem:[%s8 + $0xc8] sm:$0xf] %v3045
  %3174 = vst [vmem:[%s8 + $0xcc] sm:$0xf] %v3046
  %3175 = vst [vmem:[%s8 + $0xd0] sm:$0xf] %v3047
  %3176 = vst [vmem:[%s8 + $0xd4] sm:$0xf] %v3048
  %3177 = vst [vmem:[%s8 + $0xd8] sm:$0xf] %v3049
  %3178 = vst [vmem:[%s8 + $0xdc] sm:$0xf] %v3050
  %3179 = vst [vmem:[%s8 + $0xe0] sm:$0xf] %v3051
  %3180 = vst [vmem:[%s8 + $0xe4] sm:$0xf] %v3052
  %3181 = vst [vmem:[%s8 + $0xe8] sm:$0xf] %v3053
  %3182 = vst [vmem:[%s8 + $0xec] sm:$0xf] %v3054
  %3183 = vst [vmem:[%s8 + $0xf0] sm:$0xf] %v3055
  %3184 = vst [vmem:[%s8 + $0xf4] sm:$0xf] %v3056
  %3185 = vst [vmem:[%s8 + $0xf8] sm:$0xf] %v3057
  %3186 = vst [vmem:[%s8 + $0xfc] sm:$0xf] %v3058
  // Predicated region
  $region34: #{gin_graph_classifier.3} parent=0 // pred_check
    _
  $region35: #{gin_graph_classifier.3} parent=0 // pred_check_branch
    %3188 = sbr.rel (0) target = $region37
  $region36: #{gin_graph_classifier.3} parent=0 // pred_region
    _
  $region37: #{gin_graph_classifier.3} parent=0 // pred_fallthru
    _
  // Predicated region
  $region38: #{gin_graph_classifier.3} parent=0 // pred_check
    _
  $region39: #{gin_graph_classifier.3} parent=0 // pred_check_branch
    %3190 = sbr.rel (0) target = $region41
  $region40: #{gin_graph_classifier.3} parent=0 // pred_region
    _
  $region41: #{gin_graph_classifier.3} parent=0 // pred_fallthru
    _

</llo_original>
